<compile_context>
chip_gen: v6e
topology: v6e:2x2x1
jax: 0.10.0
libtpu: 0.0.40
codegen_flags: <defaults>
</compile_context>

<pallas_src>
import functools

import jax
import jax.numpy as jnp
from jax.experimental import pallas as pl
from jax.experimental.pallas import tpu as pltpu


_VMEM = pl.BlockSpec(memory_space=pltpu.MemorySpace.VMEM)
_SMEM = pl.BlockSpec(memory_space=pltpu.MemorySpace.SMEM)


def _gelu_exact(v):
    # TODO(synk): torch nn.GELU() uses exact erf; here erf is the Abramowitz-Stegun
    # 7.1.26 rational approximation (max abs error ~1.5e-7), built from exp/mul/add
    # only so it is guaranteed to lower on TPU (far closer to exact than tanh-GELU).
    z = v * 0.7071067811865476
    az = jnp.abs(z)
    t = 1.0 / (1.0 + 0.3275911 * az)
    poly = ((((1.061405429 * t - 1.453152027) * t + 1.421413741) * t
             - 0.284496736) * t + 0.254829592) * t
    erf_abs = 1.0 - poly * jnp.exp(-az * az)
    erf = jnp.where(z < 0.0, -erf_abs, erf_abs)
    return 0.5 * v * (1.0 + erf)


# ----------------------------------------------------------------- fused kernel
def _fused_kernel(xpad_ref, lanep_ref, colp_ref, cw_ref, hs_ref, out_ref,
                  *, C, L, N, eps):
    """IntraStock -> InterStock -> linear head, fully fused.

    xpad_ref : (C, L+6, N) VMEM  input (channel, time, stock), zero pad 3 along time
    lanep_ref: (11, N)     VMEM  per-stock row vectors:
                            [0]  folded pointwise bias
                            [1:4] InterStock dw1 taps, [4] dw1 bias
                            [5:8] InterStock dw2 taps, [8] dw2 bias
                            [9:11] folded pointwise taps (even / odd partner)
    colp_ref : (2CL+9L,1)  VMEM  per-time column vectors:
                            [0:CL] ln_w, [CL:2CL] ln_b, then lin1_w (3L), lin2_w (6L)
    cw_ref   : (C, 9)      SMEM  per-channel IntraStock scalars:
                            [0:3] dw1 w, [3] dw1 b, [4:7] dw2 w, [7] dw2 b, [8] pw w
    hs_ref   : (5,)        SMEM  [pw_b, lin1_b, lin2_b, lin3_w, lin3_b]
    out_ref  : (1, N)      VMEM
    """
    f32 = jnp.float32
    Lt = 3 * L
    CL = C * L

    def col(start, size):
        return colp_ref[start:start + size, :]            # (size, 1), static slice

    def lane(row):
        return lanep_ref[row:row + 1, :]                  # (1, N)

    # ============================== IntraStock ================================
    row_ext = jax.lax.broadcasted_iota(jnp.int32, (L + 4, N), 0)
    interior = jnp.logical_and(row_ext >= 2, row_ext < L + 2)
    inv_cnt = 1.0 / float(CL)

    def ln_pointwise(vals):
        # LayerNorm over (C, L) per stock (= per lane), then pointwise conv C -> 1.
        tot = vals[0]
        for v in vals[1:]:
            tot = tot + v
        mean = jnp.sum(tot, axis=0, keepdims=True) * inv_cnt            # (1, N)
        sq = None
        for v in vals:
            cen = v - mean
            sq = cen * cen if sq is None else sq + cen * cen
        var = jnp.sum(sq, axis=0, keepdims=True) * inv_cnt              # (1, N)
        inv = jax.lax.rsqrt(var + eps)
        acc = None
        for c, v in enumerate(vals):
            nrm = (v - mean) * inv * col(c * L, L) + col(CL + c * L, L)
            term = nrm * cw_ref[c, 8]
            acc = term if acc is None else acc + term
        return acc + hs_ref[0]                                          # (L, N)

    # Branch A: a1 = gelu(depthwise1(x)) on the extended domain [-2, L+2) so that its
    # own zero 'same' padding is already available for branch C (y3 = depthwise2(a1)).
    a1_ext = []
    for c in range(C):                        # C == 4, unrolled at trace time
        xc = xpad_ref[c]                      # (L+6, N); data lives in rows [3, L+3)
        y1e = (cw_ref[c, 0] * xc[0:L + 4, :] + cw_ref[c, 1] * xc[1:L + 5, :]
               + cw_ref[c, 2] * xc[2:L + 6, :] + cw_ref[c, 3])
        a1_ext.append(jnp.where(interior, _gelu_exact(y1e), 0.0))       # (L+4, N)
    z1 = ln_pointwise([a[2:L + 2, :] for a in a1_ext])

    # Branch C next (consumes a1_ext, keeping its live range short): y3 = dw2(a1).
    z3 = ln_pointwise([cw_ref[c, 4] * a1_ext[c][0:L, :]
                       + cw_ref[c, 5] * a1_ext[c][2:L + 2, :]
                       + cw_ref[c, 6] * a1_ext[c][4:L + 4, :]
                       + cw_ref[c, 7] for c in range(C)])

    # Branch B: y2 = depthwise2(x), taps re-read straight from VMEM.
    z2 = ln_pointwise([cw_ref[c, 4] * xpad_ref[c, 1:L + 1, :]
                       + cw_ref[c, 5] * xpad_ref[c, 3:L + 3, :]
                       + cw_ref[c, 6] * xpad_ref[c, 5:L + 5, :]
                       + cw_ref[c, 7] for c in range(C)])

    x2 = jnp.concatenate([z1, z2, z3], axis=0)                          # (3L, N)

    # ============================== InterStock ================================
    # Grouped pointwise1 (groups=79, pair mixing) folded with pointwise2 (per-stock
    # scale/bias).  The block-diagonal (N, N) mixing matrix is rebuilt in-register
    # from two (1, N) tap rows (no 100 KB HBM input), then applied with one MXU dot
    # whose result keeps the stock axis on lanes.
    ii = jax.lax.broadcasted_iota(jnp.int32, (N, N), 0)     # input stock index
    oo = jax.lax.broadcasted_iota(jnp.int32, (N, N), 1)     # output stock index
    o_even = oo - (oo & 1)
    w_pw = (jnp.where(ii == o_even, lane(9), 0.0)
            + jnp.where(ii == o_even + 1, lane(10), 0.0))   # (N, N)
    y = jnp.dot(x2, w_pw, preferred_element_type=f32) + lane(0)         # (3L, N)

    # Per-stock depthwise convs along time.  Shifted taps (incl. their zero 'same'
    # padding) come from tiny 0/1 shift matrices on the otherwise-idle MXU, so there
    # is no VMEM scratch round trip and no sublane-misaligned store/load.
    rr = jax.lax.broadcasted_iota(jnp.int32, (Lt, Lt), 0)
    ss = jax.lax.broadcasted_iota(jnp.int32, (Lt, Lt), 1)

    def shifted(v, k):                 # row t of the result = v[t + k], zero-filled
        m = jnp.where(ss == rr + k, 1.0, 0.0).astype(f32)
        return jnp.dot(m, v, preferred_element_type=f32)

    y1 = (lane(1) * shifted(y, -2) + lane(2) * y + lane(3) * shifted(y, 2)
          + lane(4))                                                    # k=3, dil=2
    y2 = (lane(5) * shifted(y1, -4) + lane(6) * y1 + lane(7) * shifted(y1, 4)
          + lane(8))                                                    # k=3, dil=4

    # ============================== linear head ===============================
    z_lin1 = jnp.sum(x2 * col(2 * CL, Lt), axis=0, keepdims=True) + hs_ref[1]
    z_lin2 = (jnp.sum(y1 * col(2 * CL + Lt, Lt), axis=0, keepdims=True)
              + jnp.sum(y2 * col(2 * CL + 2 * Lt, Lt), axis=0, keepdims=True)
              + hs_ref[2])
    out_ref[...] = (z_lin2 + z_lin1) * hs_ref[3] + hs_ref[4]            # lin3


# ------------------------------------------------------------------ param packing
def pack_params(p):
    """One-time parameter packing / folding (hoisted out of the per-call path)."""
    f32 = jnp.float32
    assert p["s_pw1_w"].shape[1] == 2, "groups=79 pointwise expects group size 2"

    # Per-stock (lane) row vectors -> one DMA.
    s2 = p["s_pw2_w"][:, 0, 0].astype(f32)
    w1 = p["s_pw1_w"][:, :, 0].astype(f32)                 # (num, 2) group-of-2 taps
    lanep = jnp.stack([
        s2 * p["s_pw1_b"].astype(f32) + p["s_pw2_b"].astype(f32),   # folded pw bias
        p["s_dw1_w"][:, 0, 0].astype(f32),
        p["s_dw1_w"][:, 0, 1].astype(f32),
        p["s_dw1_w"][:, 0, 2].astype(f32),
        p["s_dw1_b"].astype(f32),
        p["s_dw2_w"][:, 0, 0].astype(f32),
        p["s_dw2_w"][:, 0, 1].astype(f32),
        p["s_dw2_w"][:, 0, 2].astype(f32),
        p["s_dw2_b"].astype(f32),
        s2 * w1[:, 0],                                     # folded pw tap (even partner)
        s2 * w1[:, 1],                                     # folded pw tap (odd partner)
    ], axis=0)                                             # (11, num)

    # Per-time column vectors -> one DMA.
    colp = jnp.concatenate([
        p["i_ln_w"].astype(f32).reshape(-1),               # (C*L,)
        p["i_ln_b"].astype(f32).reshape(-1),               # (C*L,)
        p["lin1_w"][0].astype(f32),                        # (3L,)
        p["lin2_w"][0].astype(f32),                        # (6L,)
    ])[:, None]                                            # (2*C*L + 9*L, 1)

    # Per-channel IntraStock scalars (SMEM) -> one DMA.
    cw = jnp.concatenate([
        p["i_dw1_w"][:, 0, :].astype(f32),
        p["i_dw1_b"].astype(f32)[:, None],
        p["i_dw2_w"][:, 0, :].astype(f32),
        p["i_dw2_b"].astype(f32)[:, None],
        p["i_pw_w"][0, :, 0].astype(f32)[:, None],
    ], axis=1)                                             # (C, 9)

    # True scalars (SMEM) -> one DMA.
    hs = jnp.stack([p["i_pw_b"][0], p["lin1_b"][0], p["lin2_b"][0],
                    p["lin3_w"][0, 0], p["lin3_b"][0]]).astype(f32)     # (5,)

    return {"lanep": lanep, "colp": colp, "cw": cw, "hs": hs}


# ------------------------------------------------------------------ forward
@jax.jit
def stock_conv_mixer_forward(x, packed):
    """x: (num, seq_len, in_channels) f32, packed: pack_params(...) -> (num, 1) f32."""
    num, L, C = x.shape
    f32 = jnp.float32

    # Only per-call XLA work: one transpose+pad fusion putting stocks on lanes.
    x_lane = jnp.transpose(x, (2, 1, 0)).astype(f32)        # (C, L, num)
    xpad = jnp.pad(x_lane, ((0, 0), (3, 3), (0, 0)))        # margin 3 along time

    out_lane = pl.pallas_call(
        functools.partial(_fused_kernel, C=C, L=L, N=num, eps=1e-5),
        out_shape=jax.ShapeDtypeStruct((1, num), f32),
        in_specs=[_VMEM, _VMEM, _VMEM, _SMEM, _SMEM],
        out_specs=_VMEM,
    )(xpad, packed["lanep"], packed["colp"], packed["cw"], packed["hs"])

    return jnp.reshape(out_lane, (num, 1))


# ------------------------------------------------------------------ parameters
def init_params(key, C, L, num):
    ks = jax.random.split(key, 24)
    r = lambda k, s, sc=0.1: (sc * jax.random.normal(k, s)).astype(jnp.float32)
    p = {}
    # IntraStock (torch parameter shapes)
    p["i_dw1_w"] = r(ks[0], (C, 1, 3)); p["i_dw1_b"] = r(ks[1], (C,))
    p["i_dw2_w"] = r(ks[2], (C, 1, 3)); p["i_dw2_b"] = r(ks[3], (C,))
    p["i_ln_w"] = (1.0 + r(ks[4], (C, L))).astype(jnp.float32)
    p["i_ln_b"] = r(ks[5], (C, L))
    p["i_pw_w"] = r(ks[6], (1, C, 1)); p["i_pw_b"] = r(ks[7], (1,))
    # InterStock: pointwise1 groups=79 (group size num//79=2), pointwise2 groups=158
    p["s_pw1_w"] = r(ks[8], (num, num // 79, 1)); p["s_pw1_b"] = r(ks[9], (num,))
    p["s_pw2_w"] = r(ks[10], (num, 1, 1)); p["s_pw2_b"] = r(ks[11], (num,))
    p["s_dw1_w"] = r(ks[12], (num, 1, 3)); p["s_dw1_b"] = r(ks[13], (num,))
    p["s_dw2_w"] = r(ks[14], (num, 1, 3)); p["s_dw2_b"] = r(ks[15], (num,))
    # Head linears (torch (out=1, in) row-vectors)
    p["lin1_w"] = r(ks[16], (1, 3 * L)); p["lin1_b"] = r(ks[17], (1,))
    p["lin2_w"] = r(ks[18], (1, 6 * L)); p["lin2_b"] = r(ks[19], (1,))
    p["lin3_w"] = r(ks[20], (1, 1)); p["lin3_b"] = r(ks[21], (1,))
    # lin4 exists in the torch module but is never used in forward().
    return p


if __name__ == "__main__":
    # num must be divisible by 158 (grouped 1x1 convs); time_steps == seq_len.
    num, seq_len, in_channels = 158, 8, 4
    key = jax.random.PRNGKey(0)
    kx, kp = jax.random.split(key)
    x = jax.random.normal(kx, (num, seq_len, in_channels), dtype=jnp.float32)
    params = init_params(kp, in_channels, seq_len, num)
    packed = pack_params(params)          # one-time parameter packing / folding

    out = jax.block_until_ready(stock_conv_mixer_forward(x, packed))

    assert out.shape == (num, 1), out.shape
    assert bool(jnp.all(jnp.isfinite(out)))
    print("KERNEL_OK")
</pallas_src>

<mosaic_0001>
module attributes {stable_mosaic.version = 11 : i64} {
  func.func @_fused_kernel(%arg0: memref<4x14x158xf32, #tpu.memory_space<vmem>>, %arg1: memref<11x158xf32, #tpu.memory_space<vmem>>, %arg2: memref<136x1xf32, #tpu.memory_space<vmem>>, %arg3: memref<4x9xf32, #tpu.memory_space<smem>>, %arg4: memref<5xf32, #tpu.memory_space<smem>>, %arg5: memref<1x158xf32, #tpu.memory_space<vmem>>) attributes {dimension_semantics = [], scalar_prefetch = 0 : i64, scratch_operands = 0 : i64, tpu.core_type = #tpu.core_type<tc>} {
    %0 = tpu.iota {dimensions = array<i32: 0>} : vector<12x158xi32>
    %c2_i32 = arith.constant 2 : i32
    %1 = vector.broadcast %c2_i32 : i32 to vector<12x158xi32>
    %2 = arith.cmpi sge, %0, %1 : vector<12x158xi32>
    %c10_i32 = arith.constant 10 : i32
    %3 = vector.broadcast %c10_i32 : i32 to vector<12x158xi32>
    %4 = arith.cmpi slt, %0, %3 : vector<12x158xi32>
    %5 = arith.andi %2, %4 : vector<12x158xi1>
    %c0 = arith.constant 0 : index
    %c0_0 = arith.constant 0 : index
    %c0_1 = arith.constant 0 : index
    %6 = vector.load %arg0[%c0, %c0_0, %c0_1] : memref<4x14x158xf32, #tpu.memory_space<vmem>>, vector<1x14x158xf32>
    %7 = vector.shape_cast %6 : vector<1x14x158xf32> to vector<14x158xf32>
    %c0_2 = arith.constant 0 : index
    %c0_3 = arith.constant 0 : index
    %8 = memref.load %arg3[%c0_2, %c0_3] : memref<4x9xf32, #tpu.memory_space<smem>>
    %9 = vector.extract_strided_slice %7 {offsets = [0, 0], sizes = [12, 158], strides = [1, 1]} : vector<14x158xf32> to vector<12x158xf32>
    %10 = vector.broadcast %8 : f32 to vector<12x158xf32>
    %11 = arith.mulf %10, %9 : vector<12x158xf32>
    %c0_4 = arith.constant 0 : index
    %c1 = arith.constant 1 : index
    %12 = memref.load %arg3[%c0_4, %c1] : memref<4x9xf32, #tpu.memory_space<smem>>
    %13 = vector.extract_strided_slice %7 {offsets = [1, 0], sizes = [12, 158], strides = [1, 1]} : vector<14x158xf32> to vector<12x158xf32>
    %14 = vector.broadcast %12 : f32 to vector<12x158xf32>
    %15 = arith.mulf %14, %13 : vector<12x158xf32>
    %16 = arith.addf %11, %15 : vector<12x158xf32>
    %c0_5 = arith.constant 0 : index
    %c2 = arith.constant 2 : index
    %17 = memref.load %arg3[%c0_5, %c2] : memref<4x9xf32, #tpu.memory_space<smem>>
    %18 = vector.extract_strided_slice %7 {offsets = [2, 0], sizes = [12, 158], strides = [1, 1]} : vector<14x158xf32> to vector<12x158xf32>
    %19 = vector.broadcast %17 : f32 to vector<12x158xf32>
    %20 = arith.mulf %19, %18 : vector<12x158xf32>
    %21 = arith.addf %16, %20 : vector<12x158xf32>
    %c0_6 = arith.constant 0 : index
    %c3 = arith.constant 3 : index
    %22 = memref.load %arg3[%c0_6, %c3] : memref<4x9xf32, #tpu.memory_space<smem>>
    %23 = vector.broadcast %22 : f32 to vector<12x158xf32>
    %24 = arith.addf %21, %23 : vector<12x158xf32>
    %cst = arith.constant 0.707106769 : f32
    %25 = vector.broadcast %cst : f32 to vector<12x158xf32>
    %26 = arith.mulf %24, %25 : vector<12x158xf32>
    %27 = math.absf %26 : vector<12x158xf32>
    %cst_7 = arith.constant 0.327591091 : f32
    %28 = vector.broadcast %cst_7 : f32 to vector<12x158xf32>
    %29 = arith.mulf %28, %27 : vector<12x158xf32>
    %cst_8 = arith.constant 1.000000e+00 : f32
    %30 = vector.broadcast %cst_8 : f32 to vector<12x158xf32>
    %31 = arith.addf %30, %29 : vector<12x158xf32>
    %cst_9 = arith.constant 1.000000e+00 : f32
    %32 = vector.broadcast %cst_9 : f32 to vector<12x158xf32>
    %33 = arith.divf %32, %31 : vector<12x158xf32>
    %cst_10 = arith.constant 1.06140542 : f32
    %34 = vector.broadcast %cst_10 : f32 to vector<12x158xf32>
    %35 = arith.mulf %34, %33 : vector<12x158xf32>
    %cst_11 = arith.constant 1.45315206 : f32
    %36 = vector.broadcast %cst_11 : f32 to vector<12x158xf32>
    %37 = arith.subf %35, %36 : vector<12x158xf32>
    %38 = arith.mulf %37, %33 : vector<12x158xf32>
    %cst_12 = arith.constant 1.42141378 : f32
    %39 = vector.broadcast %cst_12 : f32 to vector<12x158xf32>
    %40 = arith.addf %38, %39 : vector<12x158xf32>
    %41 = arith.mulf %40, %33 : vector<12x158xf32>
    %cst_13 = arith.constant 0.284496725 : f32
    %42 = vector.broadcast %cst_13 : f32 to vector<12x158xf32>
    %43 = arith.subf %41, %42 : vector<12x158xf32>
    %44 = arith.mulf %43, %33 : vector<12x158xf32>
    %cst_14 = arith.constant 0.254829586 : f32
    %45 = vector.broadcast %cst_14 : f32 to vector<12x158xf32>
    %46 = arith.addf %44, %45 : vector<12x158xf32>
    %47 = arith.mulf %46, %33 : vector<12x158xf32>
    %cst_15 = arith.constant 0.000000e+00 : f32
    %48 = vector.broadcast %cst_15 : f32 to vector<12x158xf32>
    %49 = arith.subf %48, %27 : vector<12x158xf32>
    %50 = arith.mulf %49, %27 : vector<12x158xf32>
    %51 = math.exp %50 : vector<12x158xf32>
    %52 = arith.mulf %47, %51 : vector<12x158xf32>
    %cst_16 = arith.constant 1.000000e+00 : f32
    %53 = vector.broadcast %cst_16 : f32 to vector<12x158xf32>
    %54 = arith.subf %53, %52 : vector<12x158xf32>
    %cst_17 = arith.constant 0.000000e+00 : f32
    %55 = vector.broadcast %cst_17 : f32 to vector<12x158xf32>
    %56 = arith.cmpf olt, %26, %55 : vector<12x158xf32>
    %cst_18 = arith.constant 0.000000e+00 : f32
    %57 = vector.broadcast %cst_18 : f32 to vector<12x158xf32>
    %58 = arith.subf %57, %54 : vector<12x158xf32>
    %59 = arith.select %56, %58, %54 : vector<12x158xi1>, vector<12x158xf32>
    %cst_19 = arith.constant 5.000000e-01 : f32
    %60 = vector.broadcast %cst_19 : f32 to vector<12x158xf32>
    %61 = arith.mulf %60, %24 : vector<12x158xf32>
    %cst_20 = arith.constant 1.000000e+00 : f32
    %62 = vector.broadcast %cst_20 : f32 to vector<12x158xf32>
    %63 = arith.addf %62, %59 : vector<12x158xf32>
    %64 = arith.mulf %61, %63 : vector<12x158xf32>
    %cst_21 = arith.constant 0.000000e+00 : f32
    %65 = vector.broadcast %cst_21 : f32 to vector<12x158xf32>
    %66 = arith.select %5, %64, %65 : vector<12x158xi1>, vector<12x158xf32>
    %c1_22 = arith.constant 1 : index
    %c0_23 = arith.constant 0 : index
    %c0_24 = arith.constant 0 : index
    %67 = vector.load %arg0[%c1_22, %c0_23, %c0_24] : memref<4x14x158xf32, #tpu.memory_space<vmem>>, vector<1x14x158xf32>
    %68 = vector.shape_cast %67 : vector<1x14x158xf32> to vector<14x158xf32>
    %c1_25 = arith.constant 1 : index
    %c0_26 = arith.constant 0 : index
    %69 = memref.load %arg3[%c1_25, %c0_26] : memref<4x9xf32, #tpu.memory_space<smem>>
    %70 = vector.extract_strided_slice %68 {offsets = [0, 0], sizes = [12, 158], strides = [1, 1]} : vector<14x158xf32> to vector<12x158xf32>
    %71 = vector.broadcast %69 : f32 to vector<12x158xf32>
    %72 = arith.mulf %71, %70 : vector<12x158xf32>
    %c1_27 = arith.constant 1 : index
    %c1_28 = arith.constant 1 : index
    %73 = memref.load %arg3[%c1_27, %c1_28] : memref<4x9xf32, #tpu.memory_space<smem>>
    %74 = vector.extract_strided_slice %68 {offsets = [1, 0], sizes = [12, 158], strides = [1, 1]} : vector<14x158xf32> to vector<12x158xf32>
    %75 = vector.broadcast %73 : f32 to vector<12x158xf32>
    %76 = arith.mulf %75, %74 : vector<12x158xf32>
    %77 = arith.addf %72, %76 : vector<12x158xf32>
    %c1_29 = arith.constant 1 : index
    %c2_30 = arith.constant 2 : index
    %78 = memref.load %arg3[%c1_29, %c2_30] : memref<4x9xf32, #tpu.memory_space<smem>>
    %79 = vector.extract_strided_slice %68 {offsets = [2, 0], sizes = [12, 158], strides = [1, 1]} : vector<14x158xf32> to vector<12x158xf32>
    %80 = vector.broadcast %78 : f32 to vector<12x158xf32>
    %81 = arith.mulf %80, %79 : vector<12x158xf32>
    %82 = arith.addf %77, %81 : vector<12x158xf32>
    %c1_31 = arith.constant 1 : index
    %c3_32 = arith.constant 3 : index
    %83 = memref.load %arg3[%c1_31, %c3_32] : memref<4x9xf32, #tpu.memory_space<smem>>
    %84 = vector.broadcast %83 : f32 to vector<12x158xf32>
    %85 = arith.addf %82, %84 : vector<12x158xf32>
    %cst_33 = arith.constant 0.707106769 : f32
    %86 = vector.broadcast %cst_33 : f32 to vector<12x158xf32>
    %87 = arith.mulf %85, %86 : vector<12x158xf32>
    %88 = math.absf %87 : vector<12x158xf32>
    %cst_34 = arith.constant 0.327591091 : f32
    %89 = vector.broadcast %cst_34 : f32 to vector<12x158xf32>
    %90 = arith.mulf %89, %88 : vector<12x158xf32>
    %cst_35 = arith.constant 1.000000e+00 : f32
    %91 = vector.broadcast %cst_35 : f32 to vector<12x158xf32>
    %92 = arith.addf %91, %90 : vector<12x158xf32>
    %cst_36 = arith.constant 1.000000e+00 : f32
    %93 = vector.broadcast %cst_36 : f32 to vector<12x158xf32>
    %94 = arith.divf %93, %92 : vector<12x158xf32>
    %cst_37 = arith.constant 1.06140542 : f32
    %95 = vector.broadcast %cst_37 : f32 to vector<12x158xf32>
    %96 = arith.mulf %95, %94 : vector<12x158xf32>
    %cst_38 = arith.constant 1.45315206 : f32
    %97 = vector.broadcast %cst_38 : f32 to vector<12x158xf32>
    %98 = arith.subf %96, %97 : vector<12x158xf32>
    %99 = arith.mulf %98, %94 : vector<12x158xf32>
    %cst_39 = arith.constant 1.42141378 : f32
    %100 = vector.broadcast %cst_39 : f32 to vector<12x158xf32>
    %101 = arith.addf %99, %100 : vector<12x158xf32>
    %102 = arith.mulf %101, %94 : vector<12x158xf32>
    %cst_40 = arith.constant 0.284496725 : f32
    %103 = vector.broadcast %cst_40 : f32 to vector<12x158xf32>
    %104 = arith.subf %102, %103 : vector<12x158xf32>
    %105 = arith.mulf %104, %94 : vector<12x158xf32>
    %cst_41 = arith.constant 0.254829586 : f32
    %106 = vector.broadcast %cst_41 : f32 to vector<12x158xf32>
    %107 = arith.addf %105, %106 : vector<12x158xf32>
    %108 = arith.mulf %107, %94 : vector<12x158xf32>
    %cst_42 = arith.constant 0.000000e+00 : f32
    %109 = vector.broadcast %cst_42 : f32 to vector<12x158xf32>
    %110 = arith.subf %109, %88 : vector<12x158xf32>
    %111 = arith.mulf %110, %88 : vector<12x158xf32>
    %112 = math.exp %111 : vector<12x158xf32>
    %113 = arith.mulf %108, %112 : vector<12x158xf32>
    %cst_43 = arith.constant 1.000000e+00 : f32
    %114 = vector.broadcast %cst_43 : f32 to vector<12x158xf32>
    %115 = arith.subf %114, %113 : vector<12x158xf32>
    %cst_44 = arith.constant 0.000000e+00 : f32
    %116 = vector.broadcast %cst_44 : f32 to vector<12x158xf32>
    %117 = arith.cmpf olt, %87, %116 : vector<12x158xf32>
    %cst_45 = arith.constant 0.000000e+00 : f32
    %118 = vector.broadcast %cst_45 : f32 to vector<12x158xf32>
    %119 = arith.subf %118, %115 : vector<12x158xf32>
    %120 = arith.select %117, %119, %115 : vector<12x158xi1>, vector<12x158xf32>
    %cst_46 = arith.constant 5.000000e-01 : f32
    %121 = vector.broadcast %cst_46 : f32 to vector<12x158xf32>
    %122 = arith.mulf %121, %85 : vector<12x158xf32>
    %cst_47 = arith.constant 1.000000e+00 : f32
    %123 = vector.broadcast %cst_47 : f32 to vector<12x158xf32>
    %124 = arith.addf %123, %120 : vector<12x158xf32>
    %125 = arith.mulf %122, %124 : vector<12x158xf32>
    %cst_48 = arith.constant 0.000000e+00 : f32
    %126 = vector.broadcast %cst_48 : f32 to vector<12x158xf32>
    %127 = arith.select %5, %125, %126 : vector<12x158xi1>, vector<12x158xf32>
    %c2_49 = arith.constant 2 : index
    %c0_50 = arith.constant 0 : index
    %c0_51 = arith.constant 0 : index
    %128 = vector.load %arg0[%c2_49, %c0_50, %c0_51] : memref<4x14x158xf32, #tpu.memory_space<vmem>>, vector<1x14x158xf32>
    %129 = vector.shape_cast %128 : vector<1x14x158xf32> to vector<14x158xf32>
    %c2_52 = arith.constant 2 : index
    %c0_53 = arith.constant 0 : index
    %130 = memref.load %arg3[%c2_52, %c0_53] : memref<4x9xf32, #tpu.memory_space<smem>>
    %131 = vector.extract_strided_slice %129 {offsets = [0, 0], sizes = [12, 158], strides = [1, 1]} : vector<14x158xf32> to vector<12x158xf32>
    %132 = vector.broadcast %130 : f32 to vector<12x158xf32>
    %133 = arith.mulf %132, %131 : vector<12x158xf32>
    %c2_54 = arith.constant 2 : index
    %c1_55 = arith.constant 1 : index
    %134 = memref.load %arg3[%c2_54, %c1_55] : memref<4x9xf32, #tpu.memory_space<smem>>
    %135 = vector.extract_strided_slice %129 {offsets = [1, 0], sizes = [12, 158], strides = [1, 1]} : vector<14x158xf32> to vector<12x158xf32>
    %136 = vector.broadcast %134 : f32 to vector<12x158xf32>
    %137 = arith.mulf %136, %135 : vector<12x158xf32>
    %138 = arith.addf %133, %137 : vector<12x158xf32>
    %c2_56 = arith.constant 2 : index
    %c2_57 = arith.constant 2 : index
    %139 = memref.load %arg3[%c2_56, %c2_57] : memref<4x9xf32, #tpu.memory_space<smem>>
    %140 = vector.extract_strided_slice %129 {offsets = [2, 0], sizes = [12, 158], strides = [1, 1]} : vector<14x158xf32> to vector<12x158xf32>
    %141 = vector.broadcast %139 : f32 to vector<12x158xf32>
    %142 = arith.mulf %141, %140 : vector<12x158xf32>
    %143 = arith.addf %138, %142 : vector<12x158xf32>
    %c2_58 = arith.constant 2 : index
    %c3_59 = arith.constant 3 : index
    %144 = memref.load %arg3[%c2_58, %c3_59] : memref<4x9xf32, #tpu.memory_space<smem>>
    %145 = vector.broadcast %144 : f32 to vector<12x158xf32>
    %146 = arith.addf %143, %145 : vector<12x158xf32>
    %cst_60 = arith.constant 0.707106769 : f32
    %147 = vector.broadcast %cst_60 : f32 to vector<12x158xf32>
    %148 = arith.mulf %146, %147 : vector<12x158xf32>
    %149 = math.absf %148 : vector<12x158xf32>
    %cst_61 = arith.constant 0.327591091 : f32
    %150 = vector.broadcast %cst_61 : f32 to vector<12x158xf32>
    %151 = arith.mulf %150, %149 : vector<12x158xf32>
    %cst_62 = arith.constant 1.000000e+00 : f32
    %152 = vector.broadcast %cst_62 : f32 to vector<12x158xf32>
    %153 = arith.addf %152, %151 : vector<12x158xf32>
    %cst_63 = arith.constant 1.000000e+00 : f32
    %154 = vector.broadcast %cst_63 : f32 to vector<12x158xf32>
    %155 = arith.divf %154, %153 : vector<12x158xf32>
    %cst_64 = arith.constant 1.06140542 : f32
    %156 = vector.broadcast %cst_64 : f32 to vector<12x158xf32>
    %157 = arith.mulf %156, %155 : vector<12x158xf32>
    %cst_65 = arith.constant 1.45315206 : f32
    %158 = vector.broadcast %cst_65 : f32 to vector<12x158xf32>
    %159 = arith.subf %157, %158 : vector<12x158xf32>
    %160 = arith.mulf %159, %155 : vector<12x158xf32>
    %cst_66 = arith.constant 1.42141378 : f32
    %161 = vector.broadcast %cst_66 : f32 to vector<12x158xf32>
    %162 = arith.addf %160, %161 : vector<12x158xf32>
    %163 = arith.mulf %162, %155 : vector<12x158xf32>
    %cst_67 = arith.constant 0.284496725 : f32
    %164 = vector.broadcast %cst_67 : f32 to vector<12x158xf32>
    %165 = arith.subf %163, %164 : vector<12x158xf32>
    %166 = arith.mulf %165, %155 : vector<12x158xf32>
    %cst_68 = arith.constant 0.254829586 : f32
    %167 = vector.broadcast %cst_68 : f32 to vector<12x158xf32>
    %168 = arith.addf %166, %167 : vector<12x158xf32>
    %169 = arith.mulf %168, %155 : vector<12x158xf32>
    %cst_69 = arith.constant 0.000000e+00 : f32
    %170 = vector.broadcast %cst_69 : f32 to vector<12x158xf32>
    %171 = arith.subf %170, %149 : vector<12x158xf32>
    %172 = arith.mulf %171, %149 : vector<12x158xf32>
    %173 = math.exp %172 : vector<12x158xf32>
    %174 = arith.mulf %169, %173 : vector<12x158xf32>
    %cst_70 = arith.constant 1.000000e+00 : f32
    %175 = vector.broadcast %cst_70 : f32 to vector<12x158xf32>
    %176 = arith.subf %175, %174 : vector<12x158xf32>
    %cst_71 = arith.constant 0.000000e+00 : f32
    %177 = vector.broadcast %cst_71 : f32 to vector<12x158xf32>
    %178 = arith.cmpf olt, %148, %177 : vector<12x158xf32>
    %cst_72 = arith.constant 0.000000e+00 : f32
    %179 = vector.broadcast %cst_72 : f32 to vector<12x158xf32>
    %180 = arith.subf %179, %176 : vector<12x158xf32>
    %181 = arith.select %178, %180, %176 : vector<12x158xi1>, vector<12x158xf32>
    %cst_73 = arith.constant 5.000000e-01 : f32
    %182 = vector.broadcast %cst_73 : f32 to vector<12x158xf32>
    %183 = arith.mulf %182, %146 : vector<12x158xf32>
    %cst_74 = arith.constant 1.000000e+00 : f32
    %184 = vector.broadcast %cst_74 : f32 to vector<12x158xf32>
    %185 = arith.addf %184, %181 : vector<12x158xf32>
    %186 = arith.mulf %183, %185 : vector<12x158xf32>
    %cst_75 = arith.constant 0.000000e+00 : f32
    %187 = vector.broadcast %cst_75 : f32 to vector<12x158xf32>
    %188 = arith.select %5, %186, %187 : vector<12x158xi1>, vector<12x158xf32>
    %c3_76 = arith.constant 3 : index
    %c0_77 = arith.constant 0 : index
    %c0_78 = arith.constant 0 : index
    %189 = vector.load %arg0[%c3_76, %c0_77, %c0_78] : memref<4x14x158xf32, #tpu.memory_space<vmem>>, vector<1x14x158xf32>
    %190 = vector.shape_cast %189 : vector<1x14x158xf32> to vector<14x158xf32>
    %c3_79 = arith.constant 3 : index
    %c0_80 = arith.constant 0 : index
    %191 = memref.load %arg3[%c3_79, %c0_80] : memref<4x9xf32, #tpu.memory_space<smem>>
    %192 = vector.extract_strided_slice %190 {offsets = [0, 0], sizes = [12, 158], strides = [1, 1]} : vector<14x158xf32> to vector<12x158xf32>
    %193 = vector.broadcast %191 : f32 to vector<12x158xf32>
    %194 = arith.mulf %193, %192 : vector<12x158xf32>
    %c3_81 = arith.constant 3 : index
    %c1_82 = arith.constant 1 : index
    %195 = memref.load %arg3[%c3_81, %c1_82] : memref<4x9xf32, #tpu.memory_space<smem>>
    %196 = vector.extract_strided_slice %190 {offsets = [1, 0], sizes = [12, 158], strides = [1, 1]} : vector<14x158xf32> to vector<12x158xf32>
    %197 = vector.broadcast %195 : f32 to vector<12x158xf32>
    %198 = arith.mulf %197, %196 : vector<12x158xf32>
    %199 = arith.addf %194, %198 : vector<12x158xf32>
    %c3_83 = arith.constant 3 : index
    %c2_84 = arith.constant 2 : index
    %200 = memref.load %arg3[%c3_83, %c2_84] : memref<4x9xf32, #tpu.memory_space<smem>>
    %201 = vector.extract_strided_slice %190 {offsets = [2, 0], sizes = [12, 158], strides = [1, 1]} : vector<14x158xf32> to vector<12x158xf32>
    %202 = vector.broadcast %200 : f32 to vector<12x158xf32>
    %203 = arith.mulf %202, %201 : vector<12x158xf32>
    %204 = arith.addf %199, %203 : vector<12x158xf32>
    %c3_85 = arith.constant 3 : index
    %c3_86 = arith.constant 3 : index
    %205 = memref.load %arg3[%c3_85, %c3_86] : memref<4x9xf32, #tpu.memory_space<smem>>
    %206 = vector.broadcast %205 : f32 to vector<12x158xf32>
    %207 = arith.addf %204, %206 : vector<12x158xf32>
    %cst_87 = arith.constant 0.707106769 : f32
    %208 = vector.broadcast %cst_87 : f32 to vector<12x158xf32>
    %209 = arith.mulf %207, %208 : vector<12x158xf32>
    %210 = math.absf %209 : vector<12x158xf32>
    %cst_88 = arith.constant 0.327591091 : f32
    %211 = vector.broadcast %cst_88 : f32 to vector<12x158xf32>
    %212 = arith.mulf %211, %210 : vector<12x158xf32>
    %cst_89 = arith.constant 1.000000e+00 : f32
    %213 = vector.broadcast %cst_89 : f32 to vector<12x158xf32>
    %214 = arith.addf %213, %212 : vector<12x158xf32>
    %cst_90 = arith.constant 1.000000e+00 : f32
    %215 = vector.broadcast %cst_90 : f32 to vector<12x158xf32>
    %216 = arith.divf %215, %214 : vector<12x158xf32>
    %cst_91 = arith.constant 1.06140542 : f32
    %217 = vector.broadcast %cst_91 : f32 to vector<12x158xf32>
    %218 = arith.mulf %217, %216 : vector<12x158xf32>
    %cst_92 = arith.constant 1.45315206 : f32
    %219 = vector.broadcast %cst_92 : f32 to vector<12x158xf32>
    %220 = arith.subf %218, %219 : vector<12x158xf32>
    %221 = arith.mulf %220, %216 : vector<12x158xf32>
    %cst_93 = arith.constant 1.42141378 : f32
    %222 = vector.broadcast %cst_93 : f32 to vector<12x158xf32>
    %223 = arith.addf %221, %222 : vector<12x158xf32>
    %224 = arith.mulf %223, %216 : vector<12x158xf32>
    %cst_94 = arith.constant 0.284496725 : f32
    %225 = vector.broadcast %cst_94 : f32 to vector<12x158xf32>
    %226 = arith.subf %224, %225 : vector<12x158xf32>
    %227 = arith.mulf %226, %216 : vector<12x158xf32>
    %cst_95 = arith.constant 0.254829586 : f32
    %228 = vector.broadcast %cst_95 : f32 to vector<12x158xf32>
    %229 = arith.addf %227, %228 : vector<12x158xf32>
    %230 = arith.mulf %229, %216 : vector<12x158xf32>
    %cst_96 = arith.constant 0.000000e+00 : f32
    %231 = vector.broadcast %cst_96 : f32 to vector<12x158xf32>
    %232 = arith.subf %231, %210 : vector<12x158xf32>
    %233 = arith.mulf %232, %210 : vector<12x158xf32>
    %234 = math.exp %233 : vector<12x158xf32>
    %235 = arith.mulf %230, %234 : vector<12x158xf32>
    %cst_97 = arith.constant 1.000000e+00 : f32
    %236 = vector.broadcast %cst_97 : f32 to vector<12x158xf32>
    %237 = arith.subf %236, %235 : vector<12x158xf32>
    %cst_98 = arith.constant 0.000000e+00 : f32
    %238 = vector.broadcast %cst_98 : f32 to vector<12x158xf32>
    %239 = arith.cmpf olt, %209, %238 : vector<12x158xf32>
    %cst_99 = arith.constant 0.000000e+00 : f32
    %240 = vector.broadcast %cst_99 : f32 to vector<12x158xf32>
    %241 = arith.subf %240, %237 : vector<12x158xf32>
    %242 = arith.select %239, %241, %237 : vector<12x158xi1>, vector<12x158xf32>
    %cst_100 = arith.constant 5.000000e-01 : f32
    %243 = vector.broadcast %cst_100 : f32 to vector<12x158xf32>
    %244 = arith.mulf %243, %207 : vector<12x158xf32>
    %cst_101 = arith.constant 1.000000e+00 : f32
    %245 = vector.broadcast %cst_101 : f32 to vector<12x158xf32>
    %246 = arith.addf %245, %242 : vector<12x158xf32>
    %247 = arith.mulf %244, %246 : vector<12x158xf32>
    %cst_102 = arith.constant 0.000000e+00 : f32
    %248 = vector.broadcast %cst_102 : f32 to vector<12x158xf32>
    %249 = arith.select %5, %247, %248 : vector<12x158xi1>, vector<12x158xf32>
    %250 = vector.extract_strided_slice %66 {offsets = [2, 0], sizes = [8, 158], strides = [1, 1]} : vector<12x158xf32> to vector<8x158xf32>
    %251 = vector.extract_strided_slice %127 {offsets = [2, 0], sizes = [8, 158], strides = [1, 1]} : vector<12x158xf32> to vector<8x158xf32>
    %252 = vector.extract_strided_slice %188 {offsets = [2, 0], sizes = [8, 158], strides = [1, 1]} : vector<12x158xf32> to vector<8x158xf32>
    %253 = vector.extract_strided_slice %249 {offsets = [2, 0], sizes = [8, 158], strides = [1, 1]} : vector<12x158xf32> to vector<8x158xf32>
    %254 = arith.addf %250, %251 : vector<8x158xf32>
    %255 = arith.addf %254, %252 : vector<8x158xf32>
    %256 = arith.addf %255, %253 : vector<8x158xf32>
    %cst_103 = arith.constant dense<0.000000e+00> : vector<158xf32>
    %257 = vector.multi_reduction <add>, %256, %cst_103 [0] : vector<8x158xf32> to vector<158xf32>
    %258 = vector.shape_cast %257 : vector<158xf32> to vector<1x158xf32>
    %cst_104 = arith.constant 3.125000e-02 : f32
    %259 = vector.broadcast %cst_104 : f32 to vector<1x158xf32>
    %260 = arith.mulf %258, %259 : vector<1x158xf32>
    %261 = vector.broadcast %260 : vector<1x158xf32> to vector<8x158xf32>
    %262 = arith.subf %250, %261 : vector<8x158xf32>
    %263 = arith.mulf %262, %262 : vector<8x158xf32>
    %264 = vector.broadcast %260 : vector<1x158xf32> to vector<8x158xf32>
    %265 = arith.subf %251, %264 : vector<8x158xf32>
    %266 = arith.mulf %265, %265 : vector<8x158xf32>
    %267 = arith.addf %263, %266 : vector<8x158xf32>
    %268 = vector.broadcast %260 : vector<1x158xf32> to vector<8x158xf32>
    %269 = arith.subf %252, %268 : vector<8x158xf32>
    %270 = arith.mulf %269, %269 : vector<8x158xf32>
    %271 = arith.addf %267, %270 : vector<8x158xf32>
    %272 = vector.broadcast %260 : vector<1x158xf32> to vector<8x158xf32>
    %273 = arith.subf %253, %272 : vector<8x158xf32>
    %274 = arith.mulf %273, %273 : vector<8x158xf32>
    %275 = arith.addf %271, %274 : vector<8x158xf32>
    %cst_105 = arith.constant dense<0.000000e+00> : vector<158xf32>
    %276 = vector.multi_reduction <add>, %275, %cst_105 [0] : vector<8x158xf32> to vector<158xf32>
    %277 = vector.shape_cast %276 : vector<158xf32> to vector<1x158xf32>
    %cst_106 = arith.constant 3.125000e-02 : f32
    %278 = vector.broadcast %cst_106 : f32 to vector<1x158xf32>
    %279 = arith.mulf %277, %278 : vector<1x158xf32>
    %cst_107 = arith.constant 9.99999974E-6 : f32
    %280 = vector.broadcast %cst_107 : f32 to vector<1x158xf32>
    %281 = arith.addf %279, %280 : vector<1x158xf32>
    %282 = math.rsqrt %281 : vector<1x158xf32>
    %283 = vector.broadcast %260 : vector<1x158xf32> to vector<8x158xf32>
    %284 = arith.subf %250, %283 : vector<8x158xf32>
    %285 = vector.broadcast %282 : vector<1x158xf32> to vector<8x158xf32>
    %286 = arith.mulf %284, %285 : vector<8x158xf32>
    %c0_108 = arith.constant 0 : index
    %c0_109 = arith.constant 0 : index
    %287 = vector.load %arg2[%c0_108, %c0_109] : memref<136x1xf32, #tpu.memory_space<vmem>>, vector<8x1xf32>
    %288 = vector.broadcast %287 : vector<8x1xf32> to vector<8x158xf32>
    %289 = arith.mulf %286, %288 : vector<8x158xf32>
    %c32 = arith.constant 32 : index
    %c0_110 = arith.constant 0 : index
    %290 = vector.load %arg2[%c32, %c0_110] : memref<136x1xf32, #tpu.memory_space<vmem>>, vector<8x1xf32>
    %291 = vector.broadcast %290 : vector<8x1xf32> to vector<8x158xf32>
    %292 = arith.addf %289, %291 : vector<8x158xf32>
    %c0_111 = arith.constant 0 : index
    %c8 = arith.constant 8 : index
    %293 = memref.load %arg3[%c0_111, %c8] : memref<4x9xf32, #tpu.memory_space<smem>>
    %294 = vector.broadcast %293 : f32 to vector<8x158xf32>
    %295 = arith.mulf %292, %294 : vector<8x158xf32>
    %296 = vector.broadcast %260 : vector<1x158xf32> to vector<8x158xf32>
    %297 = arith.subf %251, %296 : vector<8x158xf32>
    %298 = vector.broadcast %282 : vector<1x158xf32> to vector<8x158xf32>
    %299 = arith.mulf %297, %298 : vector<8x158xf32>
    %c8_112 = arith.constant 8 : index
    %c0_113 = arith.constant 0 : index
    %300 = vector.load %arg2[%c8_112, %c0_113] : memref<136x1xf32, #tpu.memory_space<vmem>>, vector<8x1xf32>
    %301 = vector.broadcast %300 : vector<8x1xf32> to vector<8x158xf32>
    %302 = arith.mulf %299, %301 : vector<8x158xf32>
    %c40 = arith.constant 40 : index
    %c0_114 = arith.constant 0 : index
    %303 = vector.load %arg2[%c40, %c0_114] : memref<136x1xf32, #tpu.memory_space<vmem>>, vector<8x1xf32>
    %304 = vector.broadcast %303 : vector<8x1xf32> to vector<8x158xf32>
    %305 = arith.addf %302, %304 : vector<8x158xf32>
    %c1_115 = arith.constant 1 : index
    %c8_116 = arith.constant 8 : index
    %306 = memref.load %arg3[%c1_115, %c8_116] : memref<4x9xf32, #tpu.memory_space<smem>>
    %307 = vector.broadcast %306 : f32 to vector<8x158xf32>
    %308 = arith.mulf %305, %307 : vector<8x158xf32>
    %309 = arith.addf %295, %308 : vector<8x158xf32>
    %310 = vector.broadcast %260 : vector<1x158xf32> to vector<8x158xf32>
    %311 = arith.subf %252, %310 : vector<8x158xf32>
    %312 = vector.broadcast %282 : vector<1x158xf32> to vector<8x158xf32>
    %313 = arith.mulf %311, %312 : vector<8x158xf32>
    %c16 = arith.constant 16 : index
    %c0_117 = arith.constant 0 : index
    %314 = vector.load %arg2[%c16, %c0_117] : memref<136x1xf32, #tpu.memory_space<vmem>>, vector<8x1xf32>
    %315 = vector.broadcast %314 : vector<8x1xf32> to vector<8x158xf32>
    %316 = arith.mulf %313, %315 : vector<8x158xf32>
    %c48 = arith.constant 48 : index
    %c0_118 = arith.constant 0 : index
    %317 = vector.load %arg2[%c48, %c0_118] : memref<136x1xf32, #tpu.memory_space<vmem>>, vector<8x1xf32>
    %318 = vector.broadcast %317 : vector<8x1xf32> to vector<8x158xf32>
    %319 = arith.addf %316, %318 : vector<8x158xf32>
    %c2_119 = arith.constant 2 : index
    %c8_120 = arith.constant 8 : index
    %320 = memref.load %arg3[%c2_119, %c8_120] : memref<4x9xf32, #tpu.memory_space<smem>>
    %321 = vector.broadcast %320 : f32 to vector<8x158xf32>
    %322 = arith.mulf %319, %321 : vector<8x158xf32>
    %323 = arith.addf %309, %322 : vector<8x158xf32>
    %324 = vector.broadcast %260 : vector<1x158xf32> to vector<8x158xf32>
    %325 = arith.subf %253, %324 : vector<8x158xf32>
    %326 = vector.broadcast %282 : vector<1x158xf32> to vector<8x158xf32>
    %327 = arith.mulf %325, %326 : vector<8x158xf32>
    %c24 = arith.constant 24 : index
    %c0_121 = arith.constant 0 : index
    %328 = vector.load %arg2[%c24, %c0_121] : memref<136x1xf32, #tpu.memory_space<vmem>>, vector<8x1xf32>
    %329 = vector.broadcast %328 : vector<8x1xf32> to vector<8x158xf32>
    %330 = arith.mulf %327, %329 : vector<8x158xf32>
    %c56 = arith.constant 56 : index
    %c0_122 = arith.constant 0 : index
    %331 = vector.load %arg2[%c56, %c0_122] : memref<136x1xf32, #tpu.memory_space<vmem>>, vector<8x1xf32>
    %332 = vector.broadcast %331 : vector<8x1xf32> to vector<8x158xf32>
    %333 = arith.addf %330, %332 : vector<8x158xf32>
    %c3_123 = arith.constant 3 : index
    %c8_124 = arith.constant 8 : index
    %334 = memref.load %arg3[%c3_123, %c8_124] : memref<4x9xf32, #tpu.memory_space<smem>>
    %335 = vector.broadcast %334 : f32 to vector<8x158xf32>
    %336 = arith.mulf %333, %335 : vector<8x158xf32>
    %337 = arith.addf %323, %336 : vector<8x158xf32>
    %c0_125 = arith.constant 0 : index
    %338 = memref.load %arg4[%c0_125] : memref<5xf32, #tpu.memory_space<smem>>
    %339 = vector.broadcast %338 : f32 to vector<8x158xf32>
    %340 = arith.addf %337, %339 : vector<8x158xf32>
    %c0_126 = arith.constant 0 : index
    %c4 = arith.constant 4 : index
    %341 = memref.load %arg3[%c0_126, %c4] : memref<4x9xf32, #tpu.memory_space<smem>>
    %342 = vector.extract_strided_slice %66 {offsets = [0, 0], sizes = [8, 158], strides = [1, 1]} : vector<12x158xf32> to vector<8x158xf32>
    %343 = vector.broadcast %341 : f32 to vector<8x158xf32>
    %344 = arith.mulf %343, %342 : vector<8x158xf32>
    %c0_127 = arith.constant 0 : index
    %c5 = arith.constant 5 : index
    %345 = memref.load %arg3[%c0_127, %c5] : memref<4x9xf32, #tpu.memory_space<smem>>
    %346 = vector.extract_strided_slice %66 {offsets = [2, 0], sizes = [8, 158], strides = [1, 1]} : vector<12x158xf32> to vector<8x158xf32>
    %347 = vector.broadcast %345 : f32 to vector<8x158xf32>
    %348 = arith.mulf %347, %346 : vector<8x158xf32>
    %349 = arith.addf %344, %348 : vector<8x158xf32>
    %c0_128 = arith.constant 0 : index
    %c6 = arith.constant 6 : index
    %350 = memref.load %arg3[%c0_128, %c6] : memref<4x9xf32, #tpu.memory_space<smem>>
    %351 = vector.extract_strided_slice %66 {offsets = [4, 0], sizes = [8, 158], strides = [1, 1]} : vector<12x158xf32> to vector<8x158xf32>
    %352 = vector.broadcast %350 : f32 to vector<8x158xf32>
    %353 = arith.mulf %352, %351 : vector<8x158xf32>
    %354 = arith.addf %349, %353 : vector<8x158xf32>
    %c0_129 = arith.constant 0 : index
    %c7 = arith.constant 7 : index
    %355 = memref.load %arg3[%c0_129, %c7] : memref<4x9xf32, #tpu.memory_space<smem>>
    %356 = vector.broadcast %355 : f32 to vector<8x158xf32>
    %357 = arith.addf %354, %356 : vector<8x158xf32>
    %c1_130 = arith.constant 1 : index
    %c4_131 = arith.constant 4 : index
    %358 = memref.load %arg3[%c1_130, %c4_131] : memref<4x9xf32, #tpu.memory_space<smem>>
    %359 = vector.extract_strided_slice %127 {offsets = [0, 0], sizes = [8, 158], strides = [1, 1]} : vector<12x158xf32> to vector<8x158xf32>
    %360 = vector.broadcast %358 : f32 to vector<8x158xf32>
    %361 = arith.mulf %360, %359 : vector<8x158xf32>
    %c1_132 = arith.constant 1 : index
    %c5_133 = arith.constant 5 : index
    %362 = memref.load %arg3[%c1_132, %c5_133] : memref<4x9xf32, #tpu.memory_space<smem>>
    %363 = vector.extract_strided_slice %127 {offsets = [2, 0], sizes = [8, 158], strides = [1, 1]} : vector<12x158xf32> to vector<8x158xf32>
    %364 = vector.broadcast %362 : f32 to vector<8x158xf32>
    %365 = arith.mulf %364, %363 : vector<8x158xf32>
    %366 = arith.addf %361, %365 : vector<8x158xf32>
    %c1_134 = arith.constant 1 : index
    %c6_135 = arith.constant 6 : index
    %367 = memref.load %arg3[%c1_134, %c6_135] : memref<4x9xf32, #tpu.memory_space<smem>>
    %368 = vector.extract_strided_slice %127 {offsets = [4, 0], sizes = [8, 158], strides = [1, 1]} : vector<12x158xf32> to vector<8x158xf32>
    %369 = vector.broadcast %367 : f32 to vector<8x158xf32>
    %370 = arith.mulf %369, %368 : vector<8x158xf32>
    %371 = arith.addf %366, %370 : vector<8x158xf32>
    %c1_136 = arith.constant 1 : index
    %c7_137 = arith.constant 7 : index
    %372 = memref.load %arg3[%c1_136, %c7_137] : memref<4x9xf32, #tpu.memory_space<smem>>
    %373 = vector.broadcast %372 : f32 to vector<8x158xf32>
    %374 = arith.addf %371, %373 : vector<8x158xf32>
    %c2_138 = arith.constant 2 : index
    %c4_139 = arith.constant 4 : index
    %375 = memref.load %arg3[%c2_138, %c4_139] : memref<4x9xf32, #tpu.memory_space<smem>>
    %376 = vector.extract_strided_slice %188 {offsets = [0, 0], sizes = [8, 158], strides = [1, 1]} : vector<12x158xf32> to vector<8x158xf32>
    %377 = vector.broadcast %375 : f32 to vector<8x158xf32>
    %378 = arith.mulf %377, %376 : vector<8x158xf32>
    %c2_140 = arith.constant 2 : index
    %c5_141 = arith.constant 5 : index
    %379 = memref.load %arg3[%c2_140, %c5_141] : memref<4x9xf32, #tpu.memory_space<smem>>
    %380 = vector.extract_strided_slice %188 {offsets = [2, 0], sizes = [8, 158], strides = [1, 1]} : vector<12x158xf32> to vector<8x158xf32>
    %381 = vector.broadcast %379 : f32 to vector<8x158xf32>
    %382 = arith.mulf %381, %380 : vector<8x158xf32>
    %383 = arith.addf %378, %382 : vector<8x158xf32>
    %c2_142 = arith.constant 2 : index
    %c6_143 = arith.constant 6 : index
    %384 = memref.load %arg3[%c2_142, %c6_143] : memref<4x9xf32, #tpu.memory_space<smem>>
    %385 = vector.extract_strided_slice %188 {offsets = [4, 0], sizes = [8, 158], strides = [1, 1]} : vector<12x158xf32> to vector<8x158xf32>
    %386 = vector.broadcast %384 : f32 to vector<8x158xf32>
    %387 = arith.mulf %386, %385 : vector<8x158xf32>
    %388 = arith.addf %383, %387 : vector<8x158xf32>
    %c2_144 = arith.constant 2 : index
    %c7_145 = arith.constant 7 : index
    %389 = memref.load %arg3[%c2_144, %c7_145] : memref<4x9xf32, #tpu.memory_space<smem>>
    %390 = vector.broadcast %389 : f32 to vector<8x158xf32>
    %391 = arith.addf %388, %390 : vector<8x158xf32>
    %c3_146 = arith.constant 3 : index
    %c4_147 = arith.constant 4 : index
    %392 = memref.load %arg3[%c3_146, %c4_147] : memref<4x9xf32, #tpu.memory_space<smem>>
    %393 = vector.extract_strided_slice %249 {offsets = [0, 0], sizes = [8, 158], strides = [1, 1]} : vector<12x158xf32> to vector<8x158xf32>
    %394 = vector.broadcast %392 : f32 to vector<8x158xf32>
    %395 = arith.mulf %394, %393 : vector<8x158xf32>
    %c3_148 = arith.constant 3 : index
    %c5_149 = arith.constant 5 : index
    %396 = memref.load %arg3[%c3_148, %c5_149] : memref<4x9xf32, #tpu.memory_space<smem>>
    %397 = vector.extract_strided_slice %249 {offsets = [2, 0], sizes = [8, 158], strides = [1, 1]} : vector<12x158xf32> to vector<8x158xf32>
    %398 = vector.broadcast %396 : f32 to vector<8x158xf32>
    %399 = arith.mulf %398, %397 : vector<8x158xf32>
    %400 = arith.addf %395, %399 : vector<8x158xf32>
    %c3_150 = arith.constant 3 : index
    %c6_151 = arith.constant 6 : index
    %401 = memref.load %arg3[%c3_150, %c6_151] : memref<4x9xf32, #tpu.memory_space<smem>>
    %402 = vector.extract_strided_slice %249 {offsets = [4, 0], sizes = [8, 158], strides = [1, 1]} : vector<12x158xf32> to vector<8x158xf32>
    %403 = vector.broadcast %401 : f32 to vector<8x158xf32>
    %404 = arith.mulf %403, %402 : vector<8x158xf32>
    %405 = arith.addf %400, %404 : vector<8x158xf32>
    %c3_152 = arith.constant 3 : index
    %c7_153 = arith.constant 7 : index
    %406 = memref.load %arg3[%c3_152, %c7_153] : memref<4x9xf32, #tpu.memory_space<smem>>
    %407 = vector.broadcast %406 : f32 to vector<8x158xf32>
    %408 = arith.addf %405, %407 : vector<8x158xf32>
    %409 = arith.addf %357, %374 : vector<8x158xf32>
    %410 = arith.addf %409, %391 : vector<8x158xf32>
    %411 = arith.addf %410, %408 : vector<8x158xf32>
    %cst_154 = arith.constant dense<0.000000e+00> : vector<158xf32>
    %412 = vector.multi_reduction <add>, %411, %cst_154 [0] : vector<8x158xf32> to vector<158xf32>
    %413 = vector.shape_cast %412 : vector<158xf32> to vector<1x158xf32>
    %cst_155 = arith.constant 3.125000e-02 : f32
    %414 = vector.broadcast %cst_155 : f32 to vector<1x158xf32>
    %415 = arith.mulf %413, %414 : vector<1x158xf32>
    %416 = vector.broadcast %415 : vector<1x158xf32> to vector<8x158xf32>
    %417 = arith.subf %357, %416 : vector<8x158xf32>
    %418 = arith.mulf %417, %417 : vector<8x158xf32>
    %419 = vector.broadcast %415 : vector<1x158xf32> to vector<8x158xf32>
    %420 = arith.subf %374, %419 : vector<8x158xf32>
    %421 = arith.mulf %420, %420 : vector<8x158xf32>
    %422 = arith.addf %418, %421 : vector<8x158xf32>
    %423 = vector.broadcast %415 : vector<1x158xf32> to vector<8x158xf32>
    %424 = arith.subf %391, %423 : vector<8x158xf32>
    %425 = arith.mulf %424, %424 : vector<8x158xf32>
    %426 = arith.addf %422, %425 : vector<8x158xf32>
    %427 = vector.broadcast %415 : vector<1x158xf32> to vector<8x158xf32>
    %428 = arith.subf %408, %427 : vector<8x158xf32>
    %429 = arith.mulf %428, %428 : vector<8x158xf32>
    %430 = arith.addf %426, %429 : vector<8x158xf32>
    %cst_156 = arith.constant dense<0.000000e+00> : vector<158xf32>
    %431 = vector.multi_reduction <add>, %430, %cst_156 [0] : vector<8x158xf32> to vector<158xf32>
    %432 = vector.shape_cast %431 : vector<158xf32> to vector<1x158xf32>
    %cst_157 = arith.constant 3.125000e-02 : f32
    %433 = vector.broadcast %cst_157 : f32 to vector<1x158xf32>
    %434 = arith.mulf %432, %433 : vector<1x158xf32>
    %cst_158 = arith.constant 9.99999974E-6 : f32
    %435 = vector.broadcast %cst_158 : f32 to vector<1x158xf32>
    %436 = arith.addf %434, %435 : vector<1x158xf32>
    %437 = math.rsqrt %436 : vector<1x158xf32>
    %438 = vector.broadcast %415 : vector<1x158xf32> to vector<8x158xf32>
    %439 = arith.subf %357, %438 : vector<8x158xf32>
    %440 = vector.broadcast %437 : vector<1x158xf32> to vector<8x158xf32>
    %441 = arith.mulf %439, %440 : vector<8x158xf32>
    %c0_159 = arith.constant 0 : index
    %c0_160 = arith.constant 0 : index
    %442 = vector.load %arg2[%c0_159, %c0_160] : memref<136x1xf32, #tpu.memory_space<vmem>>, vector<8x1xf32>
    %443 = vector.broadcast %442 : vector<8x1xf32> to vector<8x158xf32>
    %444 = arith.mulf %441, %443 : vector<8x158xf32>
    %c32_161 = arith.constant 32 : index
    %c0_162 = arith.constant 0 : index
    %445 = vector.load %arg2[%c32_161, %c0_162] : memref<136x1xf32, #tpu.memory_space<vmem>>, vector<8x1xf32>
    %446 = vector.broadcast %445 : vector<8x1xf32> to vector<8x158xf32>
    %447 = arith.addf %444, %446 : vector<8x158xf32>
    %c0_163 = arith.constant 0 : index
    %c8_164 = arith.constant 8 : index
    %448 = memref.load %arg3[%c0_163, %c8_164] : memref<4x9xf32, #tpu.memory_space<smem>>
    %449 = vector.broadcast %448 : f32 to vector<8x158xf32>
    %450 = arith.mulf %447, %449 : vector<8x158xf32>
    %451 = vector.broadcast %415 : vector<1x158xf32> to vector<8x158xf32>
    %452 = arith.subf %374, %451 : vector<8x158xf32>
    %453 = vector.broadcast %437 : vector<1x158xf32> to vector<8x158xf32>
    %454 = arith.mulf %452, %453 : vector<8x158xf32>
    %c8_165 = arith.constant 8 : index
    %c0_166 = arith.constant 0 : index
    %455 = vector.load %arg2[%c8_165, %c0_166] : memref<136x1xf32, #tpu.memory_space<vmem>>, vector<8x1xf32>
    %456 = vector.broadcast %455 : vector<8x1xf32> to vector<8x158xf32>
    %457 = arith.mulf %454, %456 : vector<8x158xf32>
    %c40_167 = arith.constant 40 : index
    %c0_168 = arith.constant 0 : index
    %458 = vector.load %arg2[%c40_167, %c0_168] : memref<136x1xf32, #tpu.memory_space<vmem>>, vector<8x1xf32>
    %459 = vector.broadcast %458 : vector<8x1xf32> to vector<8x158xf32>
    %460 = arith.addf %457, %459 : vector<8x158xf32>
    %c1_169 = arith.constant 1 : index
    %c8_170 = arith.constant 8 : index
    %461 = memref.load %arg3[%c1_169, %c8_170] : memref<4x9xf32, #tpu.memory_space<smem>>
    %462 = vector.broadcast %461 : f32 to vector<8x158xf32>
    %463 = arith.mulf %460, %462 : vector<8x158xf32>
    %464 = arith.addf %450, %463 : vector<8x158xf32>
    %465 = vector.broadcast %415 : vector<1x158xf32> to vector<8x158xf32>
    %466 = arith.subf %391, %465 : vector<8x158xf32>
    %467 = vector.broadcast %437 : vector<1x158xf32> to vector<8x158xf32>
    %468 = arith.mulf %466, %467 : vector<8x158xf32>
    %c16_171 = arith.constant 16 : index
    %c0_172 = arith.constant 0 : index
    %469 = vector.load %arg2[%c16_171, %c0_172] : memref<136x1xf32, #tpu.memory_space<vmem>>, vector<8x1xf32>
    %470 = vector.broadcast %469 : vector<8x1xf32> to vector<8x158xf32>
    %471 = arith.mulf %468, %470 : vector<8x158xf32>
    %c48_173 = arith.constant 48 : index
    %c0_174 = arith.constant 0 : index
    %472 = vector.load %arg2[%c48_173, %c0_174] : memref<136x1xf32, #tpu.memory_space<vmem>>, vector<8x1xf32>
    %473 = vector.broadcast %472 : vector<8x1xf32> to vector<8x158xf32>
    %474 = arith.addf %471, %473 : vector<8x158xf32>
    %c2_175 = arith.constant 2 : index
    %c8_176 = arith.constant 8 : index
    %475 = memref.load %arg3[%c2_175, %c8_176] : memref<4x9xf32, #tpu.memory_space<smem>>
    %476 = vector.broadcast %475 : f32 to vector<8x158xf32>
    %477 = arith.mulf %474, %476 : vector<8x158xf32>
    %478 = arith.addf %464, %477 : vector<8x158xf32>
    %479 = vector.broadcast %415 : vector<1x158xf32> to vector<8x158xf32>
    %480 = arith.subf %408, %479 : vector<8x158xf32>
    %481 = vector.broadcast %437 : vector<1x158xf32> to vector<8x158xf32>
    %482 = arith.mulf %480, %481 : vector<8x158xf32>
    %c24_177 = arith.constant 24 : index
    %c0_178 = arith.constant 0 : index
    %483 = vector.load %arg2[%c24_177, %c0_178] : memref<136x1xf32, #tpu.memory_space<vmem>>, vector<8x1xf32>
    %484 = vector.broadcast %483 : vector<8x1xf32> to vector<8x158xf32>
    %485 = arith.mulf %482, %484 : vector<8x158xf32>
    %c56_179 = arith.constant 56 : index
    %c0_180 = arith.constant 0 : index
    %486 = vector.load %arg2[%c56_179, %c0_180] : memref<136x1xf32, #tpu.memory_space<vmem>>, vector<8x1xf32>
    %487 = vector.broadcast %486 : vector<8x1xf32> to vector<8x158xf32>
    %488 = arith.addf %485, %487 : vector<8x158xf32>
    %c3_181 = arith.constant 3 : index
    %c8_182 = arith.constant 8 : index
    %489 = memref.load %arg3[%c3_181, %c8_182] : memref<4x9xf32, #tpu.memory_space<smem>>
    %490 = vector.broadcast %489 : f32 to vector<8x158xf32>
    %491 = arith.mulf %488, %490 : vector<8x158xf32>
    %492 = arith.addf %478, %491 : vector<8x158xf32>
    %c0_183 = arith.constant 0 : index
    %493 = memref.load %arg4[%c0_183] : memref<5xf32, #tpu.memory_space<smem>>
    %494 = vector.broadcast %493 : f32 to vector<8x158xf32>
    %495 = arith.addf %492, %494 : vector<8x158xf32>
    %c0_184 = arith.constant 0 : index
    %c4_185 = arith.constant 4 : index
    %496 = memref.load %arg3[%c0_184, %c4_185] : memref<4x9xf32, #tpu.memory_space<smem>>
    %c0_186 = arith.constant 0 : index
    %c1_187 = arith.constant 1 : index
    %c0_188 = arith.constant 0 : index
    %497 = vector.load %arg0[%c0_186, %c1_187, %c0_188] : memref<4x14x158xf32, #tpu.memory_space<vmem>>, vector<1x8x158xf32>
    %498 = vector.shape_cast %497 : vector<1x8x158xf32> to vector<8x158xf32>
    %499 = vector.broadcast %496 : f32 to vector<8x158xf32>
    %500 = arith.mulf %499, %498 : vector<8x158xf32>
    %c0_189 = arith.constant 0 : index
    %c5_190 = arith.constant 5 : index
    %501 = memref.load %arg3[%c0_189, %c5_190] : memref<4x9xf32, #tpu.memory_space<smem>>
    %c0_191 = arith.constant 0 : index
    %c3_192 = arith.constant 3 : index
    %c0_193 = arith.constant 0 : index
    %502 = vector.load %arg0[%c0_191, %c3_192, %c0_193] : memref<4x14x158xf32, #tpu.memory_space<vmem>>, vector<1x8x158xf32>
    %503 = vector.shape_cast %502 : vector<1x8x158xf32> to vector<8x158xf32>
    %504 = vector.broadcast %501 : f32 to vector<8x158xf32>
    %505 = arith.mulf %504, %503 : vector<8x158xf32>
    %506 = arith.addf %500, %505 : vector<8x158xf32>
    %c0_194 = arith.constant 0 : index
    %c6_195 = arith.constant 6 : index
    %507 = memref.load %arg3[%c0_194, %c6_195] : memref<4x9xf32, #tpu.memory_space<smem>>
    %c0_196 = arith.constant 0 : index
    %c5_197 = arith.constant 5 : index
    %c0_198 = arith.constant 0 : index
    %508 = vector.load %arg0[%c0_196, %c5_197, %c0_198] : memref<4x14x158xf32, #tpu.memory_space<vmem>>, vector<1x8x158xf32>
    %509 = vector.shape_cast %508 : vector<1x8x158xf32> to vector<8x158xf32>
    %510 = vector.broadcast %507 : f32 to vector<8x158xf32>
    %511 = arith.mulf %510, %509 : vector<8x158xf32>
    %512 = arith.addf %506, %511 : vector<8x158xf32>
    %c0_199 = arith.constant 0 : index
    %c7_200 = arith.constant 7 : index
    %513 = memref.load %arg3[%c0_199, %c7_200] : memref<4x9xf32, #tpu.memory_space<smem>>
    %514 = vector.broadcast %513 : f32 to vector<8x158xf32>
    %515 = arith.addf %512, %514 : vector<8x158xf32>
    %c1_201 = arith.constant 1 : index
    %c4_202 = arith.constant 4 : index
    %516 = memref.load %arg3[%c1_201, %c4_202] : memref<4x9xf32, #tpu.memory_space<smem>>
    %c1_203 = arith.constant 1 : index
    %c1_204 = arith.constant 1 : index
    %c0_205 = arith.constant 0 : index
    %517 = vector.load %arg0[%c1_203, %c1_204, %c0_205] : memref<4x14x158xf32, #tpu.memory_space<vmem>>, vector<1x8x158xf32>
    %518 = vector.shape_cast %517 : vector<1x8x158xf32> to vector<8x158xf32>
    %519 = vector.broadcast %516 : f32 to vector<8x158xf32>
    %520 = arith.mulf %519, %518 : vector<8x158xf32>
    %c1_206 = arith.constant 1 : index
    %c5_207 = arith.constant 5 : index
    %521 = memref.load %arg3[%c1_206, %c5_207] : memref<4x9xf32, #tpu.memory_space<smem>>
    %c1_208 = arith.constant 1 : index
    %c3_209 = arith.constant 3 : index
    %c0_210 = arith.constant 0 : index
    %522 = vector.load %arg0[%c1_208, %c3_209, %c0_210] : memref<4x14x158xf32, #tpu.memory_space<vmem>>, vector<1x8x158xf32>
    %523 = vector.shape_cast %522 : vector<1x8x158xf32> to vector<8x158xf32>
    %524 = vector.broadcast %521 : f32 to vector<8x158xf32>
    %525 = arith.mulf %524, %523 : vector<8x158xf32>
    %526 = arith.addf %520, %525 : vector<8x158xf32>
    %c1_211 = arith.constant 1 : index
    %c6_212 = arith.constant 6 : index
    %527 = memref.load %arg3[%c1_211, %c6_212] : memref<4x9xf32, #tpu.memory_space<smem>>
    %c1_213 = arith.constant 1 : index
    %c5_214 = arith.constant 5 : index
    %c0_215 = arith.constant 0 : index
    %528 = vector.load %arg0[%c1_213, %c5_214, %c0_215] : memref<4x14x158xf32, #tpu.memory_space<vmem>>, vector<1x8x158xf32>
    %529 = vector.shape_cast %528 : vector<1x8x158xf32> to vector<8x158xf32>
    %530 = vector.broadcast %527 : f32 to vector<8x158xf32>
    %531 = arith.mulf %530, %529 : vector<8x158xf32>
    %532 = arith.addf %526, %531 : vector<8x158xf32>
    %c1_216 = arith.constant 1 : index
    %c7_217 = arith.constant 7 : index
    %533 = memref.load %arg3[%c1_216, %c7_217] : memref<4x9xf32, #tpu.memory_space<smem>>
    %534 = vector.broadcast %533 : f32 to vector<8x158xf32>
    %535 = arith.addf %532, %534 : vector<8x158xf32>
    %c2_218 = arith.constant 2 : index
    %c4_219 = arith.constant 4 : index
    %536 = memref.load %arg3[%c2_218, %c4_219] : memref<4x9xf32, #tpu.memory_space<smem>>
    %c2_220 = arith.constant 2 : index
    %c1_221 = arith.constant 1 : index
    %c0_222 = arith.constant 0 : index
    %537 = vector.load %arg0[%c2_220, %c1_221, %c0_222] : memref<4x14x158xf32, #tpu.memory_space<vmem>>, vector<1x8x158xf32>
    %538 = vector.shape_cast %537 : vector<1x8x158xf32> to vector<8x158xf32>
    %539 = vector.broadcast %536 : f32 to vector<8x158xf32>
    %540 = arith.mulf %539, %538 : vector<8x158xf32>
    %c2_223 = arith.constant 2 : index
    %c5_224 = arith.constant 5 : index
    %541 = memref.load %arg3[%c2_223, %c5_224] : memref<4x9xf32, #tpu.memory_space<smem>>
    %c2_225 = arith.constant 2 : index
    %c3_226 = arith.constant 3 : index
    %c0_227 = arith.constant 0 : index
    %542 = vector.load %arg0[%c2_225, %c3_226, %c0_227] : memref<4x14x158xf32, #tpu.memory_space<vmem>>, vector<1x8x158xf32>
    %543 = vector.shape_cast %542 : vector<1x8x158xf32> to vector<8x158xf32>
    %544 = vector.broadcast %541 : f32 to vector<8x158xf32>
    %545 = arith.mulf %544, %543 : vector<8x158xf32>
    %546 = arith.addf %540, %545 : vector<8x158xf32>
    %c2_228 = arith.constant 2 : index
    %c6_229 = arith.constant 6 : index
    %547 = memref.load %arg3[%c2_228, %c6_229] : memref<4x9xf32, #tpu.memory_space<smem>>
    %c2_230 = arith.constant 2 : index
    %c5_231 = arith.constant 5 : index
    %c0_232 = arith.constant 0 : index
    %548 = vector.load %arg0[%c2_230, %c5_231, %c0_232] : memref<4x14x158xf32, #tpu.memory_space<vmem>>, vector<1x8x158xf32>
    %549 = vector.shape_cast %548 : vector<1x8x158xf32> to vector<8x158xf32>
    %550 = vector.broadcast %547 : f32 to vector<8x158xf32>
    %551 = arith.mulf %550, %549 : vector<8x158xf32>
    %552 = arith.addf %546, %551 : vector<8x158xf32>
    %c2_233 = arith.constant 2 : index
    %c7_234 = arith.constant 7 : index
    %553 = memref.load %arg3[%c2_233, %c7_234] : memref<4x9xf32, #tpu.memory_space<smem>>
    %554 = vector.broadcast %553 : f32 to vector<8x158xf32>
    %555 = arith.addf %552, %554 : vector<8x158xf32>
    %c3_235 = arith.constant 3 : index
    %c4_236 = arith.constant 4 : index
    %556 = memref.load %arg3[%c3_235, %c4_236] : memref<4x9xf32, #tpu.memory_space<smem>>
    %c3_237 = arith.constant 3 : index
    %c1_238 = arith.constant 1 : index
    %c0_239 = arith.constant 0 : index
    %557 = vector.load %arg0[%c3_237, %c1_238, %c0_239] : memref<4x14x158xf32, #tpu.memory_space<vmem>>, vector<1x8x158xf32>
    %558 = vector.shape_cast %557 : vector<1x8x158xf32> to vector<8x158xf32>
    %559 = vector.broadcast %556 : f32 to vector<8x158xf32>
    %560 = arith.mulf %559, %558 : vector<8x158xf32>
    %c3_240 = arith.constant 3 : index
    %c5_241 = arith.constant 5 : index
    %561 = memref.load %arg3[%c3_240, %c5_241] : memref<4x9xf32, #tpu.memory_space<smem>>
    %c3_242 = arith.constant 3 : index
    %c3_243 = arith.constant 3 : index
    %c0_244 = arith.constant 0 : index
    %562 = vector.load %arg0[%c3_242, %c3_243, %c0_244] : memref<4x14x158xf32, #tpu.memory_space<vmem>>, vector<1x8x158xf32>
    %563 = vector.shape_cast %562 : vector<1x8x158xf32> to vector<8x158xf32>
    %564 = vector.broadcast %561 : f32 to vector<8x158xf32>
    %565 = arith.mulf %564, %563 : vector<8x158xf32>
    %566 = arith.addf %560, %565 : vector<8x158xf32>
    %c3_245 = arith.constant 3 : index
    %c6_246 = arith.constant 6 : index
    %567 = memref.load %arg3[%c3_245, %c6_246] : memref<4x9xf32, #tpu.memory_space<smem>>
    %c3_247 = arith.constant 3 : index
    %c5_248 = arith.constant 5 : index
    %c0_249 = arith.constant 0 : index
    %568 = vector.load %arg0[%c3_247, %c5_248, %c0_249] : memref<4x14x158xf32, #tpu.memory_space<vmem>>, vector<1x8x158xf32>
    %569 = vector.shape_cast %568 : vector<1x8x158xf32> to vector<8x158xf32>
    %570 = vector.broadcast %567 : f32 to vector<8x158xf32>
    %571 = arith.mulf %570, %569 : vector<8x158xf32>
    %572 = arith.addf %566, %571 : vector<8x158xf32>
    %c3_250 = arith.constant 3 : index
    %c7_251 = arith.constant 7 : index
    %573 = memref.load %arg3[%c3_250, %c7_251] : memref<4x9xf32, #tpu.memory_space<smem>>
    %574 = vector.broadcast %573 : f32 to vector<8x158xf32>
    %575 = arith.addf %572, %574 : vector<8x158xf32>
    %576 = arith.addf %515, %535 : vector<8x158xf32>
    %577 = arith.addf %576, %555 : vector<8x158xf32>
    %578 = arith.addf %577, %575 : vector<8x158xf32>
    %cst_252 = arith.constant dense<0.000000e+00> : vector<158xf32>
    %579 = vector.multi_reduction <add>, %578, %cst_252 [0] : vector<8x158xf32> to vector<158xf32>
    %580 = vector.shape_cast %579 : vector<158xf32> to vector<1x158xf32>
    %cst_253 = arith.constant 3.125000e-02 : f32
    %581 = vector.broadcast %cst_253 : f32 to vector<1x158xf32>
    %582 = arith.mulf %580, %581 : vector<1x158xf32>
    %583 = vector.broadcast %582 : vector<1x158xf32> to vector<8x158xf32>
    %584 = arith.subf %515, %583 : vector<8x158xf32>
    %585 = arith.mulf %584, %584 : vector<8x158xf32>
    %586 = vector.broadcast %582 : vector<1x158xf32> to vector<8x158xf32>
    %587 = arith.subf %535, %586 : vector<8x158xf32>
    %588 = arith.mulf %587, %587 : vector<8x158xf32>
    %589 = arith.addf %585, %588 : vector<8x158xf32>
    %590 = vector.broadcast %582 : vector<1x158xf32> to vector<8x158xf32>
    %591 = arith.subf %555, %590 : vector<8x158xf32>
    %592 = arith.mulf %591, %591 : vector<8x158xf32>
    %593 = arith.addf %589, %592 : vector<8x158xf32>
    %594 = vector.broadcast %582 : vector<1x158xf32> to vector<8x158xf32>
    %595 = arith.subf %575, %594 : vector<8x158xf32>
    %596 = arith.mulf %595, %595 : vector<8x158xf32>
    %597 = arith.addf %593, %596 : vector<8x158xf32>
    %cst_254 = arith.constant dense<0.000000e+00> : vector<158xf32>
    %598 = vector.multi_reduction <add>, %597, %cst_254 [0] : vector<8x158xf32> to vector<158xf32>
    %599 = vector.shape_cast %598 : vector<158xf32> to vector<1x158xf32>
    %cst_255 = arith.constant 3.125000e-02 : f32
    %600 = vector.broadcast %cst_255 : f32 to vector<1x158xf32>
    %601 = arith.mulf %599, %600 : vector<1x158xf32>
    %cst_256 = arith.constant 9.99999974E-6 : f32
    %602 = vector.broadcast %cst_256 : f32 to vector<1x158xf32>
    %603 = arith.addf %601, %602 : vector<1x158xf32>
    %604 = math.rsqrt %603 : vector<1x158xf32>
    %605 = vector.broadcast %582 : vector<1x158xf32> to vector<8x158xf32>
    %606 = arith.subf %515, %605 : vector<8x158xf32>
    %607 = vector.broadcast %604 : vector<1x158xf32> to vector<8x158xf32>
    %608 = arith.mulf %606, %607 : vector<8x158xf32>
    %c0_257 = arith.constant 0 : index
    %c0_258 = arith.constant 0 : index
    %609 = vector.load %arg2[%c0_257, %c0_258] : memref<136x1xf32, #tpu.memory_space<vmem>>, vector<8x1xf32>
    %610 = vector.broadcast %609 : vector<8x1xf32> to vector<8x158xf32>
    %611 = arith.mulf %608, %610 : vector<8x158xf32>
    %c32_259 = arith.constant 32 : index
    %c0_260 = arith.constant 0 : index
    %612 = vector.load %arg2[%c32_259, %c0_260] : memref<136x1xf32, #tpu.memory_space<vmem>>, vector<8x1xf32>
    %613 = vector.broadcast %612 : vector<8x1xf32> to vector<8x158xf32>
    %614 = arith.addf %611, %613 : vector<8x158xf32>
    %c0_261 = arith.constant 0 : index
    %c8_262 = arith.constant 8 : index
    %615 = memref.load %arg3[%c0_261, %c8_262] : memref<4x9xf32, #tpu.memory_space<smem>>
    %616 = vector.broadcast %615 : f32 to vector<8x158xf32>
    %617 = arith.mulf %614, %616 : vector<8x158xf32>
    %618 = vector.broadcast %582 : vector<1x158xf32> to vector<8x158xf32>
    %619 = arith.subf %535, %618 : vector<8x158xf32>
    %620 = vector.broadcast %604 : vector<1x158xf32> to vector<8x158xf32>
    %621 = arith.mulf %619, %620 : vector<8x158xf32>
    %c8_263 = arith.constant 8 : index
    %c0_264 = arith.constant 0 : index
    %622 = vector.load %arg2[%c8_263, %c0_264] : memref<136x1xf32, #tpu.memory_space<vmem>>, vector<8x1xf32>
    %623 = vector.broadcast %622 : vector<8x1xf32> to vector<8x158xf32>
    %624 = arith.mulf %621, %623 : vector<8x158xf32>
    %c40_265 = arith.constant 40 : index
    %c0_266 = arith.constant 0 : index
    %625 = vector.load %arg2[%c40_265, %c0_266] : memref<136x1xf32, #tpu.memory_space<vmem>>, vector<8x1xf32>
    %626 = vector.broadcast %625 : vector<8x1xf32> to vector<8x158xf32>
    %627 = arith.addf %624, %626 : vector<8x158xf32>
    %c1_267 = arith.constant 1 : index
    %c8_268 = arith.constant 8 : index
    %628 = memref.load %arg3[%c1_267, %c8_268] : memref<4x9xf32, #tpu.memory_space<smem>>
    %629 = vector.broadcast %628 : f32 to vector<8x158xf32>
    %630 = arith.mulf %627, %629 : vector<8x158xf32>
    %631 = arith.addf %617, %630 : vector<8x158xf32>
    %632 = vector.broadcast %582 : vector<1x158xf32> to vector<8x158xf32>
    %633 = arith.subf %555, %632 : vector<8x158xf32>
    %634 = vector.broadcast %604 : vector<1x158xf32> to vector<8x158xf32>
    %635 = arith.mulf %633, %634 : vector<8x158xf32>
    %c16_269 = arith.constant 16 : index
    %c0_270 = arith.constant 0 : index
    %636 = vector.load %arg2[%c16_269, %c0_270] : memref<136x1xf32, #tpu.memory_space<vmem>>, vector<8x1xf32>
    %637 = vector.broadcast %636 : vector<8x1xf32> to vector<8x158xf32>
    %638 = arith.mulf %635, %637 : vector<8x158xf32>
    %c48_271 = arith.constant 48 : index
    %c0_272 = arith.constant 0 : index
    %639 = vector.load %arg2[%c48_271, %c0_272] : memref<136x1xf32, #tpu.memory_space<vmem>>, vector<8x1xf32>
    %640 = vector.broadcast %639 : vector<8x1xf32> to vector<8x158xf32>
    %641 = arith.addf %638, %640 : vector<8x158xf32>
    %c2_273 = arith.constant 2 : index
    %c8_274 = arith.constant 8 : index
    %642 = memref.load %arg3[%c2_273, %c8_274] : memref<4x9xf32, #tpu.memory_space<smem>>
    %643 = vector.broadcast %642 : f32 to vector<8x158xf32>
    %644 = arith.mulf %641, %643 : vector<8x158xf32>
    %645 = arith.addf %631, %644 : vector<8x158xf32>
    %646 = vector.broadcast %582 : vector<1x158xf32> to vector<8x158xf32>
    %647 = arith.subf %575, %646 : vector<8x158xf32>
    %648 = vector.broadcast %604 : vector<1x158xf32> to vector<8x158xf32>
    %649 = arith.mulf %647, %648 : vector<8x158xf32>
    %c24_275 = arith.constant 24 : index
    %c0_276 = arith.constant 0 : index
    %650 = vector.load %arg2[%c24_275, %c0_276] : memref<136x1xf32, #tpu.memory_space<vmem>>, vector<8x1xf32>
    %651 = vector.broadcast %650 : vector<8x1xf32> to vector<8x158xf32>
    %652 = arith.mulf %649, %651 : vector<8x158xf32>
    %c56_277 = arith.constant 56 : index
    %c0_278 = arith.constant 0 : index
    %653 = vector.load %arg2[%c56_277, %c0_278] : memref<136x1xf32, #tpu.memory_space<vmem>>, vector<8x1xf32>
    %654 = vector.broadcast %653 : vector<8x1xf32> to vector<8x158xf32>
    %655 = arith.addf %652, %654 : vector<8x158xf32>
    %c3_279 = arith.constant 3 : index
    %c8_280 = arith.constant 8 : index
    %656 = memref.load %arg3[%c3_279, %c8_280] : memref<4x9xf32, #tpu.memory_space<smem>>
    %657 = vector.broadcast %656 : f32 to vector<8x158xf32>
    %658 = arith.mulf %655, %657 : vector<8x158xf32>
    %659 = arith.addf %645, %658 : vector<8x158xf32>
    %c0_281 = arith.constant 0 : index
    %660 = memref.load %arg4[%c0_281] : memref<5xf32, #tpu.memory_space<smem>>
    %661 = vector.broadcast %660 : f32 to vector<8x158xf32>
    %662 = arith.addf %659, %661 : vector<8x158xf32>
    %663 = tpu.concatenate %340, %662, %495 in 0 : vector<8x158xf32>, vector<8x158xf32>, vector<8x158xf32> -> vector<24x158xf32>
    %664 = tpu.iota {dimensions = array<i32: 0>} : vector<158x158xi32>
    %665 = tpu.iota {dimensions = array<i32: 1>} : vector<158x158xi32>
    %c1_i32 = arith.constant 1 : i32
    %666 = vector.broadcast %c1_i32 : i32 to vector<158x158xi32>
    %667 = arith.andi %665, %666 : vector<158x158xi32>
    %668 = arith.subi %665, %667 : vector<158x158xi32>
    %669 = arith.cmpi eq, %664, %668 : vector<158x158xi32>
    %c9 = arith.constant 9 : index
    %c0_282 = arith.constant 0 : index
    %670 = vector.load %arg1[%c9, %c0_282] : memref<11x158xf32, #tpu.memory_space<vmem>>, vector<1x158xf32>
    %cst_283 = arith.constant 0.000000e+00 : f32
    %671 = vector.shape_cast %670 : vector<1x158xf32> to vector<1x158xf32>
    %672 = vector.broadcast %671 : vector<1x158xf32> to vector<158x158xf32>
    %673 = vector.broadcast %cst_283 : f32 to vector<158x158xf32>
    %674 = arith.select %669, %672, %673 : vector<158x158xi1>, vector<158x158xf32>
    %c1_i32_284 = arith.constant 1 : i32
    %675 = vector.broadcast %c1_i32_284 : i32 to vector<158x158xi32>
    %676 = arith.addi %668, %675 : vector<158x158xi32>
    %677 = arith.cmpi eq, %664, %676 : vector<158x158xi32>
    %c10 = arith.constant 10 : index
    %c0_285 = arith.constant 0 : index
    %678 = vector.load %arg1[%c10, %c0_285] : memref<11x158xf32, #tpu.memory_space<vmem>>, vector<1x158xf32>
    %cst_286 = arith.constant 0.000000e+00 : f32
    %679 = vector.shape_cast %678 : vector<1x158xf32> to vector<1x158xf32>
    %680 = vector.broadcast %679 : vector<1x158xf32> to vector<158x158xf32>
    %681 = vector.broadcast %cst_286 : f32 to vector<158x158xf32>
    %682 = arith.select %677, %680, %681 : vector<158x158xi1>, vector<158x158xf32>
    %683 = arith.addf %674, %682 : vector<158x158xf32>
    %cst_287 = arith.constant dense<0.000000e+00> : vector<24x158xf32>
    %684 = tpu.matmul %663, %683, %cst_287 {dimension_numbers = #tpu.dot_dimension_numbers<[1], [0], [0], [1], [0, 0, 1, 1], [], []>} : vector<24x158xf32>, vector<158x158xf32>, vector<24x158xf32> -> vector<24x158xf32>
    %c0_288 = arith.constant 0 : index
    %c0_289 = arith.constant 0 : index
    %685 = vector.load %arg1[%c0_288, %c0_289] : memref<11x158xf32, #tpu.memory_space<vmem>>, vector<1x158xf32>
    %686 = vector.broadcast %685 : vector<1x158xf32> to vector<24x158xf32>
    %687 = arith.addf %684, %686 : vector<24x158xf32>
    %688 = tpu.iota {dimensions = array<i32: 0>} : vector<24x24xi32>
    %689 = tpu.iota {dimensions = array<i32: 1>} : vector<24x24xi32>
    %c1_290 = arith.constant 1 : index
    %c0_291 = arith.constant 0 : index
    %690 = vector.load %arg1[%c1_290, %c0_291] : memref<11x158xf32, #tpu.memory_space<vmem>>, vector<1x158xf32>
    %c-2_i32 = arith.constant -2 : i32
    %691 = vector.broadcast %c-2_i32 : i32 to vector<24x24xi32>
    %692 = arith.addi %688, %691 : vector<24x24xi32>
    %693 = arith.cmpi eq, %689, %692 : vector<24x24xi32>
    %cst_292 = arith.constant 1.000000e+00 : f32
    %cst_293 = arith.constant 0.000000e+00 : f32
    %694 = vector.broadcast %cst_292 : f32 to vector<24x24xf32>
    %695 = vector.broadcast %cst_293 : f32 to vector<24x24xf32>
    %696 = arith.select %693, %694, %695 : vector<24x24xi1>, vector<24x24xf32>
    %cst_294 = arith.constant dense<0.000000e+00> : vector<24x158xf32>
    %697 = tpu.matmul %696, %687, %cst_294 {dimension_numbers = #tpu.dot_dimension_numbers<[1], [0], [0], [1], [0, 0, 1, 1], [], []>} : vector<24x24xf32>, vector<24x158xf32>, vector<24x158xf32> -> vector<24x158xf32>
    %698 = vector.broadcast %690 : vector<1x158xf32> to vector<24x158xf32>
    %699 = arith.mulf %698, %697 : vector<24x158xf32>
    %c2_295 = arith.constant 2 : index
    %c0_296 = arith.constant 0 : index
    %700 = vector.load %arg1[%c2_295, %c0_296] : memref<11x158xf32, #tpu.memory_space<vmem>>, vector<1x158xf32>
    %701 = vector.broadcast %700 : vector<1x158xf32> to vector<24x158xf32>
    %702 = arith.mulf %701, %687 : vector<24x158xf32>
    %703 = arith.addf %699, %702 : vector<24x158xf32>
    %c3_297 = arith.constant 3 : index
    %c0_298 = arith.constant 0 : index
    %704 = vector.load %arg1[%c3_297, %c0_298] : memref<11x158xf32, #tpu.memory_space<vmem>>, vector<1x158xf32>
    %c2_i32_299 = arith.constant 2 : i32
    %705 = vector.broadcast %c2_i32_299 : i32 to vector<24x24xi32>
    %706 = arith.addi %688, %705 : vector<24x24xi32>
    %707 = arith.cmpi eq, %689, %706 : vector<24x24xi32>
    %cst_300 = arith.constant 1.000000e+00 : f32
    %cst_301 = arith.constant 0.000000e+00 : f32
    %708 = vector.broadcast %cst_300 : f32 to vector<24x24xf32>
    %709 = vector.broadcast %cst_301 : f32 to vector<24x24xf32>
    %710 = arith.select %707, %708, %709 : vector<24x24xi1>, vector<24x24xf32>
    %cst_302 = arith.constant dense<0.000000e+00> : vector<24x158xf32>
    %711 = tpu.matmul %710, %687, %cst_302 {dimension_numbers = #tpu.dot_dimension_numbers<[1], [0], [0], [1], [0, 0, 1, 1], [], []>} : vector<24x24xf32>, vector<24x158xf32>, vector<24x158xf32> -> vector<24x158xf32>
    %712 = vector.broadcast %704 : vector<1x158xf32> to vector<24x158xf32>
    %713 = arith.mulf %712, %711 : vector<24x158xf32>
    %714 = arith.addf %703, %713 : vector<24x158xf32>
    %c4_303 = arith.constant 4 : index
    %c0_304 = arith.constant 0 : index
    %715 = vector.load %arg1[%c4_303, %c0_304] : memref<11x158xf32, #tpu.memory_space<vmem>>, vector<1x158xf32>
    %716 = vector.broadcast %715 : vector<1x158xf32> to vector<24x158xf32>
    %717 = arith.addf %714, %716 : vector<24x158xf32>
    %c5_305 = arith.constant 5 : index
    %c0_306 = arith.constant 0 : index
    %718 = vector.load %arg1[%c5_305, %c0_306] : memref<11x158xf32, #tpu.memory_space<vmem>>, vector<1x158xf32>
    %c-4_i32 = arith.constant -4 : i32
    %719 = vector.broadcast %c-4_i32 : i32 to vector<24x24xi32>
    %720 = arith.addi %688, %719 : vector<24x24xi32>
    %721 = arith.cmpi eq, %689, %720 : vector<24x24xi32>
    %cst_307 = arith.constant 1.000000e+00 : f32
    %cst_308 = arith.constant 0.000000e+00 : f32
    %722 = vector.broadcast %cst_307 : f32 to vector<24x24xf32>
    %723 = vector.broadcast %cst_308 : f32 to vector<24x24xf32>
    %724 = arith.select %721, %722, %723 : vector<24x24xi1>, vector<24x24xf32>
    %cst_309 = arith.constant dense<0.000000e+00> : vector<24x158xf32>
    %725 = tpu.matmul %724, %717, %cst_309 {dimension_numbers = #tpu.dot_dimension_numbers<[1], [0], [0], [1], [0, 0, 1, 1], [], []>} : vector<24x24xf32>, vector<24x158xf32>, vector<24x158xf32> -> vector<24x158xf32>
    %726 = vector.broadcast %718 : vector<1x158xf32> to vector<24x158xf32>
    %727 = arith.mulf %726, %725 : vector<24x158xf32>
    %c6_310 = arith.constant 6 : index
    %c0_311 = arith.constant 0 : index
    %728 = vector.load %arg1[%c6_310, %c0_311] : memref<11x158xf32, #tpu.memory_space<vmem>>, vector<1x158xf32>
    %729 = vector.broadcast %728 : vector<1x158xf32> to vector<24x158xf32>
    %730 = arith.mulf %729, %717 : vector<24x158xf32>
    %731 = arith.addf %727, %730 : vector<24x158xf32>
    %c7_312 = arith.constant 7 : index
    %c0_313 = arith.constant 0 : index
    %732 = vector.load %arg1[%c7_312, %c0_313] : memref<11x158xf32, #tpu.memory_space<vmem>>, vector<1x158xf32>
    %c4_i32 = arith.constant 4 : i32
    %733 = vector.broadcast %c4_i32 : i32 to vector<24x24xi32>
    %734 = arith.addi %688, %733 : vector<24x24xi32>
    %735 = arith.cmpi eq, %689, %734 : vector<24x24xi32>
    %cst_314 = arith.constant 1.000000e+00 : f32
    %cst_315 = arith.constant 0.000000e+00 : f32
    %736 = vector.broadcast %cst_314 : f32 to vector<24x24xf32>
    %737 = vector.broadcast %cst_315 : f32 to vector<24x24xf32>
    %738 = arith.select %735, %736, %737 : vector<24x24xi1>, vector<24x24xf32>
    %cst_316 = arith.constant dense<0.000000e+00> : vector<24x158xf32>
    %739 = tpu.matmul %738, %717, %cst_316 {dimension_numbers = #tpu.dot_dimension_numbers<[1], [0], [0], [1], [0, 0, 1, 1], [], []>} : vector<24x24xf32>, vector<24x158xf32>, vector<24x158xf32> -> vector<24x158xf32>
    %740 = vector.broadcast %732 : vector<1x158xf32> to vector<24x158xf32>
    %741 = arith.mulf %740, %739 : vector<24x158xf32>
    %742 = arith.addf %731, %741 : vector<24x158xf32>
    %c8_317 = arith.constant 8 : index
    %c0_318 = arith.constant 0 : index
    %743 = vector.load %arg1[%c8_317, %c0_318] : memref<11x158xf32, #tpu.memory_space<vmem>>, vector<1x158xf32>
    %744 = vector.broadcast %743 : vector<1x158xf32> to vector<24x158xf32>
    %745 = arith.addf %742, %744 : vector<24x158xf32>
    %c64 = arith.constant 64 : index
    %c0_319 = arith.constant 0 : index
    %746 = vector.load %arg2[%c64, %c0_319] : memref<136x1xf32, #tpu.memory_space<vmem>>, vector<24x1xf32>
    %747 = vector.broadcast %746 : vector<24x1xf32> to vector<24x158xf32>
    %748 = arith.mulf %663, %747 : vector<24x158xf32>
    %cst_320 = arith.constant dense<0.000000e+00> : vector<158xf32>
    %749 = vector.multi_reduction <add>, %748, %cst_320 [0] : vector<24x158xf32> to vector<158xf32>
    %750 = vector.shape_cast %749 : vector<158xf32> to vector<1x158xf32>
    %c1_321 = arith.constant 1 : index
    %751 = memref.load %arg4[%c1_321] : memref<5xf32, #tpu.memory_space<smem>>
    %752 = vector.broadcast %751 : f32 to vector<1x158xf32>
    %753 = arith.addf %750, %752 : vector<1x158xf32>
    %c88 = arith.constant 88 : index
    %c0_322 = arith.constant 0 : index
    %754 = vector.load %arg2[%c88, %c0_322] : memref<136x1xf32, #tpu.memory_space<vmem>>, vector<24x1xf32>
    %755 = vector.broadcast %754 : vector<24x1xf32> to vector<24x158xf32>
    %756 = arith.mulf %717, %755 : vector<24x158xf32>
    %cst_323 = arith.constant dense<0.000000e+00> : vector<158xf32>
    %757 = vector.multi_reduction <add>, %756, %cst_323 [0] : vector<24x158xf32> to vector<158xf32>
    %758 = vector.shape_cast %757 : vector<158xf32> to vector<1x158xf32>
    %c112 = arith.constant 112 : index
    %c0_324 = arith.constant 0 : index
    %759 = vector.load %arg2[%c112, %c0_324] : memref<136x1xf32, #tpu.memory_space<vmem>>, vector<24x1xf32>
    %760 = vector.broadcast %759 : vector<24x1xf32> to vector<24x158xf32>
    %761 = arith.mulf %745, %760 : vector<24x158xf32>
    %cst_325 = arith.constant dense<0.000000e+00> : vector<158xf32>
    %762 = vector.multi_reduction <add>, %761, %cst_325 [0] : vector<24x158xf32> to vector<158xf32>
    %763 = vector.shape_cast %762 : vector<158xf32> to vector<1x158xf32>
    %764 = arith.addf %758, %763 : vector<1x158xf32>
    %c2_326 = arith.constant 2 : index
    %765 = memref.load %arg4[%c2_326] : memref<5xf32, #tpu.memory_space<smem>>
    %766 = vector.broadcast %765 : f32 to vector<1x158xf32>
    %767 = arith.addf %764, %766 : vector<1x158xf32>
    %768 = arith.addf %767, %753 : vector<1x158xf32>
    %c3_327 = arith.constant 3 : index
    %769 = memref.load %arg4[%c3_327] : memref<5xf32, #tpu.memory_space<smem>>
    %770 = vector.broadcast %769 : f32 to vector<1x158xf32>
    %771 = arith.mulf %768, %770 : vector<1x158xf32>
    %c4_328 = arith.constant 4 : index
    %772 = memref.load %arg4[%c4_328] : memref<5xf32, #tpu.memory_space<smem>>
    %773 = vector.broadcast %772 : f32 to vector<1x158xf32>
    %774 = arith.addf %771, %773 : vector<1x158xf32>
    %c0_329 = arith.constant 0 : index
    %c0_330 = arith.constant 0 : index
    %775 = vector.load %arg5[%c0_329, %c0_330] : memref<1x158xf32, #tpu.memory_space<vmem>>, vector<1x158xf32>
    tpu.vector_store %arg5[%c0_329, %c0_330], %774 {strides = array<i32>} : memref<1x158xf32, #tpu.memory_space<vmem>>, vector<1x158xf32>,
    return
  }
}

</mosaic_0001>

<llo_original>
// kernel: stock_conv_mixer_forward.1
$region0: #{stock_conv_mixer_forward.1}
  #allocation0 [shape = 'u32[]', space=smem, size = 0x4, offset = 0x4, fixed_abs, tag = 'smem constant byte address 0x4 - core index']
  #allocation1 [shape = 'u32[144,128]{1,0:T(1,128)}', space=vmem, size = 0x12000, scoped, tag = 'internal scratch']
  %s0 = inlined_call_operand.vmem [shape: f32[4,14,158], index: 0, kind: input, shape index: {}]
  %s1 = inlined_call_operand.vmem [shape: f32[11,158], index: 1, kind: input, shape index: {}]
  %s2 = inlined_call_operand.vmem [shape: f32[136,1], index: 2, kind: input, shape index: {}]
  %s3 = inlined_call_operand.vmem [shape: f32[4,9], index: 3, kind: input, shape index: {}]
  %s4 = inlined_call_operand.vmem [shape: f32[5], index: 4, kind: input, shape index: {}]
  %s5 = inlined_call_operand.hbm [shape: f32[1,158], index: 5, kind: output, shape index: {}]
  %s6 = sld [smem:[#allocation0]]
  $region38: #{stock_conv_mixer_forward.1} parent=0
    _
  %s8 = ssub.s32 1, %s6
  %s9 = scalar_select 0, %s8, %s6
  $region1: #{stock_conv_mixer_forward.1} parent=0
    #allocation2 [shape = 'u8[2048]{0}', space=smem, size = 0x800, scoped, tag = 'input window, operand 3, single buffered']
    #allocation3 [shape = 's32[1]{0}', space=sflag, size = 0x4, scoped, tag = 'scoped memory for stock_conv_mixer_forward.1']
    #allocation4 [shape = 's32[1]{0}', space=sflag, size = 0x4, scoped, tag = 'scoped memory for stock_conv_mixer_forward.1']
    #allocation5 [shape = 'u8[512]{0}', space=smem, size = 0x200, scoped, tag = 'input window, operand 4, single buffered']
    #allocation6 [shape = 's32[1]{0}', space=sflag, size = 0x4, scoped, tag = 'scoped memory for stock_conv_mixer_forward.1']
    #allocation7 [shape = 'u8[1024]{0}', space=vmem, size = 0x400, scoped, tag = 'output window, operand 0, single buffered']
    %10 = vsyncpa [#allocation4], 0
    %11 = vsyncpa [#allocation6], 0
    %12 = vsyncpa [#allocation3], 0
    // Predicated region
    $region2: #{stock_conv_mixer_forward.1} parent=1 // pred_check
      _
    $region3: #{stock_conv_mixer_forward.1} parent=1 // pred_check_branch
      %14 = sbr.rel (0) target = $region5
    $region4: #{stock_conv_mixer_forward.1} parent=1 // pred_region
      _
    $region5: #{stock_conv_mixer_forward.1} parent=1 // pred_fallthru
      _
    // Predicated region
    $region6: #{stock_conv_mixer_forward.1} parent=1 // pred_check
      _
    $region7: #{stock_conv_mixer_forward.1} parent=1 // pred_check_branch
      %16 = sbr.rel (0) target = $region9
    $region8: #{stock_conv_mixer_forward.1} parent=1 // pred_region
      _
    $region9: #{stock_conv_mixer_forward.1} parent=1 // pred_fallthru
      _
    // Predicated region
    $region10: #{stock_conv_mixer_forward.1} parent=1 // pred_check
      _
    $region11: #{stock_conv_mixer_forward.1} parent=1 // pred_check_branch
      %18 = sbr.rel (0) target = $region13
    $region12: #{stock_conv_mixer_forward.1} parent=1 // pred_region
      _
    $region13: #{stock_conv_mixer_forward.1} parent=1 // pred_fallthru
      _
    // Predicated region
    $region14: #{stock_conv_mixer_forward.1} parent=1 // pred_check
      _
    $region15: #{stock_conv_mixer_forward.1} parent=1 // pred_check_branch
      %20 = sbr.rel (0) target = $region17
    $region16: #{stock_conv_mixer_forward.1} parent=1 // pred_region
      %s22 = ssub.s32 64, 64
      %23 = vsyncadd [#allocation4], %s22
      %s25 = sshll.u32 %s3, 4
      %s26 = int_to_ptr.vmem [resolvable:$true] %s25
      %28 = dma.vmem_to_smem %s26, 64, [#allocation2], [#allocation4]
    $region17: #{stock_conv_mixer_forward.1} parent=1 // pred_fallthru
      _
    // Predicated region
    $region18: #{stock_conv_mixer_forward.1} parent=1 // pred_check
      _
    $region19: #{stock_conv_mixer_forward.1} parent=1 // pred_check_branch
      %30 = sbr.rel (0) target = $region21
    $region20: #{stock_conv_mixer_forward.1} parent=1 // pred_region
      %s32 = ssub.s32 16, 16
      %33 = vsyncadd [#allocation6], %s32
      %s35 = sshll.u32 %s4, 4
      %s36 = int_to_ptr.vmem [resolvable:$true] %s35
      %38 = dma.vmem_to_smem %s36, 16, [#allocation5], [#allocation6]
    $region21: #{stock_conv_mixer_forward.1} parent=1 // pred_fallthru
      _
    // Predicated region
    $region22: #{stock_conv_mixer_forward.1} parent=1 // pred_check
      _
    $region23: #{stock_conv_mixer_forward.1} parent=1 // pred_check_branch
      %40 = sbr.rel (0) target = $region25
    $region24: #{stock_conv_mixer_forward.1} parent=1 // pred_region
      %41 = dma.done [#allocation4], 64
    $region25: #{stock_conv_mixer_forward.1} parent=1 // pred_fallthru
      _
    // Predicated region
    $region26: #{stock_conv_mixer_forward.1} parent=1 // pred_check
      _
    $region27: #{stock_conv_mixer_forward.1} parent=1 // pred_check_branch
      %43 = sbr.rel (0) target = $region29
    $region28: #{stock_conv_mixer_forward.1} parent=1 // pred_region
      %44 = dma.done [#allocation6], 16
    $region29: #{stock_conv_mixer_forward.1} parent=1 // pred_fallthru
      _
    %45 = sfence
    %v46 = vlaneseq
    %v47 = vshrl.u32 %v46, 7
    %v48 = vadd.s32 %v47, 8
    %vm49 = vcmp.ge.s32.totalorder %v47, 2
    %vm50 = vcmp.ge.s32.totalorder %v48, 2
    %vm51 = vcmp.lt.s32.totalorder %v47, 10
    %vm52 = vcmp.lt.s32.totalorder %v48, 10
    %vm53 = vmand %vm49, %vm51
    %vm54 = vmand %vm50, %vm52
    %v55 = vld [vmem:[%s0] sm:$0xff]
    %v56 = vld [vmem:[%s0 + $0x8] sm:$0xff]
    %v57 = vld [vmem:[%s0 + $0x10] sm:$0x3f]
    %v58 = vld [vmem:[%s0 + $0x18] sm:$0x3f]
    %s59 = sld [smem:[#allocation2]]
    %v60 = vstv %s59
    %v61 = vmul.f32 %v60, %v55
    %v62 = vmul.f32 %v60, %v56
    %v63 = vmul.f32 %v60, %v57
    %v64 = vmul.f32 %v60, %v58
    %s65 = sld [smem:[#allocation2 + $0x1]]
    %v66 = vstv %s65
    %v67 = vmul.f32 %v66, %v55
    %v68 = vmul.f32 %v66, %v56
    %v69 = vmul.f32 %v66, %v57
    %v70 = vmul.f32 %v66, %v58
    %vm75 = vcmask 1046528
    %v76 = vrot.slane %v67, 1
    %v77 = vrot.slane %v69, 1
    %v78 = vsel %vm75, %v76, %v77
    %v79 = vrot.slane %v68, 1
    %v80 = vrot.slane %v70, 1
    %v81 = vsel %vm75, %v79, %v80
    %v86 = vadd.f32 %v61, %v78
    %v87 = vadd.f32 %v62, %v81
    %v88 = vadd.f32 %v63, %v77
    %v89 = vadd.f32 %v64, %v80
    %s90 = sld [smem:[#allocation2 + $0x2]]
    %v91 = vstv %s90
    %v92 = vmul.f32 %v91, %v55
    %v93 = vmul.f32 %v91, %v56
    %v94 = vmul.f32 %v91, %v57
    %v95 = vmul.f32 %v91, %v58
    %vm100 = vcmask 1045504
    %v101 = vrot.slane %v92, 2
    %v102 = vrot.slane %v94, 2
    %v103 = vsel %vm100, %v101, %v102
    %v104 = vrot.slane %v93, 2
    %v105 = vrot.slane %v95, 2
    %v106 = vsel %vm100, %v104, %v105
    %v111 = vadd.f32 %v86, %v103
    %v112 = vadd.f32 %v87, %v106
    %v113 = vadd.f32 %v88, %v102
    %v114 = vadd.f32 %v89, %v105
    %s115 = sld [smem:[#allocation2 + $0x3]]
    %v116 = vstv %s115
    %v117 = vadd.f32 %v111, %v116
    %v118 = vadd.f32 %v112, %v116
    %v119 = vadd.f32 %v113, %v116
    %v120 = vadd.f32 %v114, %v116
    %v121 = vmul.f32 %v117, 0.70710677
    %v122 = vmul.f32 %v118, 0.70710677
    %v123 = vmul.f32 %v119, 0.70710677
    %v124 = vmul.f32 %v120, 0.70710677
    %v125 = vand.u32 2147483647, %v121
    %v126 = vand.u32 2147483647, %v122
    %v127 = vand.u32 2147483647, %v123
    %v128 = vand.u32 2147483647, %v124
    %v129 = vmul.f32 %v125, 0.3275911
    %v130 = vmul.f32 %v126, 0.3275911
    %v131 = vmul.f32 %v127, 0.3275911
    %v132 = vmul.f32 %v128, 0.3275911
    %v133 = vadd.f32 %v129, 1.0
    %v134 = vadd.f32 %v130, 1.0
    %v135 = vadd.f32 %v131, 1.0
    %v136 = vadd.f32 %v132, 1.0
    %v137 = vrcp.pop %v133
    %v138 = vmul.f32 1.0, %v137
    %v139 = vrcp.pop %v134
    %v140 = vmul.f32 1.0, %v139
    %v141 = vrcp.pop %v135
    %v142 = vmul.f32 1.0, %v141
    %v143 = vrcp.pop %v136
    %v144 = vmul.f32 1.0, %v143
    %v145 = vmul.f32 %v138, 1.0614054
    %v146 = vmul.f32 %v140, 1.0614054
    %v147 = vmul.f32 %v142, 1.0614054
    %v148 = vmul.f32 %v144, 1.0614054
    %v149 = vsub.f32 %v145, 1.4531521
    %v150 = vsub.f32 %v146, 1.4531521
    %v151 = vsub.f32 %v147, 1.4531521
    %v152 = vsub.f32 %v148, 1.4531521
    %v153 = vmul.f32 %v149, %v138
    %v154 = vmul.f32 %v150, %v140
    %v155 = vmul.f32 %v151, %v142
    %v156 = vmul.f32 %v152, %v144
    %v157 = vadd.f32 %v153, 1.4214138
    %v158 = vadd.f32 %v154, 1.4214138
    %v159 = vadd.f32 %v155, 1.4214138
    %v160 = vadd.f32 %v156, 1.4214138
    %v161 = vmul.f32 %v157, %v138
    %v162 = vmul.f32 %v158, %v140
    %v163 = vmul.f32 %v159, %v142
    %v164 = vmul.f32 %v160, %v144
    %v165 = vsub.f32 %v161, 0.28449672
    %v166 = vsub.f32 %v162, 0.28449672
    %v167 = vsub.f32 %v163, 0.28449672
    %v168 = vsub.f32 %v164, 0.28449672
    %v169 = vmul.f32 %v165, %v138
    %v170 = vmul.f32 %v166, %v140
    %v171 = vmul.f32 %v167, %v142
    %v172 = vmul.f32 %v168, %v144
    %v173 = vadd.f32 %v169, 0.2548296
    %v174 = vadd.f32 %v170, 0.2548296
    %v175 = vadd.f32 %v171, 0.2548296
    %v176 = vadd.f32 %v172, 0.2548296
    %v177 = vmul.f32 %v173, %v138
    %v178 = vmul.f32 %v174, %v140
    %v179 = vmul.f32 %v175, %v142
    %v180 = vmul.f32 %v176, %v144
    %v181 = vsub.f32 0.0, %v125
    %v182 = vsub.f32 0.0, %v126
    %v183 = vsub.f32 0.0, %v127
    %v184 = vsub.f32 0.0, %v128
    %v185 = vmul.f32 %v181, %v125
    %v186 = vmul.f32 %v182, %v126
    %v187 = vmul.f32 %v183, %v127
    %v188 = vmul.f32 %v184, %v128
    %v189 = vmul.f32 %v185, 1.442695
    %v190 = vpow.pop %v189
    %v191 = vmul.f32 %v186, 1.442695
    %v192 = vpow.pop %v191
    %v193 = vmul.f32 %v187, 1.442695
    %v194 = vpow.pop %v193
    %v195 = vmul.f32 %v188, 1.442695
    %v196 = vpow.pop %v195
    %v197 = vmul.f32 %v177, %v190
    %v198 = vmul.f32 %v178, %v192
    %v199 = vmul.f32 %v179, %v194
    %v200 = vmul.f32 %v180, %v196
    %v201 = vsub.f32 1.0, %v197
    %v202 = vsub.f32 1.0, %v198
    %v203 = vsub.f32 1.0, %v199
    %v204 = vsub.f32 1.0, %v200
    %vm205 = vcmp.lt.f32.partialorder %v121, 0.0
    %vm206 = vcmp.lt.f32.partialorder %v122, 0.0
    %vm207 = vcmp.lt.f32.partialorder %v123, 0.0
    %vm208 = vcmp.lt.f32.partialorder %v124, 0.0
    %v209 = vsub.f32 0.0, %v201
    %v210 = vsub.f32 0.0, %v202
    %v211 = vsub.f32 0.0, %v203
    %v212 = vsub.f32 0.0, %v204
    %v213 = vsel %vm205, %v209, %v201
    %v214 = vsel %vm206, %v210, %v202
    %v215 = vsel %vm207, %v211, %v203
    %v216 = vsel %vm208, %v212, %v204
    %v217 = vmul.f32 %v117, 0.5
    %v218 = vmul.f32 %v118, 0.5
    %v219 = vmul.f32 %v119, 0.5
    %v220 = vmul.f32 %v120, 0.5
    %v221 = vadd.f32 %v213, 1.0
    %v222 = vadd.f32 %v214, 1.0
    %v223 = vadd.f32 %v215, 1.0
    %v224 = vadd.f32 %v216, 1.0
    %v225 = vmul.f32 %v217, %v221
    %v226 = vmul.f32 %v218, %v222
    %v227 = vmul.f32 %v219, %v223
    %v228 = vmul.f32 %v220, %v224
    %v229 = vsel %vm53, %v225, 0.0
    %v230 = vsel %vm53, %v226, 0.0
    %v231 = vsel %vm54, %v227, 0.0
    %v232 = vsel %vm54, %v228, 0.0
    %s233 = scalar_lea.vmem %s0, 32
    %v234 = vld [vmem:[%s233] sm:$0xff]
    %v235 = vld [vmem:[%s233 + $0x8] sm:$0xff]
    %v236 = vld [vmem:[%s233 + $0x10] sm:$0x3f]
    %v237 = vld [vmem:[%s233 + $0x18] sm:$0x3f]
    %s238 = sld [smem:[#allocation2 + $0x80]]
    %v239 = vstv %s238
    %v240 = vmul.f32 %v239, %v234
    %v241 = vmul.f32 %v239, %v235
    %v242 = vmul.f32 %v239, %v236
    %v243 = vmul.f32 %v239, %v237
    %s244 = sld [smem:[#allocation2 + $0x81]]
    %v245 = vstv %s244
    %v246 = vmul.f32 %v245, %v234
    %v247 = vmul.f32 %v245, %v235
    %v248 = vmul.f32 %v245, %v236
    %v249 = vmul.f32 %v245, %v237
    %v254 = vrot.slane %v246, 1
    %v255 = vrot.slane %v248, 1
    %v256 = vsel %vm75, %v254, %v255
    %v257 = vrot.slane %v247, 1
    %v258 = vrot.slane %v249, 1
    %v259 = vsel %vm75, %v257, %v258
    %v264 = vadd.f32 %v240, %v256
    %v265 = vadd.f32 %v241, %v259
    %v266 = vadd.f32 %v242, %v255
    %v267 = vadd.f32 %v243, %v258
    %s268 = sld [smem:[#allocation2 + $0x82]]
    %v269 = vstv %s268
    %v270 = vmul.f32 %v269, %v234
    %v271 = vmul.f32 %v269, %v235
    %v272 = vmul.f32 %v269, %v236
    %v273 = vmul.f32 %v269, %v237
    %v278 = vrot.slane %v270, 2
    %v279 = vrot.slane %v272, 2
    %v280 = vsel %vm100, %v278, %v279
    %v281 = vrot.slane %v271, 2
    %v282 = vrot.slane %v273, 2
    %v283 = vsel %vm100, %v281, %v282
    %v288 = vadd.f32 %v264, %v280
    %v289 = vadd.f32 %v265, %v283
    %v290 = vadd.f32 %v266, %v279
    %v291 = vadd.f32 %v267, %v282
    %s292 = sld [smem:[#allocation2 + $0x83]]
    %v293 = vstv %s292
    %v294 = vadd.f32 %v288, %v293
    %v295 = vadd.f32 %v289, %v293
    %v296 = vadd.f32 %v290, %v293
    %v297 = vadd.f32 %v291, %v293
    %v298 = vmul.f32 %v294, 0.70710677
    %v299 = vmul.f32 %v295, 0.70710677
    %v300 = vmul.f32 %v296, 0.70710677
    %v301 = vmul.f32 %v297, 0.70710677
    %v302 = vand.u32 2147483647, %v298
    %v303 = vand.u32 2147483647, %v299
    %v304 = vand.u32 2147483647, %v300
    %v305 = vand.u32 2147483647, %v301
    %v306 = vmul.f32 %v302, 0.3275911
    %v307 = vmul.f32 %v303, 0.3275911
    %v308 = vmul.f32 %v304, 0.3275911
    %v309 = vmul.f32 %v305, 0.3275911
    %v310 = vadd.f32 %v306, 1.0
    %v311 = vadd.f32 %v307, 1.0
    %v312 = vadd.f32 %v308, 1.0
    %v313 = vadd.f32 %v309, 1.0
    %v314 = vrcp.pop %v310
    %v315 = vmul.f32 1.0, %v314
    %v316 = vrcp.pop %v311
    %v317 = vmul.f32 1.0, %v316
    %v318 = vrcp.pop %v312
    %v319 = vmul.f32 1.0, %v318
    %v320 = vrcp.pop %v313
    %v321 = vmul.f32 1.0, %v320
    %v322 = vmul.f32 %v315, 1.0614054
    %v323 = vmul.f32 %v317, 1.0614054
    %v324 = vmul.f32 %v319, 1.0614054
    %v325 = vmul.f32 %v321, 1.0614054
    %v326 = vsub.f32 %v322, 1.4531521
    %v327 = vsub.f32 %v323, 1.4531521
    %v328 = vsub.f32 %v324, 1.4531521
    %v329 = vsub.f32 %v325, 1.4531521
    %v330 = vmul.f32 %v326, %v315
    %v331 = vmul.f32 %v327, %v317
    %v332 = vmul.f32 %v328, %v319
    %v333 = vmul.f32 %v329, %v321
    %v334 = vadd.f32 %v330, 1.4214138
    %v335 = vadd.f32 %v331, 1.4214138
    %v336 = vadd.f32 %v332, 1.4214138
    %v337 = vadd.f32 %v333, 1.4214138
    %v338 = vmul.f32 %v334, %v315
    %v339 = vmul.f32 %v335, %v317
    %v340 = vmul.f32 %v336, %v319
    %v341 = vmul.f32 %v337, %v321
    %v342 = vsub.f32 %v338, 0.28449672
    %v343 = vsub.f32 %v339, 0.28449672
    %v344 = vsub.f32 %v340, 0.28449672
    %v345 = vsub.f32 %v341, 0.28449672
    %v346 = vmul.f32 %v342, %v315
    %v347 = vmul.f32 %v343, %v317
    %v348 = vmul.f32 %v344, %v319
    %v349 = vmul.f32 %v345, %v321
    %v350 = vadd.f32 %v346, 0.2548296
    %v351 = vadd.f32 %v347, 0.2548296
    %v352 = vadd.f32 %v348, 0.2548296
    %v353 = vadd.f32 %v349, 0.2548296
    %v354 = vmul.f32 %v350, %v315
    %v355 = vmul.f32 %v351, %v317
    %v356 = vmul.f32 %v352, %v319
    %v357 = vmul.f32 %v353, %v321
    %v358 = vsub.f32 0.0, %v302
    %v359 = vsub.f32 0.0, %v303
    %v360 = vsub.f32 0.0, %v304
    %v361 = vsub.f32 0.0, %v305
    %v362 = vmul.f32 %v358, %v302
    %v363 = vmul.f32 %v359, %v303
    %v364 = vmul.f32 %v360, %v304
    %v365 = vmul.f32 %v361, %v305
    %v366 = vmul.f32 %v362, 1.442695
    %v367 = vpow.pop %v366
    %v368 = vmul.f32 %v363, 1.442695
    %v369 = vpow.pop %v368
    %v370 = vmul.f32 %v364, 1.442695
    %v371 = vpow.pop %v370
    %v372 = vmul.f32 %v365, 1.442695
    %v373 = vpow.pop %v372
    %v374 = vmul.f32 %v354, %v367
    %v375 = vmul.f32 %v355, %v369
    %v376 = vmul.f32 %v356, %v371
    %v377 = vmul.f32 %v357, %v373
    %v378 = vsub.f32 1.0, %v374
    %v379 = vsub.f32 1.0, %v375
    %v380 = vsub.f32 1.0, %v376
    %v381 = vsub.f32 1.0, %v377
    %vm382 = vcmp.lt.f32.partialorder %v298, 0.0
    %vm383 = vcmp.lt.f32.partialorder %v299, 0.0
    %vm384 = vcmp.lt.f32.partialorder %v300, 0.0
    %vm385 = vcmp.lt.f32.partialorder %v301, 0.0
    %v386 = vsub.f32 0.0, %v378
    %v387 = vsub.f32 0.0, %v379
    %v388 = vsub.f32 0.0, %v380
    %v389 = vsub.f32 0.0, %v381
    %v390 = vsel %vm382, %v386, %v378
    %v391 = vsel %vm383, %v387, %v379
    %v392 = vsel %vm384, %v388, %v380
    %v393 = vsel %vm385, %v389, %v381
    %v394 = vmul.f32 %v294, 0.5
    %v395 = vmul.f32 %v295, 0.5
    %v396 = vmul.f32 %v296, 0.5
    %v397 = vmul.f32 %v297, 0.5
    %v398 = vadd.f32 %v390, 1.0
    %v399 = vadd.f32 %v391, 1.0
    %v400 = vadd.f32 %v392, 1.0
    %v401 = vadd.f32 %v393, 1.0
    %v402 = vmul.f32 %v394, %v398
    %v403 = vmul.f32 %v395, %v399
    %v404 = vmul.f32 %v396, %v400
    %v405 = vmul.f32 %v397, %v401
    %v406 = vsel %vm53, %v402, 0.0
    %v407 = vsel %vm53, %v403, 0.0
    %v408 = vsel %vm54, %v404, 0.0
    %v409 = vsel %vm54, %v405, 0.0
    %s410 = scalar_lea.vmem %s0, 64
    %v411 = vld [vmem:[%s410] sm:$0xff]
    %v412 = vld [vmem:[%s410 + $0x8] sm:$0xff]
    %v413 = vld [vmem:[%s410 + $0x10] sm:$0x3f]
    %v414 = vld [vmem:[%s410 + $0x18] sm:$0x3f]
    %s415 = sld [smem:[#allocation2 + $0x100]]
    %v416 = vstv %s415
    %v417 = vmul.f32 %v416, %v411
    %v418 = vmul.f32 %v416, %v412
    %v419 = vmul.f32 %v416, %v413
    %v420 = vmul.f32 %v416, %v414
    %s421 = sld [smem:[#allocation2 + $0x101]]
    %v422 = vstv %s421
    %v423 = vmul.f32 %v422, %v411
    %v424 = vmul.f32 %v422, %v412
    %v425 = vmul.f32 %v422, %v413
    %v426 = vmul.f32 %v422, %v414
    %v431 = vrot.slane %v423, 1
    %v432 = vrot.slane %v425, 1
    %v433 = vsel %vm75, %v431, %v432
    %v434 = vrot.slane %v424, 1
    %v435 = vrot.slane %v426, 1
    %v436 = vsel %vm75, %v434, %v435
    %v441 = vadd.f32 %v417, %v433
    %v442 = vadd.f32 %v418, %v436
    %v443 = vadd.f32 %v419, %v432
    %v444 = vadd.f32 %v420, %v435
    %s445 = sld [smem:[#allocation2 + $0x102]]
    %v446 = vstv %s445
    %v447 = vmul.f32 %v446, %v411
    %v448 = vmul.f32 %v446, %v412
    %v449 = vmul.f32 %v446, %v413
    %v450 = vmul.f32 %v446, %v414
    %v455 = vrot.slane %v447, 2
    %v456 = vrot.slane %v449, 2
    %v457 = vsel %vm100, %v455, %v456
    %v458 = vrot.slane %v448, 2
    %v459 = vrot.slane %v450, 2
    %v460 = vsel %vm100, %v458, %v459
    %v465 = vadd.f32 %v441, %v457
    %v466 = vadd.f32 %v442, %v460
    %v467 = vadd.f32 %v443, %v456
    %v468 = vadd.f32 %v444, %v459
    %s469 = sld [smem:[#allocation2 + $0x103]]
    %v470 = vstv %s469
    %v471 = vadd.f32 %v465, %v470
    %v472 = vadd.f32 %v466, %v470
    %v473 = vadd.f32 %v467, %v470
    %v474 = vadd.f32 %v468, %v470
    %v475 = vmul.f32 %v471, 0.70710677
    %v476 = vmul.f32 %v472, 0.70710677
    %v477 = vmul.f32 %v473, 0.70710677
    %v478 = vmul.f32 %v474, 0.70710677
    %v479 = vand.u32 2147483647, %v475
    %v480 = vand.u32 2147483647, %v476
    %v481 = vand.u32 2147483647, %v477
    %v482 = vand.u32 2147483647, %v478
    %v483 = vmul.f32 %v479, 0.3275911
    %v484 = vmul.f32 %v480, 0.3275911
    %v485 = vmul.f32 %v481, 0.3275911
    %v486 = vmul.f32 %v482, 0.3275911
    %v487 = vadd.f32 %v483, 1.0
    %v488 = vadd.f32 %v484, 1.0
    %v489 = vadd.f32 %v485, 1.0
    %v490 = vadd.f32 %v486, 1.0
    %v491 = vrcp.pop %v487
    %v492 = vmul.f32 1.0, %v491
    %v493 = vrcp.pop %v488
    %v494 = vmul.f32 1.0, %v493
    %v495 = vrcp.pop %v489
    %v496 = vmul.f32 1.0, %v495
    %v497 = vrcp.pop %v490
    %v498 = vmul.f32 1.0, %v497
    %v499 = vmul.f32 %v492, 1.0614054
    %v500 = vmul.f32 %v494, 1.0614054
    %v501 = vmul.f32 %v496, 1.0614054
    %v502 = vmul.f32 %v498, 1.0614054
    %v503 = vsub.f32 %v499, 1.4531521
    %v504 = vsub.f32 %v500, 1.4531521
    %v505 = vsub.f32 %v501, 1.4531521
    %v506 = vsub.f32 %v502, 1.4531521
    %v507 = vmul.f32 %v503, %v492
    %v508 = vmul.f32 %v504, %v494
    %v509 = vmul.f32 %v505, %v496
    %v510 = vmul.f32 %v506, %v498
    %v511 = vadd.f32 %v507, 1.4214138
    %v512 = vadd.f32 %v508, 1.4214138
    %v513 = vadd.f32 %v509, 1.4214138
    %v514 = vadd.f32 %v510, 1.4214138
    %v515 = vmul.f32 %v511, %v492
    %v516 = vmul.f32 %v512, %v494
    %v517 = vmul.f32 %v513, %v496
    %v518 = vmul.f32 %v514, %v498
    %v519 = vsub.f32 %v515, 0.28449672
    %v520 = vsub.f32 %v516, 0.28449672
    %v521 = vsub.f32 %v517, 0.28449672
    %v522 = vsub.f32 %v518, 0.28449672
    %v523 = vmul.f32 %v519, %v492
    %v524 = vmul.f32 %v520, %v494
    %v525 = vmul.f32 %v521, %v496
    %v526 = vmul.f32 %v522, %v498
    %v527 = vadd.f32 %v523, 0.2548296
    %v528 = vadd.f32 %v524, 0.2548296
    %v529 = vadd.f32 %v525, 0.2548296
    %v530 = vadd.f32 %v526, 0.2548296
    %v531 = vmul.f32 %v527, %v492
    %v532 = vmul.f32 %v528, %v494
    %v533 = vmul.f32 %v529, %v496
    %v534 = vmul.f32 %v530, %v498
    %v535 = vsub.f32 0.0, %v479
    %v536 = vsub.f32 0.0, %v480
    %v537 = vsub.f32 0.0, %v481
    %v538 = vsub.f32 0.0, %v482
    %v539 = vmul.f32 %v535, %v479
    %v540 = vmul.f32 %v536, %v480
    %v541 = vmul.f32 %v537, %v481
    %v542 = vmul.f32 %v538, %v482
    %v543 = vmul.f32 %v539, 1.442695
    %v544 = vpow.pop %v543
    %v545 = vmul.f32 %v540, 1.442695
    %v546 = vpow.pop %v545
    %v547 = vmul.f32 %v541, 1.442695
    %v548 = vpow.pop %v547
    %v549 = vmul.f32 %v542, 1.442695
    %v550 = vpow.pop %v549
    %v551 = vmul.f32 %v531, %v544
    %v552 = vmul.f32 %v532, %v546
    %v553 = vmul.f32 %v533, %v548
    %v554 = vmul.f32 %v534, %v550
    %v555 = vsub.f32 1.0, %v551
    %v556 = vsub.f32 1.0, %v552
    %v557 = vsub.f32 1.0, %v553
    %v558 = vsub.f32 1.0, %v554
    %vm559 = vcmp.lt.f32.partialorder %v475, 0.0
    %vm560 = vcmp.lt.f32.partialorder %v476, 0.0
    %vm561 = vcmp.lt.f32.partialorder %v477, 0.0
    %vm562 = vcmp.lt.f32.partialorder %v478, 0.0
    %v563 = vsub.f32 0.0, %v555
    %v564 = vsub.f32 0.0, %v556
    %v565 = vsub.f32 0.0, %v557
    %v566 = vsub.f32 0.0, %v558
    %v567 = vsel %vm559, %v563, %v555
    %v568 = vsel %vm560, %v564, %v556
    %v569 = vsel %vm561, %v565, %v557
    %v570 = vsel %vm562, %v566, %v558
    %v571 = vmul.f32 %v471, 0.5
    %v572 = vmul.f32 %v472, 0.5
    %v573 = vmul.f32 %v473, 0.5
    %v574 = vmul.f32 %v474, 0.5
    %v575 = vadd.f32 %v567, 1.0
    %v576 = vadd.f32 %v568, 1.0
    %v577 = vadd.f32 %v569, 1.0
    %v578 = vadd.f32 %v570, 1.0
    %v579 = vmul.f32 %v571, %v575
    %v580 = vmul.f32 %v572, %v576
    %v581 = vmul.f32 %v573, %v577
    %v582 = vmul.f32 %v574, %v578
    %v583 = vsel %vm53, %v579, 0.0
    %v584 = vsel %vm53, %v580, 0.0
    %v585 = vsel %vm54, %v581, 0.0
    %v586 = vsel %vm54, %v582, 0.0
    %s587 = scalar_lea.vmem %s0, 96
    %v588 = vld [vmem:[%s587] sm:$0xff]
    %v589 = vld [vmem:[%s587 + $0x8] sm:$0xff]
    %v590 = vld [vmem:[%s587 + $0x10] sm:$0x3f]
    %v591 = vld [vmem:[%s587 + $0x18] sm:$0x3f]
    %s592 = sld [smem:[#allocation2 + $0x180]]
    %v593 = vstv %s592
    %v594 = vmul.f32 %v593, %v588
    %v595 = vmul.f32 %v593, %v589
    %v596 = vmul.f32 %v593, %v590
    %v597 = vmul.f32 %v593, %v591
    %s598 = sld [smem:[#allocation2 + $0x181]]
    %v599 = vstv %s598
    %v600 = vmul.f32 %v599, %v588
    %v601 = vmul.f32 %v599, %v589
    %v602 = vmul.f32 %v599, %v590
    %v603 = vmul.f32 %v599, %v591
    %v608 = vrot.slane %v600, 1
    %v609 = vrot.slane %v602, 1
    %v610 = vsel %vm75, %v608, %v609
    %v611 = vrot.slane %v601, 1
    %v612 = vrot.slane %v603, 1
    %v613 = vsel %vm75, %v611, %v612
    %v618 = vadd.f32 %v594, %v610
    %v619 = vadd.f32 %v595, %v613
    %v620 = vadd.f32 %v596, %v609
    %v621 = vadd.f32 %v597, %v612
    %s622 = sld [smem:[#allocation2 + $0x182]]
    %v623 = vstv %s622
    %v624 = vmul.f32 %v623, %v588
    %v625 = vmul.f32 %v623, %v589
    %v626 = vmul.f32 %v623, %v590
    %v627 = vmul.f32 %v623, %v591
    %v632 = vrot.slane %v624, 2
    %v633 = vrot.slane %v626, 2
    %v634 = vsel %vm100, %v632, %v633
    %v635 = vrot.slane %v625, 2
    %v636 = vrot.slane %v627, 2
    %v637 = vsel %vm100, %v635, %v636
    %v642 = vadd.f32 %v618, %v634
    %v643 = vadd.f32 %v619, %v637
    %v644 = vadd.f32 %v620, %v633
    %v645 = vadd.f32 %v621, %v636
    %s646 = sld [smem:[#allocation2 + $0x183]]
    %v647 = vstv %s646
    %v648 = vadd.f32 %v642, %v647
    %v649 = vadd.f32 %v643, %v647
    %v650 = vadd.f32 %v644, %v647
    %v651 = vadd.f32 %v645, %v647
    %v652 = vmul.f32 %v648, 0.70710677
    %v653 = vmul.f32 %v649, 0.70710677
    %v654 = vmul.f32 %v650, 0.70710677
    %v655 = vmul.f32 %v651, 0.70710677
    %v656 = vand.u32 2147483647, %v652
    %v657 = vand.u32 2147483647, %v653
    %v658 = vand.u32 2147483647, %v654
    %v659 = vand.u32 2147483647, %v655
    %v660 = vmul.f32 %v656, 0.3275911
    %v661 = vmul.f32 %v657, 0.3275911
    %v662 = vmul.f32 %v658, 0.3275911
    %v663 = vmul.f32 %v659, 0.3275911
    %v664 = vadd.f32 %v660, 1.0
    %v665 = vadd.f32 %v661, 1.0
    %v666 = vadd.f32 %v662, 1.0
    %v667 = vadd.f32 %v663, 1.0
    %v668 = vrcp.pop %v664
    %v669 = vmul.f32 1.0, %v668
    %v670 = vrcp.pop %v665
    %v671 = vmul.f32 1.0, %v670
    %v672 = vrcp.pop %v666
    %v673 = vmul.f32 1.0, %v672
    %v674 = vrcp.pop %v667
    %v675 = vmul.f32 1.0, %v674
    %v676 = vmul.f32 %v669, 1.0614054
    %v677 = vmul.f32 %v671, 1.0614054
    %v678 = vmul.f32 %v673, 1.0614054
    %v679 = vmul.f32 %v675, 1.0614054
    %v680 = vsub.f32 %v676, 1.4531521
    %v681 = vsub.f32 %v677, 1.4531521
    %v682 = vsub.f32 %v678, 1.4531521
    %v683 = vsub.f32 %v679, 1.4531521
    %v684 = vmul.f32 %v680, %v669
    %v685 = vmul.f32 %v681, %v671
    %v686 = vmul.f32 %v682, %v673
    %v687 = vmul.f32 %v683, %v675
    %v688 = vadd.f32 %v684, 1.4214138
    %v689 = vadd.f32 %v685, 1.4214138
    %v690 = vadd.f32 %v686, 1.4214138
    %v691 = vadd.f32 %v687, 1.4214138
    %v692 = vmul.f32 %v688, %v669
    %v693 = vmul.f32 %v689, %v671
    %v694 = vmul.f32 %v690, %v673
    %v695 = vmul.f32 %v691, %v675
    %v696 = vsub.f32 %v692, 0.28449672
    %v697 = vsub.f32 %v693, 0.28449672
    %v698 = vsub.f32 %v694, 0.28449672
    %v699 = vsub.f32 %v695, 0.28449672
    %v700 = vmul.f32 %v696, %v669
    %v701 = vmul.f32 %v697, %v671
    %v702 = vmul.f32 %v698, %v673
    %v703 = vmul.f32 %v699, %v675
    %v704 = vadd.f32 %v700, 0.2548296
    %v705 = vadd.f32 %v701, 0.2548296
    %v706 = vadd.f32 %v702, 0.2548296
    %v707 = vadd.f32 %v703, 0.2548296
    %v708 = vmul.f32 %v704, %v669
    %v709 = vmul.f32 %v705, %v671
    %v710 = vmul.f32 %v706, %v673
    %v711 = vmul.f32 %v707, %v675
    %v712 = vsub.f32 0.0, %v656
    %v713 = vsub.f32 0.0, %v657
    %v714 = vsub.f32 0.0, %v658
    %v715 = vsub.f32 0.0, %v659
    %v716 = vmul.f32 %v712, %v656
    %v717 = vmul.f32 %v713, %v657
    %v718 = vmul.f32 %v714, %v658
    %v719 = vmul.f32 %v715, %v659
    %v720 = vmul.f32 %v716, 1.442695
    %v721 = vpow.pop %v720
    %v722 = vmul.f32 %v717, 1.442695
    %v723 = vpow.pop %v722
    %v724 = vmul.f32 %v718, 1.442695
    %v725 = vpow.pop %v724
    %v726 = vmul.f32 %v719, 1.442695
    %v727 = vpow.pop %v726
    %v728 = vmul.f32 %v708, %v721
    %v729 = vmul.f32 %v709, %v723
    %v730 = vmul.f32 %v710, %v725
    %v731 = vmul.f32 %v711, %v727
    %v732 = vsub.f32 1.0, %v728
    %v733 = vsub.f32 1.0, %v729
    %v734 = vsub.f32 1.0, %v730
    %v735 = vsub.f32 1.0, %v731
    %vm736 = vcmp.lt.f32.partialorder %v652, 0.0
    %vm737 = vcmp.lt.f32.partialorder %v653, 0.0
    %vm738 = vcmp.lt.f32.partialorder %v654, 0.0
    %vm739 = vcmp.lt.f32.partialorder %v655, 0.0
    %v740 = vsub.f32 0.0, %v732
    %v741 = vsub.f32 0.0, %v733
    %v742 = vsub.f32 0.0, %v734
    %v743 = vsub.f32 0.0, %v735
    %v744 = vsel %vm736, %v740, %v732
    %v745 = vsel %vm737, %v741, %v733
    %v746 = vsel %vm738, %v742, %v734
    %v747 = vsel %vm739, %v743, %v735
    %v748 = vmul.f32 %v648, 0.5
    %v749 = vmul.f32 %v649, 0.5
    %v750 = vmul.f32 %v650, 0.5
    %v751 = vmul.f32 %v651, 0.5
    %v752 = vadd.f32 %v744, 1.0
    %v753 = vadd.f32 %v745, 1.0
    %v754 = vadd.f32 %v746, 1.0
    %v755 = vadd.f32 %v747, 1.0
    %v756 = vmul.f32 %v748, %v752
    %v757 = vmul.f32 %v749, %v753
    %v758 = vmul.f32 %v750, %v754
    %v759 = vmul.f32 %v751, %v755
    %v760 = vsel %vm53, %v756, 0.0
    %v761 = vsel %vm53, %v757, 0.0
    %v762 = vsel %vm54, %v758, 0.0
    %v763 = vsel %vm54, %v759, 0.0
    %v764 = vadd.f32 %v229, %v406
    %v765 = vadd.f32 %v230, %v407
    %v766 = vadd.f32 %v231, %v408
    %v767 = vadd.f32 %v232, %v409
    %v768 = vadd.f32 %v764, %v583
    %v769 = vadd.f32 %v765, %v584
    %v770 = vadd.f32 %v766, %v585
    %v771 = vadd.f32 %v767, %v586
    %v772 = vadd.f32 %v768, %v760
    %v773 = vadd.f32 %v769, %v761
    %v774 = vadd.f32 %v770, %v762
    %v775 = vadd.f32 %v771, %v763
    %v780 = vrot.slane %v772, 2
    %v781 = vrot.slane %v774, 2
    %v782 = vsel %vm100, %v780, %v781
    %v783 = vrot.slane %v773, 2
    %v784 = vrot.slane %v775, 2
    %v785 = vsel %vm100, %v783, %v784
    %v788 = vrot.slane %v782, 4
    %v789 = vadd.f32 %v782, %v788
    %v790 = vrot.slane %v789, 2
    %v791 = vadd.f32 %v789, %v790
    %v792 = vrot.slane %v791, 1
    %v793 = vadd.f32 %v791, %v792
    %vm794 = vcmask 244736
    %v795 = vsel %vm794, %v785, 0.0
    %v796 = vrot.slane %v795, 4
    %v797 = vadd.f32 %v795, %v796
    %v798 = vrot.slane %v797, 2
    %v799 = vadd.f32 %v797, %v798
    %v800 = vrot.slane %v799, 1
    %v801 = vadd.f32 %v799, %v800
    %v802 = vmul.f32 %v793, 0.03125
    %v803 = vmul.f32 %v801, 0.03125
    %v804 = vsub.f32 %v229, %v802
    %v805 = vsub.f32 %v230, %v803
    %v806 = vsub.f32 %v231, %v802
    %v807 = vsub.f32 %v232, %v803
    %v808 = vmul.f32 %v804, %v804
    %v809 = vmul.f32 %v805, %v805
    %v810 = vmul.f32 %v806, %v806
    %v811 = vmul.f32 %v807, %v807
    %v812 = vsub.f32 %v406, %v802
    %v813 = vsub.f32 %v407, %v803
    %v814 = vsub.f32 %v408, %v802
    %v815 = vsub.f32 %v409, %v803
    %v816 = vmul.f32 %v812, %v812
    %v817 = vmul.f32 %v813, %v813
    %v818 = vmul.f32 %v814, %v814
    %v819 = vmul.f32 %v815, %v815
    %v820 = vadd.f32 %v808, %v816
    %v821 = vadd.f32 %v809, %v817
    %v822 = vadd.f32 %v810, %v818
    %v823 = vadd.f32 %v811, %v819
    %v824 = vsub.f32 %v583, %v802
    %v825 = vsub.f32 %v584, %v803
    %v826 = vsub.f32 %v585, %v802
    %v827 = vsub.f32 %v586, %v803
    %v828 = vmul.f32 %v824, %v824
    %v829 = vmul.f32 %v825, %v825
    %v830 = vmul.f32 %v826, %v826
    %v831 = vmul.f32 %v827, %v827
    %v832 = vadd.f32 %v820, %v828
    %v833 = vadd.f32 %v821, %v829
    %v834 = vadd.f32 %v822, %v830
    %v835 = vadd.f32 %v823, %v831
    %v836 = vsub.f32 %v760, %v802
    %v837 = vsub.f32 %v761, %v803
    %v838 = vsub.f32 %v762, %v802
    %v839 = vsub.f32 %v763, %v803
    %v840 = vmul.f32 %v836, %v836
    %v841 = vmul.f32 %v837, %v837
    %v842 = vmul.f32 %v838, %v838
    %v843 = vmul.f32 %v839, %v839
    %v844 = vadd.f32 %v832, %v840
    %v845 = vadd.f32 %v833, %v841
    %v846 = vadd.f32 %v834, %v842
    %v847 = vadd.f32 %v835, %v843
    %v852 = vrot.slane %v844, 2
    %v853 = vrot.slane %v846, 2
    %v854 = vsel %vm100, %v852, %v853
    %v855 = vrot.slane %v845, 2
    %v856 = vrot.slane %v847, 2
    %v857 = vsel %vm100, %v855, %v856
    %v860 = vrot.slane %v854, 4
    %v861 = vadd.f32 %v854, %v860
    %v862 = vrot.slane %v861, 2
    %v863 = vadd.f32 %v861, %v862
    %v864 = vrot.slane %v863, 1
    %v865 = vadd.f32 %v863, %v864
    %v866 = vsel %vm794, %v857, 0.0
    %v867 = vrot.slane %v866, 4
    %v868 = vadd.f32 %v866, %v867
    %v869 = vrot.slane %v868, 2
    %v870 = vadd.f32 %v868, %v869
    %v871 = vrot.slane %v870, 1
    %v872 = vadd.f32 %v870, %v871
    %v873 = vmul.f32 %v865, 0.03125
    %v874 = vmul.f32 %v872, 0.03125
    %v875 = vadd.f32 %v873, 1e-05
    %v876 = vadd.f32 %v874, 1e-05
    %v877 = vrsqrt.pop %v875
    %v878 = vrsqrt.pop %v876
    %v879 = vmul.f32 %v804, %v877
    %v880 = vmul.f32 %v805, %v878
    %v881 = vmul.f32 %v806, %v877
    %v882 = vmul.f32 %v807, %v878
    %v883 = vld [vmem:[%s2] sm:$0xff]
    %885 = vset.pattern.permute.xlu0 0
    %886 = vperm.xlu0 %885, %v883
    %v887 = vpop.permute.xlu0 %886
    %v889 = vrot.slane %v887, 6
    %v891 = vmul.f32 %v879, %v889
    %v892 = vmul.f32 %v880, %v889
    %v893 = vmul.f32 %v881, %v889
    %v894 = vmul.f32 %v882, %v889
    %v895 = vld [vmem:[%s2 + $0x20] sm:$0xff]
    %897 = vset.pattern.permute.xlu0 0
    %898 = vperm.xlu0 %897, %v895
    %v899 = vpop.permute.xlu0 %898
    %v901 = vrot.slane %v899, 6
    %v903 = vadd.f32 %v891, %v901
    %v904 = vadd.f32 %v892, %v901
    %v905 = vadd.f32 %v893, %v901
    %v906 = vadd.f32 %v894, %v901
    %s907 = sld [smem:[#allocation2 + $0x8]]
    %v908 = vstv %s907
    %v909 = vmul.f32 %v903, %v908
    %v910 = vmul.f32 %v904, %v908
    %v911 = vmul.f32 %v905, %v908
    %v912 = vmul.f32 %v906, %v908
    %v913 = vmul.f32 %v812, %v877
    %v914 = vmul.f32 %v813, %v878
    %v915 = vmul.f32 %v814, %v877
    %v916 = vmul.f32 %v815, %v878
    %v917 = vld [vmem:[%s2 + $0x8] sm:$0xff]
    %919 = vset.pattern.permute.xlu0 0
    %920 = vperm.xlu0 %919, %v917
    %v921 = vpop.permute.xlu0 %920
    %v923 = vrot.slane %v921, 6
    %v925 = vmul.f32 %v913, %v923
    %v926 = vmul.f32 %v914, %v923
    %v927 = vmul.f32 %v915, %v923
    %v928 = vmul.f32 %v916, %v923
    %v929 = vld [vmem:[%s2 + $0x28] sm:$0xff]
    %931 = vset.pattern.permute.xlu0 0
    %932 = vperm.xlu0 %931, %v929
    %v933 = vpop.permute.xlu0 %932
    %v935 = vrot.slane %v933, 6
    %v937 = vadd.f32 %v925, %v935
    %v938 = vadd.f32 %v926, %v935
    %v939 = vadd.f32 %v927, %v935
    %v940 = vadd.f32 %v928, %v935
    %s941 = sld [smem:[#allocation2 + $0x88]]
    %v942 = vstv %s941
    %v943 = vmul.f32 %v937, %v942
    %v944 = vmul.f32 %v938, %v942
    %v945 = vmul.f32 %v939, %v942
    %v946 = vmul.f32 %v940, %v942
    %v947 = vadd.f32 %v909, %v943
    %v948 = vadd.f32 %v910, %v944
    %v949 = vadd.f32 %v911, %v945
    %v950 = vadd.f32 %v912, %v946
    %v951 = vmul.f32 %v824, %v877
    %v952 = vmul.f32 %v825, %v878
    %v953 = vmul.f32 %v826, %v877
    %v954 = vmul.f32 %v827, %v878
    %v955 = vld [vmem:[%s2 + $0x10] sm:$0xff]
    %957 = vset.pattern.permute.xlu0 0
    %958 = vperm.xlu0 %957, %v955
    %v959 = vpop.permute.xlu0 %958
    %v961 = vrot.slane %v959, 6
    %v963 = vmul.f32 %v951, %v961
    %v964 = vmul.f32 %v952, %v961
    %v965 = vmul.f32 %v953, %v961
    %v966 = vmul.f32 %v954, %v961
    %v967 = vld [vmem:[%s2 + $0x30] sm:$0xff]
    %969 = vset.pattern.permute.xlu0 0
    %970 = vperm.xlu0 %969, %v967
    %v971 = vpop.permute.xlu0 %970
    %v973 = vrot.slane %v971, 6
    %v975 = vadd.f32 %v963, %v973
    %v976 = vadd.f32 %v964, %v973
    %v977 = vadd.f32 %v965, %v973
    %v978 = vadd.f32 %v966, %v973
    %s979 = sld [smem:[#allocation2 + $0x108]]
    %v980 = vstv %s979
    %v981 = vmul.f32 %v975, %v980
    %v982 = vmul.f32 %v976, %v980
    %v983 = vmul.f32 %v977, %v980
    %v984 = vmul.f32 %v978, %v980
    %v985 = vadd.f32 %v947, %v981
    %v986 = vadd.f32 %v948, %v982
    %v987 = vadd.f32 %v949, %v983
    %v988 = vadd.f32 %v950, %v984
    %v989 = vmul.f32 %v836, %v877
    %v990 = vmul.f32 %v837, %v878
    %v991 = vmul.f32 %v838, %v877
    %v992 = vmul.f32 %v839, %v878
    %v993 = vld [vmem:[%s2 + $0x18] sm:$0xff]
    %995 = vset.pattern.permute.xlu0 0
    %996 = vperm.xlu0 %995, %v993
    %v997 = vpop.permute.xlu0 %996
    %v999 = vrot.slane %v997, 6
    %v1001 = vmul.f32 %v989, %v999
    %v1002 = vmul.f32 %v990, %v999
    %v1003 = vmul.f32 %v991, %v999
    %v1004 = vmul.f32 %v992, %v999
    %v1005 = vld [vmem:[%s2 + $0x38] sm:$0xff]
    %1007 = vset.pattern.permute.xlu0 0
    %1008 = vperm.xlu0 %1007, %v1005
    %v1009 = vpop.permute.xlu0 %1008
    %v1011 = vrot.slane %v1009, 6
    %v1013 = vadd.f32 %v1001, %v1011
    %v1014 = vadd.f32 %v1002, %v1011
    %v1015 = vadd.f32 %v1003, %v1011
    %v1016 = vadd.f32 %v1004, %v1011
    %s1017 = sld [smem:[#allocation2 + $0x188]]
    %v1018 = vstv %s1017
    %v1019 = vmul.f32 %v1013, %v1018
    %v1020 = vmul.f32 %v1014, %v1018
    %v1021 = vmul.f32 %v1015, %v1018
    %v1022 = vmul.f32 %v1016, %v1018
    %v1023 = vadd.f32 %v985, %v1019
    %v1024 = vadd.f32 %v986, %v1020
    %v1025 = vadd.f32 %v987, %v1021
    %v1026 = vadd.f32 %v988, %v1022
    %s1027 = sld [smem:[#allocation5]]
    %v1028 = vstv %s1027
    %v1029 = vadd.f32 %v1023, %v1028
    %v1030 = vadd.f32 %v1024, %v1028
    %v1031 = vadd.f32 %v1025, %v1028
    %v1032 = vadd.f32 %v1026, %v1028
    %s1033 = sld [smem:[#allocation2 + $0x4]]
    %v1034 = vstv %s1033
    %v1035 = vmul.f32 %v1034, %v229
    %v1036 = vmul.f32 %v1034, %v230
    %s1037 = sld [smem:[#allocation2 + $0x5]]
    %v1038 = vstv %s1037
    %v1039 = vmul.f32 %v1038, %v229
    %v1040 = vmul.f32 %v1038, %v230
    %v1041 = vmul.f32 %v1038, %v231
    %v1042 = vmul.f32 %v1038, %v232
    %v1047 = vrot.slane %v1039, 2
    %v1048 = vrot.slane %v1041, 2
    %v1049 = vsel %vm100, %v1047, %v1048
    %v1050 = vrot.slane %v1040, 2
    %v1051 = vrot.slane %v1042, 2
    %v1052 = vsel %vm100, %v1050, %v1051
    %v1055 = vadd.f32 %v1035, %v1049
    %v1056 = vadd.f32 %v1036, %v1052
    %s1057 = sld [smem:[#allocation2 + $0x6]]
    %v1058 = vstv %s1057
    %v1059 = vmul.f32 %v1058, %v229
    %v1060 = vmul.f32 %v1058, %v230
    %v1061 = vmul.f32 %v1058, %v231
    %v1062 = vmul.f32 %v1058, %v232
    %vm1067 = vcmask 1043456
    %v1068 = vrot.slane %v1059, 4
    %v1069 = vrot.slane %v1061, 4
    %v1070 = vsel %vm1067, %v1068, %v1069
    %v1071 = vrot.slane %v1060, 4
    %v1072 = vrot.slane %v1062, 4
    %v1073 = vsel %vm1067, %v1071, %v1072
    %v1076 = vadd.f32 %v1055, %v1070
    %v1077 = vadd.f32 %v1056, %v1073
    %s1078 = sld [smem:[#allocation2 + $0x7]]
    %v1079 = vstv %s1078
    %v1080 = vadd.f32 %v1076, %v1079
    %v1081 = vadd.f32 %v1077, %v1079
    %s1082 = sld [smem:[#allocation2 + $0x84]]
    %v1083 = vstv %s1082
    %v1084 = vmul.f32 %v1083, %v406
    %v1085 = vmul.f32 %v1083, %v407
    %s1086 = sld [smem:[#allocation2 + $0x85]]
    %v1087 = vstv %s1086
    %v1088 = vmul.f32 %v1087, %v406
    %v1089 = vmul.f32 %v1087, %v407
    %v1090 = vmul.f32 %v1087, %v408
    %v1091 = vmul.f32 %v1087, %v409
    %v1096 = vrot.slane %v1088, 2
    %v1097 = vrot.slane %v1090, 2
    %v1098 = vsel %vm100, %v1096, %v1097
    %v1099 = vrot.slane %v1089, 2
    %v1100 = vrot.slane %v1091, 2
    %v1101 = vsel %vm100, %v1099, %v1100
    %v1104 = vadd.f32 %v1084, %v1098
    %v1105 = vadd.f32 %v1085, %v1101
    %s1106 = sld [smem:[#allocation2 + $0x86]]
    %v1107 = vstv %s1106
    %v1108 = vmul.f32 %v1107, %v406
    %v1109 = vmul.f32 %v1107, %v407
    %v1110 = vmul.f32 %v1107, %v408
    %v1111 = vmul.f32 %v1107, %v409
    %v1116 = vrot.slane %v1108, 4
    %v1117 = vrot.slane %v1110, 4
    %v1118 = vsel %vm1067, %v1116, %v1117
    %v1119 = vrot.slane %v1109, 4
    %v1120 = vrot.slane %v1111, 4
    %v1121 = vsel %vm1067, %v1119, %v1120
    %v1124 = vadd.f32 %v1104, %v1118
    %v1125 = vadd.f32 %v1105, %v1121
    %s1126 = sld [smem:[#allocation2 + $0x87]]
    %v1127 = vstv %s1126
    %v1128 = vadd.f32 %v1124, %v1127
    %v1129 = vadd.f32 %v1125, %v1127
    %s1130 = sld [smem:[#allocation2 + $0x104]]
    %v1131 = vstv %s1130
    %v1132 = vmul.f32 %v1131, %v583
    %v1133 = vmul.f32 %v1131, %v584
    %s1134 = sld [smem:[#allocation2 + $0x105]]
    %v1135 = vstv %s1134
    %v1136 = vmul.f32 %v1135, %v583
    %v1137 = vmul.f32 %v1135, %v584
    %v1138 = vmul.f32 %v1135, %v585
    %v1139 = vmul.f32 %v1135, %v586
    %v1144 = vrot.slane %v1136, 2
    %v1145 = vrot.slane %v1138, 2
    %v1146 = vsel %vm100, %v1144, %v1145
    %v1147 = vrot.slane %v1137, 2
    %v1148 = vrot.slane %v1139, 2
    %v1149 = vsel %vm100, %v1147, %v1148
    %v1152 = vadd.f32 %v1132, %v1146
    %v1153 = vadd.f32 %v1133, %v1149
    %s1154 = sld [smem:[#allocation2 + $0x106]]
    %v1155 = vstv %s1154
    %v1156 = vmul.f32 %v1155, %v583
    %v1157 = vmul.f32 %v1155, %v584
    %v1158 = vmul.f32 %v1155, %v585
    %v1159 = vmul.f32 %v1155, %v586
    %v1164 = vrot.slane %v1156, 4
    %v1165 = vrot.slane %v1158, 4
    %v1166 = vsel %vm1067, %v1164, %v1165
    %v1167 = vrot.slane %v1157, 4
    %v1168 = vrot.slane %v1159, 4
    %v1169 = vsel %vm1067, %v1167, %v1168
    %v1172 = vadd.f32 %v1152, %v1166
    %v1173 = vadd.f32 %v1153, %v1169
    %s1174 = sld [smem:[#allocation2 + $0x107]]
    %v1175 = vstv %s1174
    %v1176 = vadd.f32 %v1172, %v1175
    %v1177 = vadd.f32 %v1173, %v1175
    %s1178 = sld [smem:[#allocation2 + $0x184]]
    %v1179 = vstv %s1178
    %v1180 = vmul.f32 %v1179, %v760
    %v1181 = vmul.f32 %v1179, %v761
    %s1182 = sld [smem:[#allocation2 + $0x185]]
    %v1183 = vstv %s1182
    %v1184 = vmul.f32 %v1183, %v760
    %v1185 = vmul.f32 %v1183, %v761
    %v1186 = vmul.f32 %v1183, %v762
    %v1187 = vmul.f32 %v1183, %v763
    %v1192 = vrot.slane %v1184, 2
    %v1193 = vrot.slane %v1186, 2
    %v1194 = vsel %vm100, %v1192, %v1193
    %v1195 = vrot.slane %v1185, 2
    %v1196 = vrot.slane %v1187, 2
    %v1197 = vsel %vm100, %v1195, %v1196
    %v1200 = vadd.f32 %v1180, %v1194
    %v1201 = vadd.f32 %v1181, %v1197
    %s1202 = sld [smem:[#allocation2 + $0x186]]
    %v1203 = vstv %s1202
    %v1204 = vmul.f32 %v1203, %v760
    %v1205 = vmul.f32 %v1203, %v761
    %v1206 = vmul.f32 %v1203, %v762
    %v1207 = vmul.f32 %v1203, %v763
    %v1212 = vrot.slane %v1204, 4
    %v1213 = vrot.slane %v1206, 4
    %v1214 = vsel %vm1067, %v1212, %v1213
    %v1215 = vrot.slane %v1205, 4
    %v1216 = vrot.slane %v1207, 4
    %v1217 = vsel %vm1067, %v1215, %v1216
    %v1220 = vadd.f32 %v1200, %v1214
    %v1221 = vadd.f32 %v1201, %v1217
    %s1222 = sld [smem:[#allocation2 + $0x187]]
    %v1223 = vstv %s1222
    %v1224 = vadd.f32 %v1220, %v1223
    %v1225 = vadd.f32 %v1221, %v1223
    %v1226 = vadd.f32 %v1080, %v1128
    %v1227 = vadd.f32 %v1081, %v1129
    %v1228 = vadd.f32 %v1226, %v1176
    %v1229 = vadd.f32 %v1227, %v1177
    %v1230 = vadd.f32 %v1228, %v1224
    %v1231 = vadd.f32 %v1229, %v1225
    %v1232 = vrot.slane %v1230, 4
    %v1233 = vadd.f32 %v1230, %v1232
    %v1234 = vrot.slane %v1233, 2
    %v1235 = vadd.f32 %v1233, %v1234
    %v1236 = vrot.slane %v1235, 1
    %v1237 = vadd.f32 %v1235, %v1236
    %v1238 = vsel %vm794, %v1231, 0.0
    %v1239 = vrot.slane %v1238, 4
    %v1240 = vadd.f32 %v1238, %v1239
    %v1241 = vrot.slane %v1240, 2
    %v1242 = vadd.f32 %v1240, %v1241
    %v1243 = vrot.slane %v1242, 1
    %v1244 = vadd.f32 %v1242, %v1243
    %v1245 = vmul.f32 %v1237, 0.03125
    %v1246 = vmul.f32 %v1244, 0.03125
    %v1247 = vsub.f32 %v1080, %v1245
    %v1248 = vsub.f32 %v1081, %v1246
    %v1249 = vmul.f32 %v1247, %v1247
    %v1250 = vmul.f32 %v1248, %v1248
    %v1251 = vsub.f32 %v1128, %v1245
    %v1252 = vsub.f32 %v1129, %v1246
    %v1253 = vmul.f32 %v1251, %v1251
    %v1254 = vmul.f32 %v1252, %v1252
    %v1255 = vadd.f32 %v1249, %v1253
    %v1256 = vadd.f32 %v1250, %v1254
    %v1257 = vsub.f32 %v1176, %v1245
    %v1258 = vsub.f32 %v1177, %v1246
    %v1259 = vmul.f32 %v1257, %v1257
    %v1260 = vmul.f32 %v1258, %v1258
    %v1261 = vadd.f32 %v1255, %v1259
    %v1262 = vadd.f32 %v1256, %v1260
    %v1263 = vsub.f32 %v1224, %v1245
    %v1264 = vsub.f32 %v1225, %v1246
    %v1265 = vmul.f32 %v1263, %v1263
    %v1266 = vmul.f32 %v1264, %v1264
    %v1267 = vadd.f32 %v1261, %v1265
    %v1268 = vadd.f32 %v1262, %v1266
    %v1269 = vrot.slane %v1267, 4
    %v1270 = vadd.f32 %v1267, %v1269
    %v1271 = vrot.slane %v1270, 2
    %v1272 = vadd.f32 %v1270, %v1271
    %v1273 = vrot.slane %v1272, 1
    %v1274 = vadd.f32 %v1272, %v1273
    %v1275 = vsel %vm794, %v1268, 0.0
    %v1276 = vrot.slane %v1275, 4
    %v1277 = vadd.f32 %v1275, %v1276
    %v1278 = vrot.slane %v1277, 2
    %v1279 = vadd.f32 %v1277, %v1278
    %v1280 = vrot.slane %v1279, 1
    %v1281 = vadd.f32 %v1279, %v1280
    %v1282 = vmul.f32 %v1274, 0.03125
    %v1283 = vmul.f32 %v1281, 0.03125
    %v1284 = vadd.f32 %v1282, 1e-05
    %v1285 = vadd.f32 %v1283, 1e-05
    %v1286 = vrsqrt.pop %v1284
    %v1287 = vrsqrt.pop %v1285
    %v1288 = vmul.f32 %v1247, %v1286
    %v1289 = vmul.f32 %v1248, %v1287
    %v1290 = vmul.f32 %v1288, %v887
    %v1291 = vmul.f32 %v1289, %v887
    %v1292 = vadd.f32 %v1290, %v899
    %v1293 = vadd.f32 %v1291, %v899
    %v1294 = vmul.f32 %v1292, %v908
    %v1295 = vmul.f32 %v1293, %v908
    %v1296 = vmul.f32 %v1251, %v1286
    %v1297 = vmul.f32 %v1252, %v1287
    %v1298 = vmul.f32 %v1296, %v921
    %v1299 = vmul.f32 %v1297, %v921
    %v1300 = vadd.f32 %v1298, %v933
    %v1301 = vadd.f32 %v1299, %v933
    %v1302 = vmul.f32 %v1300, %v942
    %v1303 = vmul.f32 %v1301, %v942
    %v1304 = vadd.f32 %v1294, %v1302
    %v1305 = vadd.f32 %v1295, %v1303
    %v1306 = vmul.f32 %v1257, %v1286
    %v1307 = vmul.f32 %v1258, %v1287
    %v1308 = vmul.f32 %v1306, %v959
    %v1309 = vmul.f32 %v1307, %v959
    %v1310 = vadd.f32 %v1308, %v971
    %v1311 = vadd.f32 %v1309, %v971
    %v1312 = vmul.f32 %v1310, %v980
    %v1313 = vmul.f32 %v1311, %v980
    %v1314 = vadd.f32 %v1304, %v1312
    %v1315 = vadd.f32 %v1305, %v1313
    %v1316 = vmul.f32 %v1263, %v1286
    %v1317 = vmul.f32 %v1264, %v1287
    %v1318 = vmul.f32 %v1316, %v997
    %v1319 = vmul.f32 %v1317, %v997
    %v1320 = vadd.f32 %v1318, %v1009
    %v1321 = vadd.f32 %v1319, %v1009
    %v1322 = vmul.f32 %v1320, %v1018
    %v1323 = vmul.f32 %v1321, %v1018
    %v1324 = vadd.f32 %v1314, %v1322
    %v1325 = vadd.f32 %v1315, %v1323
    %v1326 = vadd.f32 %v1324, %v1028
    %v1327 = vadd.f32 %v1325, %v1028
    %v1328 = vld [vmem:[%s0] sm:$0xfe]
    %v1329 = vld [vmem:[%s0 + $0x8] sm:$0xfe]
    %v1330 = vld [vmem:[%s0 + $0x10] sm:$0x1]
    %v1331 = vld [vmem:[%s0 + $0x18] sm:$0x1]
    %v1332 = vmul.f32 %v1034, %v1328
    %v1333 = vmul.f32 %v1034, %v1329
    %v1334 = vmul.f32 %v1034, %v1330
    %v1335 = vmul.f32 %v1034, %v1331
    %v1336 = vld [vmem:[%s0] sm:$0xf8]
    %v1337 = vld [vmem:[%s0 + $0x8] sm:$0xf8]
    %v1338 = vld [vmem:[%s0 + $0x10] sm:$0x7]
    %v1339 = vld [vmem:[%s0 + $0x18] sm:$0x7]
    %v1340 = vmul.f32 %v1038, %v1336
    %v1341 = vmul.f32 %v1038, %v1337
    %v1342 = vmul.f32 %v1038, %v1338
    %v1343 = vmul.f32 %v1038, %v1339
    %v1348 = vrot.slane %v1340, 2
    %v1349 = vrot.slane %v1342, 2
    %v1350 = vsel %vm100, %v1348, %v1349
    %v1351 = vrot.slane %v1341, 2
    %v1352 = vrot.slane %v1343, 2
    %v1353 = vsel %vm100, %v1351, %v1352
    %v1358 = vadd.f32 %v1332, %v1350
    %v1359 = vadd.f32 %v1333, %v1353
    %v1360 = vadd.f32 %v1334, %v1349
    %v1361 = vadd.f32 %v1335, %v1352
    %v1362 = vld [vmem:[%s0] sm:$0xe0]
    %v1363 = vld [vmem:[%s0 + $0x8] sm:$0xe0]
    %v1364 = vld [vmem:[%s0 + $0x10] sm:$0x1f]
    %v1365 = vld [vmem:[%s0 + $0x18] sm:$0x1f]
    %v1366 = vmul.f32 %v1058, %v1362
    %v1367 = vmul.f32 %v1058, %v1363
    %v1368 = vmul.f32 %v1058, %v1364
    %v1369 = vmul.f32 %v1058, %v1365
    %v1374 = vrot.slane %v1366, 4
    %v1375 = vrot.slane %v1368, 4
    %v1376 = vsel %vm1067, %v1374, %v1375
    %v1377 = vrot.slane %v1367, 4
    %v1378 = vrot.slane %v1369, 4
    %v1379 = vsel %vm1067, %v1377, %v1378
    %v1384 = vadd.f32 %v1358, %v1376
    %v1385 = vadd.f32 %v1359, %v1379
    %v1386 = vadd.f32 %v1360, %v1375
    %v1387 = vadd.f32 %v1361, %v1378
    %v1388 = vadd.f32 %v1384, %v1079
    %v1389 = vadd.f32 %v1385, %v1079
    %v1390 = vadd.f32 %v1386, %v1079
    %v1391 = vadd.f32 %v1387, %v1079
    %v1392 = vld [vmem:[%s233] sm:$0xfe]
    %v1393 = vld [vmem:[%s233 + $0x8] sm:$0xfe]
    %v1394 = vld [vmem:[%s233 + $0x10] sm:$0x1]
    %v1395 = vld [vmem:[%s233 + $0x18] sm:$0x1]
    %v1396 = vmul.f32 %v1083, %v1392
    %v1397 = vmul.f32 %v1083, %v1393
    %v1398 = vmul.f32 %v1083, %v1394
    %v1399 = vmul.f32 %v1083, %v1395
    %v1400 = vld [vmem:[%s233] sm:$0xf8]
    %v1401 = vld [vmem:[%s233 + $0x8] sm:$0xf8]
    %v1402 = vld [vmem:[%s233 + $0x10] sm:$0x7]
    %v1403 = vld [vmem:[%s233 + $0x18] sm:$0x7]
    %v1404 = vmul.f32 %v1087, %v1400
    %v1405 = vmul.f32 %v1087, %v1401
    %v1406 = vmul.f32 %v1087, %v1402
    %v1407 = vmul.f32 %v1087, %v1403
    %v1412 = vrot.slane %v1404, 2
    %v1413 = vrot.slane %v1406, 2
    %v1414 = vsel %vm100, %v1412, %v1413
    %v1415 = vrot.slane %v1405, 2
    %v1416 = vrot.slane %v1407, 2
    %v1417 = vsel %vm100, %v1415, %v1416
    %v1422 = vadd.f32 %v1396, %v1414
    %v1423 = vadd.f32 %v1397, %v1417
    %v1424 = vadd.f32 %v1398, %v1413
    %v1425 = vadd.f32 %v1399, %v1416
    %v1426 = vld [vmem:[%s233] sm:$0xe0]
    %v1427 = vld [vmem:[%s233 + $0x8] sm:$0xe0]
    %v1428 = vld [vmem:[%s233 + $0x10] sm:$0x1f]
    %v1429 = vld [vmem:[%s233 + $0x18] sm:$0x1f]
    %v1430 = vmul.f32 %v1107, %v1426
    %v1431 = vmul.f32 %v1107, %v1427
    %v1432 = vmul.f32 %v1107, %v1428
    %v1433 = vmul.f32 %v1107, %v1429
    %v1438 = vrot.slane %v1430, 4
    %v1439 = vrot.slane %v1432, 4
    %v1440 = vsel %vm1067, %v1438, %v1439
    %v1441 = vrot.slane %v1431, 4
    %v1442 = vrot.slane %v1433, 4
    %v1443 = vsel %vm1067, %v1441, %v1442
    %v1448 = vadd.f32 %v1422, %v1440
    %v1449 = vadd.f32 %v1423, %v1443
    %v1450 = vadd.f32 %v1424, %v1439
    %v1451 = vadd.f32 %v1425, %v1442
    %v1452 = vadd.f32 %v1448, %v1127
    %v1453 = vadd.f32 %v1449, %v1127
    %v1454 = vadd.f32 %v1450, %v1127
    %v1455 = vadd.f32 %v1451, %v1127
    %v1456 = vld [vmem:[%s410] sm:$0xfe]
    %v1457 = vld [vmem:[%s410 + $0x8] sm:$0xfe]
    %v1458 = vld [vmem:[%s410 + $0x10] sm:$0x1]
    %v1459 = vld [vmem:[%s410 + $0x18] sm:$0x1]
    %v1460 = vmul.f32 %v1131, %v1456
    %v1461 = vmul.f32 %v1131, %v1457
    %v1462 = vmul.f32 %v1131, %v1458
    %v1463 = vmul.f32 %v1131, %v1459
    %v1464 = vld [vmem:[%s410] sm:$0xf8]
    %v1465 = vld [vmem:[%s410 + $0x8] sm:$0xf8]
    %v1466 = vld [vmem:[%s410 + $0x10] sm:$0x7]
    %v1467 = vld [vmem:[%s410 + $0x18] sm:$0x7]
    %v1468 = vmul.f32 %v1135, %v1464
    %v1469 = vmul.f32 %v1135, %v1465
    %v1470 = vmul.f32 %v1135, %v1466
    %v1471 = vmul.f32 %v1135, %v1467
    %v1476 = vrot.slane %v1468, 2
    %v1477 = vrot.slane %v1470, 2
    %v1478 = vsel %vm100, %v1476, %v1477
    %v1479 = vrot.slane %v1469, 2
    %v1480 = vrot.slane %v1471, 2
    %v1481 = vsel %vm100, %v1479, %v1480
    %v1486 = vadd.f32 %v1460, %v1478
    %v1487 = vadd.f32 %v1461, %v1481
    %v1488 = vadd.f32 %v1462, %v1477
    %v1489 = vadd.f32 %v1463, %v1480
    %v1490 = vld [vmem:[%s410] sm:$0xe0]
    %v1491 = vld [vmem:[%s410 + $0x8] sm:$0xe0]
    %v1492 = vld [vmem:[%s410 + $0x10] sm:$0x1f]
    %v1493 = vld [vmem:[%s410 + $0x18] sm:$0x1f]
    %v1494 = vmul.f32 %v1155, %v1490
    %v1495 = vmul.f32 %v1155, %v1491
    %v1496 = vmul.f32 %v1155, %v1492
    %v1497 = vmul.f32 %v1155, %v1493
    %v1502 = vrot.slane %v1494, 4
    %v1503 = vrot.slane %v1496, 4
    %v1504 = vsel %vm1067, %v1502, %v1503
    %v1505 = vrot.slane %v1495, 4
    %v1506 = vrot.slane %v1497, 4
    %v1507 = vsel %vm1067, %v1505, %v1506
    %v1512 = vadd.f32 %v1486, %v1504
    %v1513 = vadd.f32 %v1487, %v1507
    %v1514 = vadd.f32 %v1488, %v1503
    %v1515 = vadd.f32 %v1489, %v1506
    %v1516 = vadd.f32 %v1512, %v1175
    %v1517 = vadd.f32 %v1513, %v1175
    %v1518 = vadd.f32 %v1514, %v1175
    %v1519 = vadd.f32 %v1515, %v1175
    %v1520 = vld [vmem:[%s587] sm:$0xfe]
    %v1521 = vld [vmem:[%s587 + $0x8] sm:$0xfe]
    %v1522 = vld [vmem:[%s587 + $0x10] sm:$0x1]
    %v1523 = vld [vmem:[%s587 + $0x18] sm:$0x1]
    %v1524 = vmul.f32 %v1179, %v1520
    %v1525 = vmul.f32 %v1179, %v1521
    %v1526 = vmul.f32 %v1179, %v1522
    %v1527 = vmul.f32 %v1179, %v1523
    %v1528 = vld [vmem:[%s587] sm:$0xf8]
    %v1529 = vld [vmem:[%s587 + $0x8] sm:$0xf8]
    %v1530 = vld [vmem:[%s587 + $0x10] sm:$0x7]
    %v1531 = vld [vmem:[%s587 + $0x18] sm:$0x7]
    %v1532 = vmul.f32 %v1183, %v1528
    %v1533 = vmul.f32 %v1183, %v1529
    %v1534 = vmul.f32 %v1183, %v1530
    %v1535 = vmul.f32 %v1183, %v1531
    %v1540 = vrot.slane %v1532, 2
    %v1541 = vrot.slane %v1534, 2
    %v1542 = vsel %vm100, %v1540, %v1541
    %v1543 = vrot.slane %v1533, 2
    %v1544 = vrot.slane %v1535, 2
    %v1545 = vsel %vm100, %v1543, %v1544
    %v1550 = vadd.f32 %v1524, %v1542
    %v1551 = vadd.f32 %v1525, %v1545
    %v1552 = vadd.f32 %v1526, %v1541
    %v1553 = vadd.f32 %v1527, %v1544
    %v1554 = vld [vmem:[%s587] sm:$0xe0]
    %v1555 = vld [vmem:[%s587 + $0x8] sm:$0xe0]
    %v1556 = vld [vmem:[%s587 + $0x10] sm:$0x1f]
    %v1557 = vld [vmem:[%s587 + $0x18] sm:$0x1f]
    %v1558 = vmul.f32 %v1203, %v1554
    %v1559 = vmul.f32 %v1203, %v1555
    %v1560 = vmul.f32 %v1203, %v1556
    %v1561 = vmul.f32 %v1203, %v1557
    %v1566 = vrot.slane %v1558, 4
    %v1567 = vrot.slane %v1560, 4
    %v1568 = vsel %vm1067, %v1566, %v1567
    %v1569 = vrot.slane %v1559, 4
    %v1570 = vrot.slane %v1561, 4
    %v1571 = vsel %vm1067, %v1569, %v1570
    %v1576 = vadd.f32 %v1550, %v1568
    %v1577 = vadd.f32 %v1551, %v1571
    %v1578 = vadd.f32 %v1552, %v1567
    %v1579 = vadd.f32 %v1553, %v1570
    %v1580 = vadd.f32 %v1576, %v1223
    %v1581 = vadd.f32 %v1577, %v1223
    %v1582 = vadd.f32 %v1578, %v1223
    %v1583 = vadd.f32 %v1579, %v1223
    %v1584 = vadd.f32 %v1388, %v1452
    %v1585 = vadd.f32 %v1389, %v1453
    %v1586 = vadd.f32 %v1390, %v1454
    %v1587 = vadd.f32 %v1391, %v1455
    %v1588 = vadd.f32 %v1584, %v1516
    %v1589 = vadd.f32 %v1585, %v1517
    %v1590 = vadd.f32 %v1586, %v1518
    %v1591 = vadd.f32 %v1587, %v1519
    %v1592 = vadd.f32 %v1588, %v1580
    %v1593 = vadd.f32 %v1589, %v1581
    %v1594 = vadd.f32 %v1590, %v1582
    %v1595 = vadd.f32 %v1591, %v1583
    %v1600 = vrot.slane %v1592, 1
    %v1601 = vrot.slane %v1594, 1
    %v1602 = vsel %vm75, %v1600, %v1601
    %v1603 = vrot.slane %v1593, 1
    %v1604 = vrot.slane %v1595, 1
    %v1605 = vsel %vm75, %v1603, %v1604
    %v1608 = vrot.slane %v1602, 4
    %v1609 = vadd.f32 %v1602, %v1608
    %v1610 = vrot.slane %v1609, 2
    %v1611 = vadd.f32 %v1609, %v1610
    %v1612 = vrot.slane %v1611, 1
    %v1613 = vadd.f32 %v1611, %v1612
    %v1614 = vsel %vm794, %v1605, 0.0
    %v1615 = vrot.slane %v1614, 4
    %v1616 = vadd.f32 %v1614, %v1615
    %v1617 = vrot.slane %v1616, 2
    %v1618 = vadd.f32 %v1616, %v1617
    %v1619 = vrot.slane %v1618, 1
    %v1620 = vadd.f32 %v1618, %v1619
    %v1621 = vmul.f32 %v1613, 0.03125
    %v1622 = vmul.f32 %v1620, 0.03125
    %v1623 = vsub.f32 %v1388, %v1621
    %v1624 = vsub.f32 %v1389, %v1622
    %v1625 = vsub.f32 %v1390, %v1621
    %v1626 = vsub.f32 %v1391, %v1622
    %v1627 = vmul.f32 %v1623, %v1623
    %v1628 = vmul.f32 %v1624, %v1624
    %v1629 = vmul.f32 %v1625, %v1625
    %v1630 = vmul.f32 %v1626, %v1626
    %v1631 = vsub.f32 %v1452, %v1621
    %v1632 = vsub.f32 %v1453, %v1622
    %v1633 = vsub.f32 %v1454, %v1621
    %v1634 = vsub.f32 %v1455, %v1622
    %v1635 = vmul.f32 %v1631, %v1631
    %v1636 = vmul.f32 %v1632, %v1632
    %v1637 = vmul.f32 %v1633, %v1633
    %v1638 = vmul.f32 %v1634, %v1634
    %v1639 = vadd.f32 %v1627, %v1635
    %v1640 = vadd.f32 %v1628, %v1636
    %v1641 = vadd.f32 %v1629, %v1637
    %v1642 = vadd.f32 %v1630, %v1638
    %v1643 = vsub.f32 %v1516, %v1621
    %v1644 = vsub.f32 %v1517, %v1622
    %v1645 = vsub.f32 %v1518, %v1621
    %v1646 = vsub.f32 %v1519, %v1622
    %v1647 = vmul.f32 %v1643, %v1643
    %v1648 = vmul.f32 %v1644, %v1644
    %v1649 = vmul.f32 %v1645, %v1645
    %v1650 = vmul.f32 %v1646, %v1646
    %v1651 = vadd.f32 %v1639, %v1647
    %v1652 = vadd.f32 %v1640, %v1648
    %v1653 = vadd.f32 %v1641, %v1649
    %v1654 = vadd.f32 %v1642, %v1650
    %v1655 = vsub.f32 %v1580, %v1621
    %v1656 = vsub.f32 %v1581, %v1622
    %v1657 = vsub.f32 %v1582, %v1621
    %v1658 = vsub.f32 %v1583, %v1622
    %v1659 = vmul.f32 %v1655, %v1655
    %v1660 = vmul.f32 %v1656, %v1656
    %v1661 = vmul.f32 %v1657, %v1657
    %v1662 = vmul.f32 %v1658, %v1658
    %v1663 = vadd.f32 %v1651, %v1659
    %v1664 = vadd.f32 %v1652, %v1660
    %v1665 = vadd.f32 %v1653, %v1661
    %v1666 = vadd.f32 %v1654, %v1662
    %v1671 = vrot.slane %v1663, 1
    %v1672 = vrot.slane %v1665, 1
    %v1673 = vsel %vm75, %v1671, %v1672
    %v1674 = vrot.slane %v1664, 1
    %v1675 = vrot.slane %v1666, 1
    %v1676 = vsel %vm75, %v1674, %v1675
    %v1679 = vrot.slane %v1673, 4
    %v1680 = vadd.f32 %v1673, %v1679
    %v1681 = vrot.slane %v1680, 2
    %v1682 = vadd.f32 %v1680, %v1681
    %v1683 = vrot.slane %v1682, 1
    %v1684 = vadd.f32 %v1682, %v1683
    %v1685 = vsel %vm794, %v1676, 0.0
    %v1686 = vrot.slane %v1685, 4
    %v1687 = vadd.f32 %v1685, %v1686
    %v1688 = vrot.slane %v1687, 2
    %v1689 = vadd.f32 %v1687, %v1688
    %v1690 = vrot.slane %v1689, 1
    %v1691 = vadd.f32 %v1689, %v1690
    %v1692 = vmul.f32 %v1684, 0.03125
    %v1693 = vmul.f32 %v1691, 0.03125
    %v1694 = vadd.f32 %v1692, 1e-05
    %v1695 = vadd.f32 %v1693, 1e-05
    %v1696 = vrsqrt.pop %v1694
    %v1697 = vrsqrt.pop %v1695
    %v1698 = vmul.f32 %v1623, %v1696
    %v1699 = vmul.f32 %v1624, %v1697
    %v1700 = vmul.f32 %v1625, %v1696
    %v1701 = vmul.f32 %v1626, %v1697
    %v1702 = vrot.slane %v887, 7
    %v1704 = vmul.f32 %v1698, %v1702
    %v1705 = vmul.f32 %v1699, %v1702
    %v1706 = vmul.f32 %v1700, %v1702
    %v1707 = vmul.f32 %v1701, %v1702
    %v1708 = vrot.slane %v899, 7
    %v1710 = vadd.f32 %v1704, %v1708
    %v1711 = vadd.f32 %v1705, %v1708
    %v1712 = vadd.f32 %v1706, %v1708
    %v1713 = vadd.f32 %v1707, %v1708
    %v1714 = vmul.f32 %v1710, %v908
    %v1715 = vmul.f32 %v1711, %v908
    %v1716 = vmul.f32 %v1712, %v908
    %v1717 = vmul.f32 %v1713, %v908
    %v1718 = vmul.f32 %v1631, %v1696
    %v1719 = vmul.f32 %v1632, %v1697
    %v1720 = vmul.f32 %v1633, %v1696
    %v1721 = vmul.f32 %v1634, %v1697
    %v1722 = vrot.slane %v921, 7
    %v1724 = vmul.f32 %v1718, %v1722
    %v1725 = vmul.f32 %v1719, %v1722
    %v1726 = vmul.f32 %v1720, %v1722
    %v1727 = vmul.f32 %v1721, %v1722
    %v1728 = vrot.slane %v933, 7
    %v1730 = vadd.f32 %v1724, %v1728
    %v1731 = vadd.f32 %v1725, %v1728
    %v1732 = vadd.f32 %v1726, %v1728
    %v1733 = vadd.f32 %v1727, %v1728
    %v1734 = vmul.f32 %v1730, %v942
    %v1735 = vmul.f32 %v1731, %v942
    %v1736 = vmul.f32 %v1732, %v942
    %v1737 = vmul.f32 %v1733, %v942
    %v1738 = vadd.f32 %v1714, %v1734
    %v1739 = vadd.f32 %v1715, %v1735
    %v1740 = vadd.f32 %v1716, %v1736
    %v1741 = vadd.f32 %v1717, %v1737
    %v1742 = vmul.f32 %v1643, %v1696
    %v1743 = vmul.f32 %v1644, %v1697
    %v1744 = vmul.f32 %v1645, %v1696
    %v1745 = vmul.f32 %v1646, %v1697
    %v1746 = vrot.slane %v959, 7
    %v1748 = vmul.f32 %v1742, %v1746
    %v1749 = vmul.f32 %v1743, %v1746
    %v1750 = vmul.f32 %v1744, %v1746
    %v1751 = vmul.f32 %v1745, %v1746
    %v1752 = vrot.slane %v971, 7
    %v1754 = vadd.f32 %v1748, %v1752
    %v1755 = vadd.f32 %v1749, %v1752
    %v1756 = vadd.f32 %v1750, %v1752
    %v1757 = vadd.f32 %v1751, %v1752
    %v1758 = vmul.f32 %v1754, %v980
    %v1759 = vmul.f32 %v1755, %v980
    %v1760 = vmul.f32 %v1756, %v980
    %v1761 = vmul.f32 %v1757, %v980
    %v1762 = vadd.f32 %v1738, %v1758
    %v1763 = vadd.f32 %v1739, %v1759
    %v1764 = vadd.f32 %v1740, %v1760
    %v1765 = vadd.f32 %v1741, %v1761
    %v1766 = vmul.f32 %v1655, %v1696
    %v1767 = vmul.f32 %v1656, %v1697
    %v1768 = vmul.f32 %v1657, %v1696
    %v1769 = vmul.f32 %v1658, %v1697
    %v1770 = vrot.slane %v997, 7
    %v1772 = vmul.f32 %v1766, %v1770
    %v1773 = vmul.f32 %v1767, %v1770
    %v1774 = vmul.f32 %v1768, %v1770
    %v1775 = vmul.f32 %v1769, %v1770
    %v1776 = vrot.slane %v1009, 7
    %v1778 = vadd.f32 %v1772, %v1776
    %v1779 = vadd.f32 %v1773, %v1776
    %v1780 = vadd.f32 %v1774, %v1776
    %v1781 = vadd.f32 %v1775, %v1776
    %v1782 = vmul.f32 %v1778, %v1018
    %v1783 = vmul.f32 %v1779, %v1018
    %v1784 = vmul.f32 %v1780, %v1018
    %v1785 = vmul.f32 %v1781, %v1018
    %v1786 = vadd.f32 %v1762, %v1782
    %v1787 = vadd.f32 %v1763, %v1783
    %v1788 = vadd.f32 %v1764, %v1784
    %v1789 = vadd.f32 %v1765, %v1785
    %v1790 = vadd.f32 %v1786, %v1028
    %v1791 = vadd.f32 %v1787, %v1028
    %v1792 = vadd.f32 %v1788, %v1028
    %v1793 = vadd.f32 %v1789, %v1028
    %v1798 = vrot.slane %v1029, 2
    %v1799 = vrot.slane %v1031, 2
    %v1800 = vsel %vm100, %v1798, %v1799
    %v1801 = vrot.slane %v1030, 2
    %v1802 = vrot.slane %v1032, 2
    %v1803 = vsel %vm100, %v1801, %v1802
    %v1810 = vrot.slane %v1790, 1
    %v1811 = vrot.slane %v1792, 1
    %v1812 = vsel %vm75, %v1810, %v1811
    %v1813 = vrot.slane %v1791, 1
    %v1814 = vrot.slane %v1793, 1
    %v1815 = vsel %vm75, %v1813, %v1814
    %v1818 = vadd.s32 %v47, 16
    %v1819 = vadd.s32 %v47, 24
    %v1820 = vadd.s32 %v47, 32
    %v1821 = vadd.s32 %v47, 40
    %v1822 = vadd.s32 %v47, 48
    %v1823 = vadd.s32 %v47, 56
    %v1824 = vadd.s32 %v47, 64
    %v1825 = vadd.s32 %v47, 72
    %v1826 = vadd.s32 %v47, 80
    %v1827 = vadd.s32 %v47, 88
    %v1828 = vadd.s32 %v47, 96
    %v1829 = vadd.s32 %v47, 104
    %v1830 = vadd.s32 %v47, 112
    %v1831 = vadd.s32 %v47, 120
    %v1832 = vadd.s32 %v47, 128
    %v1833 = vadd.s32 %v47, 136
    %v1834 = vadd.s32 %v47, 144
    %v1835 = vadd.s32 %v47, 152
    %v1836 = vlaneseq
    %v1837 = vand.u32 %v1836, 127
    %v1838 = vadd.s32 %v1837, 128
    %v1839 = vand.u32 %v1837, 1
    %v1840 = vand.u32 %v1838, 1
    %v1841 = vsub.s32 %v1837, %v1839
    %v1842 = vsub.s32 %v1838, %v1840
    %vm1843 = vcmp.eq.s32.totalorder %v47, %v1841
    %vm1844 = vcmp.eq.s32.totalorder %v47, %v1842
    %vm1845 = vcmp.eq.s32.totalorder %v48, %v1841
    %vm1846 = vcmp.eq.s32.totalorder %v48, %v1842
    %vm1847 = vcmp.eq.s32.totalorder %v1818, %v1841
    %vm1848 = vcmp.eq.s32.totalorder %v1818, %v1842
    %vm1849 = vcmp.eq.s32.totalorder %v1819, %v1841
    %vm1850 = vcmp.eq.s32.totalorder %v1819, %v1842
    %vm1851 = vcmp.eq.s32.totalorder %v1820, %v1841
    %vm1852 = vcmp.eq.s32.totalorder %v1820, %v1842
    %vm1853 = vcmp.eq.s32.totalorder %v1821, %v1841
    %vm1854 = vcmp.eq.s32.totalorder %v1821, %v1842
    %vm1855 = vcmp.eq.s32.totalorder %v1822, %v1841
    %vm1856 = vcmp.eq.s32.totalorder %v1822, %v1842
    %vm1857 = vcmp.eq.s32.totalorder %v1823, %v1841
    %vm1858 = vcmp.eq.s32.totalorder %v1823, %v1842
    %vm1859 = vcmp.eq.s32.totalorder %v1824, %v1841
    %vm1860 = vcmp.eq.s32.totalorder %v1824, %v1842
    %vm1861 = vcmp.eq.s32.totalorder %v1825, %v1841
    %vm1862 = vcmp.eq.s32.totalorder %v1825, %v1842
    %vm1863 = vcmp.eq.s32.totalorder %v1826, %v1841
    %vm1864 = vcmp.eq.s32.totalorder %v1826, %v1842
    %vm1865 = vcmp.eq.s32.totalorder %v1827, %v1841
    %vm1866 = vcmp.eq.s32.totalorder %v1827, %v1842
    %vm1867 = vcmp.eq.s32.totalorder %v1828, %v1841
    %vm1868 = vcmp.eq.s32.totalorder %v1828, %v1842
    %vm1869 = vcmp.eq.s32.totalorder %v1829, %v1841
    %vm1870 = vcmp.eq.s32.totalorder %v1829, %v1842
    %vm1871 = vcmp.eq.s32.totalorder %v1830, %v1841
    %vm1872 = vcmp.eq.s32.totalorder %v1830, %v1842
    %vm1873 = vcmp.eq.s32.totalorder %v1831, %v1841
    %vm1874 = vcmp.eq.s32.totalorder %v1831, %v1842
    %vm1875 = vcmp.eq.s32.totalorder %v1832, %v1841
    %vm1876 = vcmp.eq.s32.totalorder %v1832, %v1842
    %vm1877 = vcmp.eq.s32.totalorder %v1833, %v1841
    %vm1878 = vcmp.eq.s32.totalorder %v1833, %v1842
    %vm1879 = vcmp.eq.s32.totalorder %v1834, %v1841
    %vm1880 = vcmp.eq.s32.totalorder %v1834, %v1842
    %vm1881 = vcmp.eq.s32.totalorder %v1835, %v1841
    %vm1882 = vcmp.eq.s32.totalorder %v1835, %v1842
    %s1883 = scalar_lea.vmem %s1, 17
    %v1884 = vld [vmem:[%s1883] ss:$8 sm:$0x3]
    %v1886 = vlaneseq
    %v1887 = vshrl.u32 %v1886, 7
    %v1888 = vsub.s32 0, %v1887
    %v1889 = vrot.slane %v1884, %v1888
    %v1890 = vlaneseq
    %v1891 = vshrl.u32 %v1890, 7
    %v1892 = vsub.s32 1, %v1891
    %v1893 = vrot.slane %v1884, %v1892
    %v1896 = vsel %vm1843, %v1889, 0.0
    %v1897 = vsel %vm1844, %v1893, 0.0
    %v1898 = vsel %vm1845, %v1889, 0.0
    %v1899 = vsel %vm1846, %v1893, 0.0
    %v1900 = vsel %vm1847, %v1889, 0.0
    %v1901 = vsel %vm1848, %v1893, 0.0
    %v1902 = vsel %vm1849, %v1889, 0.0
    %v1903 = vsel %vm1850, %v1893, 0.0
    %v1904 = vsel %vm1851, %v1889, 0.0
    %v1905 = vsel %vm1852, %v1893, 0.0
    %v1906 = vsel %vm1853, %v1889, 0.0
    %v1907 = vsel %vm1854, %v1893, 0.0
    %v1908 = vsel %vm1855, %v1889, 0.0
    %v1909 = vsel %vm1856, %v1893, 0.0
    %v1910 = vsel %vm1857, %v1889, 0.0
    %v1911 = vsel %vm1858, %v1893, 0.0
    %v1912 = vsel %vm1859, %v1889, 0.0
    %v1913 = vsel %vm1860, %v1893, 0.0
    %v1914 = vsel %vm1861, %v1889, 0.0
    %v1915 = vsel %vm1862, %v1893, 0.0
    %v1916 = vsel %vm1863, %v1889, 0.0
    %v1917 = vsel %vm1864, %v1893, 0.0
    %v1918 = vsel %vm1865, %v1889, 0.0
    %v1919 = vsel %vm1866, %v1893, 0.0
    %v1920 = vsel %vm1867, %v1889, 0.0
    %v1921 = vsel %vm1868, %v1893, 0.0
    %v1922 = vsel %vm1869, %v1889, 0.0
    %v1923 = vsel %vm1870, %v1893, 0.0
    %v1924 = vsel %vm1871, %v1889, 0.0
    %v1925 = vsel %vm1872, %v1893, 0.0
    %v1926 = vsel %vm1873, %v1889, 0.0
    %v1927 = vsel %vm1874, %v1893, 0.0
    %v1928 = vsel %vm1875, %v1889, 0.0
    %v1929 = vsel %vm1876, %v1893, 0.0
    %v1930 = vsel %vm1877, %v1889, 0.0
    %v1931 = vsel %vm1878, %v1893, 0.0
    %v1932 = vsel %vm1879, %v1889, 0.0
    %v1933 = vsel %vm1880, %v1893, 0.0
    %v1934 = vsel %vm1881, %v1889, 0.0
    %v1935 = vsel %vm1882, %v1893, 0.0
    %v1936 = vadd.s32 %v1841, 1
    %v1937 = vadd.s32 %v1842, 1
    %vm1938 = vcmp.eq.s32.totalorder %v47, %v1936
    %vm1939 = vcmp.eq.s32.totalorder %v47, %v1937
    %vm1940 = vcmp.eq.s32.totalorder %v48, %v1936
    %vm1941 = vcmp.eq.s32.totalorder %v48, %v1937
    %vm1942 = vcmp.eq.s32.totalorder %v1818, %v1936
    %vm1943 = vcmp.eq.s32.totalorder %v1818, %v1937
    %vm1944 = vcmp.eq.s32.totalorder %v1819, %v1936
    %vm1945 = vcmp.eq.s32.totalorder %v1819, %v1937
    %vm1946 = vcmp.eq.s32.totalorder %v1820, %v1936
    %vm1947 = vcmp.eq.s32.totalorder %v1820, %v1937
    %vm1948 = vcmp.eq.s32.totalorder %v1821, %v1936
    %vm1949 = vcmp.eq.s32.totalorder %v1821, %v1937
    %vm1950 = vcmp.eq.s32.totalorder %v1822, %v1936
    %vm1951 = vcmp.eq.s32.totalorder %v1822, %v1937
    %vm1952 = vcmp.eq.s32.totalorder %v1823, %v1936
    %vm1953 = vcmp.eq.s32.totalorder %v1823, %v1937
    %vm1954 = vcmp.eq.s32.totalorder %v1824, %v1936
    %vm1955 = vcmp.eq.s32.totalorder %v1824, %v1937
    %vm1956 = vcmp.eq.s32.totalorder %v1825, %v1936
    %vm1957 = vcmp.eq.s32.totalorder %v1825, %v1937
    %vm1958 = vcmp.eq.s32.totalorder %v1826, %v1936
    %vm1959 = vcmp.eq.s32.totalorder %v1826, %v1937
    %vm1960 = vcmp.eq.s32.totalorder %v1827, %v1936
    %vm1961 = vcmp.eq.s32.totalorder %v1827, %v1937
    %vm1962 = vcmp.eq.s32.totalorder %v1828, %v1936
    %vm1963 = vcmp.eq.s32.totalorder %v1828, %v1937
    %vm1964 = vcmp.eq.s32.totalorder %v1829, %v1936
    %vm1965 = vcmp.eq.s32.totalorder %v1829, %v1937
    %vm1966 = vcmp.eq.s32.totalorder %v1830, %v1936
    %vm1967 = vcmp.eq.s32.totalorder %v1830, %v1937
    %vm1968 = vcmp.eq.s32.totalorder %v1831, %v1936
    %vm1969 = vcmp.eq.s32.totalorder %v1831, %v1937
    %vm1970 = vcmp.eq.s32.totalorder %v1832, %v1936
    %vm1971 = vcmp.eq.s32.totalorder %v1832, %v1937
    %vm1972 = vcmp.eq.s32.totalorder %v1833, %v1936
    %vm1973 = vcmp.eq.s32.totalorder %v1833, %v1937
    %vm1974 = vcmp.eq.s32.totalorder %v1834, %v1936
    %vm1975 = vcmp.eq.s32.totalorder %v1834, %v1937
    %vm1976 = vcmp.eq.s32.totalorder %v1835, %v1936
    %vm1977 = vcmp.eq.s32.totalorder %v1835, %v1937
    %s1978 = scalar_lea.vmem %s1, 18
    %v1979 = vld [vmem:[%s1978] ss:$8 sm:$0x3]
    %v1981 = vlaneseq
    %v1982 = vshrl.u32 %v1981, 7
    %v1983 = vsub.s32 0, %v1982
    %v1984 = vrot.slane %v1979, %v1983
    %v1985 = vlaneseq
    %v1986 = vshrl.u32 %v1985, 7
    %v1987 = vsub.s32 1, %v1986
    %v1988 = vrot.slane %v1979, %v1987
    %v1991 = vsel %vm1938, %v1984, 0.0
    %v1992 = vsel %vm1939, %v1988, 0.0
    %v1993 = vsel %vm1940, %v1984, 0.0
    %v1994 = vsel %vm1941, %v1988, 0.0
    %v1995 = vsel %vm1942, %v1984, 0.0
    %v1996 = vsel %vm1943, %v1988, 0.0
    %v1997 = vsel %vm1944, %v1984, 0.0
    %v1998 = vsel %vm1945, %v1988, 0.0
    %v1999 = vsel %vm1946, %v1984, 0.0
    %v2000 = vsel %vm1947, %v1988, 0.0
    %v2001 = vsel %vm1948, %v1984, 0.0
    %v2002 = vsel %vm1949, %v1988, 0.0
    %v2003 = vsel %vm1950, %v1984, 0.0
    %v2004 = vsel %vm1951, %v1988, 0.0
    %v2005 = vsel %vm1952, %v1984, 0.0
    %v2006 = vsel %vm1953, %v1988, 0.0
    %v2007 = vsel %vm1954, %v1984, 0.0
    %v2008 = vsel %vm1955, %v1988, 0.0
    %v2009 = vsel %vm1956, %v1984, 0.0
    %v2010 = vsel %vm1957, %v1988, 0.0
    %v2011 = vsel %vm1958, %v1984, 0.0
    %v2012 = vsel %vm1959, %v1988, 0.0
    %v2013 = vsel %vm1960, %v1984, 0.0
    %v2014 = vsel %vm1961, %v1988, 0.0
    %v2015 = vsel %vm1962, %v1984, 0.0
    %v2016 = vsel %vm1963, %v1988, 0.0
    %v2017 = vsel %vm1964, %v1984, 0.0
    %v2018 = vsel %vm1965, %v1988, 0.0
    %v2019 = vsel %vm1966, %v1984, 0.0
    %v2020 = vsel %vm1967, %v1988, 0.0
    %v2021 = vsel %vm1968, %v1984, 0.0
    %v2022 = vsel %vm1969, %v1988, 0.0
    %v2023 = vsel %vm1970, %v1984, 0.0
    %v2024 = vsel %vm1971, %v1988, 0.0
    %v2025 = vsel %vm1972, %v1984, 0.0
    %v2026 = vsel %vm1973, %v1988, 0.0
    %v2027 = vsel %vm1974, %v1984, 0.0
    %v2028 = vsel %vm1975, %v1988, 0.0
    %v2029 = vsel %vm1976, %v1984, 0.0
    %v2030 = vsel %vm1977, %v1988, 0.0
    %v2031 = vadd.f32 %v1896, %v1991
    %v2032 = vadd.f32 %v1897, %v1992
    %v2033 = vadd.f32 %v1898, %v1993
    %v2034 = vadd.f32 %v1899, %v1994
    %v2035 = vadd.f32 %v1900, %v1995
    %v2036 = vadd.f32 %v1901, %v1996
    %v2037 = vadd.f32 %v1902, %v1997
    %v2038 = vadd.f32 %v1903, %v1998
    %v2039 = vadd.f32 %v1904, %v1999
    %v2040 = vadd.f32 %v1905, %v2000
    %v2041 = vadd.f32 %v1906, %v2001
    %v2042 = vadd.f32 %v1907, %v2002
    %v2043 = vadd.f32 %v1908, %v2003
    %v2044 = vadd.f32 %v1909, %v2004
    %v2045 = vadd.f32 %v1910, %v2005
    %v2046 = vadd.f32 %v1911, %v2006
    %v2047 = vadd.f32 %v1912, %v2007
    %v2048 = vadd.f32 %v1913, %v2008
    %v2049 = vadd.f32 %v1914, %v2009
    %v2050 = vadd.f32 %v1915, %v2010
    %v2051 = vadd.f32 %v1916, %v2011
    %v2052 = vadd.f32 %v1917, %v2012
    %v2053 = vadd.f32 %v1918, %v2013
    %v2054 = vadd.f32 %v1919, %v2014
    %v2055 = vadd.f32 %v1920, %v2015
    %v2056 = vadd.f32 %v1921, %v2016
    %v2057 = vadd.f32 %v1922, %v2017
    %v2058 = vadd.f32 %v1923, %v2018
    %v2059 = vadd.f32 %v1924, %v2019
    %v2060 = vadd.f32 %v1925, %v2020
    %v2061 = vadd.f32 %v1926, %v2021
    %v2062 = vadd.f32 %v1927, %v2022
    %v2063 = vadd.f32 %v1928, %v2023
    %v2064 = vadd.f32 %v1929, %v2024
    %v2065 = vadd.f32 %v1930, %v2025
    %v2066 = vadd.f32 %v1931, %v2026
    %v2067 = vadd.f32 %v1932, %v2027
    %v2068 = vadd.f32 %v1933, %v2028
    %v2069 = vadd.f32 %v1934, %v2029
    %v2070 = vadd.f32 %v1935, %v2030
    %v2071 = vld [vmem:[%s1] ss:$8 sm:$0x3]
    %v2073 = vlaneseq
    %v2074 = vshrl.u32 %v2073, 7
    %v2075 = vsub.s32 0, %v2074
    %v2076 = vrot.slane %v2071, %v2075
    %v2077 = vlaneseq
    %v2078 = vshrl.u32 %v2077, 7
    %v2079 = vsub.s32 1, %v2078
    %v2080 = vrot.slane %v2071, %v2079
    %v2083 = vsel %vm794, %v1803, 0
    %v2085 = vsel %vm794, %v1815, 0
    %v2088 = vsel %vm794, %v1327, 0
    %v2091 = vsel %vm100, %v2069, 0
    %v2094 = vsel %vm100, %v2070, 0
    %2096 = vmatprep.subr.mxu0 %v2062
    %2097 = vmatpush1.msra.mxu0 %v2061
    %2098 = vmatprep.subr.mxu0 %v2060
    %2099 = vmatpush1.msra.mxu0 %v2059
    %2100 = vmatprep.subr.mxu0 %v2058
    %2101 = vmatpush1.msra.mxu0 %v2057
    %2102 = vmatprep.subr.mxu0 %v2056
    %2103 = vmatpush1.msra.mxu0 %v2055
    %2104 = vmatprep.subr.mxu0 %v2054
    %2105 = vmatpush1.msra.mxu0 %v2053
    %2106 = vmatprep.subr.mxu0 %v2052
    %2107 = vmatpush1.msra.mxu0 %v2051
    %2108 = vmatprep.subr.mxu0 %v2050
    %2109 = vmatpush1.msra.mxu0 %v2049
    %2110 = vmatprep.subr.mxu0 %v2048
    %2111 = vmatpush1.msra.mxu0 %v2047
    %2112 = vmatprep.subr.mxu0 %v2046
    %2113 = vmatpush1.msra.mxu0 %v2045
    %2114 = vmatprep.subr.mxu0 %v2044
    %2115 = vmatpush1.msra.mxu0 %v2043
    %2116 = vmatprep.subr.mxu0 %v2042
    %2117 = vmatpush1.msra.mxu0 %v2041
    %2118 = vmatprep.subr.mxu0 %v2040
    %2119 = vmatpush1.msra.mxu0 %v2039
    %2120 = vmatprep.subr.mxu0 %v2038
    %2121 = vmatpush1.msra.mxu0 %v2037
    %2122 = vmatprep.subr.mxu0 %v2036
    %2123 = vmatpush1.msra.mxu0 %v2035
    %2124 = vmatprep.subr.mxu0 %v2034
    %2125 = vmatpush1.msra.mxu0 %v2033
    %2126 = vmatprep.subr.mxu0 %v2032
    %2127 = vmatpush1.msra.mxu0 %v2031
    %2128 = vmatprep.subr.mxu0 0.0
    %2129 = vmatpush2.msra.mxu0 0.0
    %2130 = vmatprep.subr.mxu0 0.0
    %2131 = vmatpush2.msra.mxu0 0.0
    %2132 = vmatprep.subr.mxu0 0.0
    %2133 = vmatpush2.msra.mxu0 0.0
    %2134 = vmatprep.subr.mxu0 0.0
    %2135 = vmatpush2.msra.mxu0 0.0
    %2136 = vmatprep.subr.mxu0 0.0
    %2137 = vmatpush2.msra.mxu0 0.0
    %2138 = vmatprep.subr.mxu0 0.0
    %2139 = vmatpush2.msra.mxu0 0.0
    %2140 = vmatprep.subr.mxu0 0.0
    %2141 = vmatpush2.msra.mxu0 0.0
    %2142 = vmatprep.subr.mxu0 0.0
    %2143 = vmatpush2.msra.mxu0 0.0
    %2144 = vmatprep.subr.mxu0 0.0
    %2145 = vmatpush2.msra.mxu0 0.0
    %2146 = vmatprep.subr.mxu0 0.0
    %2147 = vmatpush2.msra.mxu0 0.0
    %2148 = vmatprep.subr.mxu0 0.0
    %2149 = vmatpush2.msra.mxu0 0.0
    %2150 = vmatprep.subr.mxu0 0.0
    %2151 = vmatpush2.msra.mxu0 0.0
    %2152 = vmatprep.subr.mxu0 %v2094
    %2153 = vmatpush2.msra.mxu0 %v2091
    %2154 = vmatprep.subr.mxu0 %v2068
    %2155 = vmatpush2.msra.mxu0 %v2067
    %2156 = vmatprep.subr.mxu0 %v2066
    %2157 = vmatpush2.msra.mxu0 %v2065
    %2158 = vmatprep.subr.mxu0 %v2064
    %2159 = vmatpush2.msra.mxu0 %v2063
    %2160 = vmatprep.mubr.f32.mxu0 %v2083
    %2161 = vmatmul.mubr.f32.gmra.mxu0 %v1800
    %v2162 = vpop.f32.mrf.mxu0
    %v2163 = vadd.f32 %v2076, %v2162
    %v2164 = vpop.f32.mrf.mxu0
    %v2165 = vadd.f32 %v2080, %v2164
    %2166 = vmatprep.mubr.f32.mxu0 %v2085
    %2167 = vmatmul.mubr.f32.gmra.mxu0 %v1812
    %v2168 = vpop.f32.mrf.mxu0
    %v2169 = vadd.f32 %v2076, %v2168
    %v2170 = vpop.f32.mrf.mxu0
    %v2171 = vadd.f32 %v2080, %v2170
    %2172 = vmatprep.mubr.f32.mxu0 %v2088
    %2173 = vmatmul.mubr.f32.gmra.mxu0 %v1326
    %v2174 = vpop.f32.mrf.mxu0
    %v2175 = vadd.f32 %v2076, %v2174
    %v2176 = vpop.f32.mrf.mxu0
    %v2177 = vadd.f32 %v2080, %v2176
    %2178 = vdwg.mxu0
    %s2179 = scalar_lea.vmem %s1, 1
    %v2180 = vld [vmem:[%s2179] ss:$8 sm:$0x3]
    %v2181 = vadd.s32 %v47, 4294967294
    %v2182 = vadd.s32 %v48, 4294967294
    %v2183 = vadd.s32 %v1818, 4294967294
    %vm2184 = vcmp.eq.s32.totalorder %v1837, %v2181
    %vm2185 = vcmp.eq.s32.totalorder %v1837, %v2182
    %vm2186 = vcmp.eq.s32.totalorder %v1837, %v2183
    %v2187 = vsel %vm2184, 1.0, 0.0
    %v2188 = vsel %vm2185, 1.0, 0.0
    %v2189 = vsel %vm2186, 1.0, 0.0
    %vm2190 = vcmask 195584
    %v2192 = vsel %vm2190, %v2187, 0
    %v2195 = vsel %vm2190, %v2188, 0
    %v2198 = vsel %vm2190, %v2189, 0
    %2200 = vmatprep.subr.mxu0 0.0
    %2201 = vmatpush1.msra.mxu0 0.0
    %2202 = vmatprep.subr.mxu0 0.0
    %2203 = vmatpush1.msra.mxu0 0.0
    %2204 = vmatprep.subr.mxu0 0.0
    %2205 = vmatpush1.msra.mxu0 0.0
    %2206 = vmatprep.subr.mxu0 0.0
    %2207 = vmatpush1.msra.mxu0 0.0
    %2208 = vmatprep.subr.mxu0 0.0
    %2209 = vmatpush1.msra.mxu0 0.0
    %2210 = vmatprep.subr.mxu0 0.0
    %2211 = vmatpush1.msra.mxu0 0.0
    %2212 = vmatprep.subr.mxu0 0.0
    %2213 = vmatpush1.msra.mxu0 0.0
    %2214 = vmatprep.subr.mxu0 0.0
    %2215 = vmatpush1.msra.mxu0 0.0
    %2216 = vmatprep.subr.mxu0 0.0
    %2217 = vmatpush1.msra.mxu0 0.0
    %2218 = vmatprep.subr.mxu0 0.0
    %2219 = vmatpush1.msra.mxu0 0.0
    %2220 = vmatprep.subr.mxu0 0.0
    %2221 = vmatpush1.msra.mxu0 0.0
    %2222 = vmatprep.subr.mxu0 0.0
    %2223 = vmatpush1.msra.mxu0 0.0
    %2224 = vmatprep.subr.mxu0 0.0
    %2225 = vmatpush1.msra.mxu0 0.0
    %2226 = vmatprep.subr.mxu0 %v2177
    %2227 = vmatpush1.msra.mxu0 %v2175
    %2228 = vmatprep.subr.mxu0 %v2171
    %2229 = vmatpush1.msra.mxu0 %v2169
    %2230 = vmatprep.subr.mxu0 %v2165
    %2231 = vmatpush1.msra.mxu0 %v2163
    %2232 = vmatprep.subr.mxu0 0.0
    %2233 = vmatpush2.msra.mxu0 0.0
    %2234 = vmatprep.subr.mxu0 0.0
    %2235 = vmatpush2.msra.mxu0 0.0
    %2236 = vmatprep.subr.mxu0 0.0
    %2237 = vmatpush2.msra.mxu0 0.0
    %2238 = vmatprep.subr.mxu0 0.0
    %2239 = vmatpush2.msra.mxu0 0.0
    %2240 = vmatprep.subr.mxu0 0.0
    %2241 = vmatpush2.msra.mxu0 0.0
    %2242 = vmatprep.subr.mxu0 0.0
    %2243 = vmatpush2.msra.mxu0 0.0
    %2244 = vmatprep.subr.mxu0 0.0
    %2245 = vmatpush2.msra.mxu0 0.0
    %2246 = vmatprep.subr.mxu0 0.0
    %2247 = vmatpush2.msra.mxu0 0.0
    %2248 = vmatprep.subr.mxu0 0.0
    %2249 = vmatpush2.msra.mxu0 0.0
    %2250 = vmatprep.subr.mxu0 0.0
    %2251 = vmatpush2.msra.mxu0 0.0
    %2252 = vmatprep.subr.mxu0 0.0
    %2253 = vmatpush2.msra.mxu0 0.0
    %2254 = vmatprep.subr.mxu0 0.0
    %2255 = vmatpush2.msra.mxu0 0.0
    %2256 = vmatprep.subr.mxu0 0.0
    %2257 = vmatpush2.msra.mxu0 0.0
    %2258 = vmatprep.subr.mxu0 0.0
    %2259 = vmatpush2.msra.mxu0 0.0
    %2260 = vmatprep.subr.mxu0 0.0
    %2261 = vmatpush2.msra.mxu0 0.0
    %2262 = vmatprep.subr.mxu0 0.0
    %2263 = vmatpush2.msra.mxu0 0.0
    %2264 = vmatprep.mubr.f32.mxu0 0.0
    %2265 = vmatmul.mubr.f32.gmra.mxu0 %v2192
    %v2266 = vpop.f32.mrf.mxu0
    %v2267 = vadd.f32 0.0, %v2266
    %v2268 = vpop.f32.mrf.mxu0
    %v2269 = vadd.f32 0.0, %v2268
    %2270 = vmatprep.mubr.f32.mxu0 0.0
    %2271 = vmatmul.mubr.f32.gmra.mxu0 %v2195
    %v2272 = vpop.f32.mrf.mxu0
    %v2273 = vadd.f32 0.0, %v2272
    %v2274 = vpop.f32.mrf.mxu0
    %v2275 = vadd.f32 0.0, %v2274
    %2276 = vmatprep.mubr.f32.mxu0 0.0
    %2277 = vmatmul.mubr.f32.gmra.mxu0 %v2198
    %v2278 = vpop.f32.mrf.mxu0
    %v2279 = vadd.f32 0.0, %v2278
    %v2280 = vpop.f32.mrf.mxu0
    %v2281 = vadd.f32 0.0, %v2280
    %2282 = vdwg.mxu0
    %v2284 = vlaneseq
    %v2285 = vshrl.u32 %v2284, 7
    %v2286 = vsub.s32 0, %v2285
    %v2287 = vrot.slane %v2180, %v2286
    %v2288 = vlaneseq
    %v2289 = vshrl.u32 %v2288, 7
    %v2290 = vsub.s32 1, %v2289
    %v2291 = vrot.slane %v2180, %v2290
    %v2294 = vmul.f32 %v2287, %v2267
    %v2295 = vmul.f32 %v2291, %v2269
    %v2296 = vmul.f32 %v2287, %v2273
    %v2297 = vmul.f32 %v2291, %v2275
    %v2298 = vmul.f32 %v2287, %v2279
    %v2299 = vmul.f32 %v2291, %v2281
    %s2300 = scalar_lea.vmem %s1, 2
    %v2301 = vld [vmem:[%s2300] ss:$8 sm:$0x3]
    %v2303 = vlaneseq
    %v2304 = vshrl.u32 %v2303, 7
    %v2305 = vsub.s32 0, %v2304
    %v2306 = vrot.slane %v2301, %v2305
    %v2307 = vlaneseq
    %v2308 = vshrl.u32 %v2307, 7
    %v2309 = vsub.s32 1, %v2308
    %v2310 = vrot.slane %v2301, %v2309
    %v2313 = vmul.f32 %v2306, %v2163
    %v2314 = vmul.f32 %v2310, %v2165
    %v2315 = vmul.f32 %v2306, %v2169
    %v2316 = vmul.f32 %v2310, %v2171
    %v2317 = vmul.f32 %v2306, %v2175
    %v2318 = vmul.f32 %v2310, %v2177
    %v2319 = vadd.f32 %v2294, %v2313
    %v2320 = vadd.f32 %v2295, %v2314
    %v2321 = vadd.f32 %v2296, %v2315
    %v2322 = vadd.f32 %v2297, %v2316
    %v2323 = vadd.f32 %v2298, %v2317
    %v2324 = vadd.f32 %v2299, %v2318
    %s2325 = scalar_lea.vmem %s1, 3
    %v2326 = vld [vmem:[%s2325] ss:$8 sm:$0x3]
    %v2327 = vadd.s32 %v47, 2
    %v2328 = vadd.s32 %v48, 2
    %v2329 = vadd.s32 %v1818, 2
    %vm2330 = vcmp.eq.s32.totalorder %v1837, %v2327
    %vm2331 = vcmp.eq.s32.totalorder %v1837, %v2328
    %vm2332 = vcmp.eq.s32.totalorder %v1837, %v2329
    %v2333 = vsel %vm2330, 1.0, 0.0
    %v2334 = vsel %vm2331, 1.0, 0.0
    %v2335 = vsel %vm2332, 1.0, 0.0
    %v2337 = vsel %vm2190, %v2333, 0
    %v2340 = vsel %vm2190, %v2334, 0
    %v2343 = vsel %vm2190, %v2335, 0
    %2345 = vmatprep.subr.mxu0 0.0
    %2346 = vmatpush1.msra.mxu0 0.0
    %2347 = vmatprep.subr.mxu0 0.0
    %2348 = vmatpush1.msra.mxu0 0.0
    %2349 = vmatprep.subr.mxu0 0.0
    %2350 = vmatpush1.msra.mxu0 0.0
    %2351 = vmatprep.subr.mxu0 0.0
    %2352 = vmatpush1.msra.mxu0 0.0
    %2353 = vmatprep.subr.mxu0 0.0
    %2354 = vmatpush1.msra.mxu0 0.0
    %2355 = vmatprep.subr.mxu0 0.0
    %2356 = vmatpush1.msra.mxu0 0.0
    %2357 = vmatprep.subr.mxu0 0.0
    %2358 = vmatpush1.msra.mxu0 0.0
    %2359 = vmatprep.subr.mxu0 0.0
    %2360 = vmatpush1.msra.mxu0 0.0
    %2361 = vmatprep.subr.mxu0 0.0
    %2362 = vmatpush1.msra.mxu0 0.0
    %2363 = vmatprep.subr.mxu0 0.0
    %2364 = vmatpush1.msra.mxu0 0.0
    %2365 = vmatprep.subr.mxu0 0.0
    %2366 = vmatpush1.msra.mxu0 0.0
    %2367 = vmatprep.subr.mxu0 0.0
    %2368 = vmatpush1.msra.mxu0 0.0
    %2369 = vmatprep.subr.mxu0 0.0
    %2370 = vmatpush1.msra.mxu0 0.0
    %2371 = vmatprep.subr.mxu0 %v2177
    %2372 = vmatpush1.msra.mxu0 %v2175
    %2373 = vmatprep.subr.mxu0 %v2171
    %2374 = vmatpush1.msra.mxu0 %v2169
    %2375 = vmatprep.subr.mxu0 %v2165
    %2376 = vmatpush1.msra.mxu0 %v2163
    %2377 = vmatprep.subr.mxu0 0.0
    %2378 = vmatpush2.msra.mxu0 0.0
    %2379 = vmatprep.subr.mxu0 0.0
    %2380 = vmatpush2.msra.mxu0 0.0
    %2381 = vmatprep.subr.mxu0 0.0
    %2382 = vmatpush2.msra.mxu0 0.0
    %2383 = vmatprep.subr.mxu0 0.0
    %2384 = vmatpush2.msra.mxu0 0.0
    %2385 = vmatprep.subr.mxu0 0.0
    %2386 = vmatpush2.msra.mxu0 0.0
    %2387 = vmatprep.subr.mxu0 0.0
    %2388 = vmatpush2.msra.mxu0 0.0
    %2389 = vmatprep.subr.mxu0 0.0
    %2390 = vmatpush2.msra.mxu0 0.0
    %2391 = vmatprep.subr.mxu0 0.0
    %2392 = vmatpush2.msra.mxu0 0.0
    %2393 = vmatprep.subr.mxu0 0.0
    %2394 = vmatpush2.msra.mxu0 0.0
    %2395 = vmatprep.subr.mxu0 0.0
    %2396 = vmatpush2.msra.mxu0 0.0
    %2397 = vmatprep.subr.mxu0 0.0
    %2398 = vmatpush2.msra.mxu0 0.0
    %2399 = vmatprep.subr.mxu0 0.0
    %2400 = vmatpush2.msra.mxu0 0.0
    %2401 = vmatprep.subr.mxu0 0.0
    %2402 = vmatpush2.msra.mxu0 0.0
    %2403 = vmatprep.subr.mxu0 0.0
    %2404 = vmatpush2.msra.mxu0 0.0
    %2405 = vmatprep.subr.mxu0 0.0
    %2406 = vmatpush2.msra.mxu0 0.0
    %2407 = vmatprep.subr.mxu0 0.0
    %2408 = vmatpush2.msra.mxu0 0.0
    %2409 = vmatprep.mubr.f32.mxu0 0.0
    %2410 = vmatmul.mubr.f32.gmra.mxu0 %v2337
    %v2411 = vpop.f32.mrf.mxu0
    %v2412 = vadd.f32 0.0, %v2411
    %v2413 = vpop.f32.mrf.mxu0
    %v2414 = vadd.f32 0.0, %v2413
    %2415 = vmatprep.mubr.f32.mxu0 0.0
    %2416 = vmatmul.mubr.f32.gmra.mxu0 %v2340
    %v2417 = vpop.f32.mrf.mxu0
    %v2418 = vadd.f32 0.0, %v2417
    %v2419 = vpop.f32.mrf.mxu0
    %v2420 = vadd.f32 0.0, %v2419
    %2421 = vmatprep.mubr.f32.mxu0 0.0
    %2422 = vmatmul.mubr.f32.gmra.mxu0 %v2343
    %v2423 = vpop.f32.mrf.mxu0
    %v2424 = vadd.f32 0.0, %v2423
    %v2425 = vpop.f32.mrf.mxu0
    %v2426 = vadd.f32 0.0, %v2425
    %2427 = vdwg.mxu0
    %v2429 = vlaneseq
    %v2430 = vshrl.u32 %v2429, 7
    %v2431 = vsub.s32 0, %v2430
    %v2432 = vrot.slane %v2326, %v2431
    %v2433 = vlaneseq
    %v2434 = vshrl.u32 %v2433, 7
    %v2435 = vsub.s32 1, %v2434
    %v2436 = vrot.slane %v2326, %v2435
    %v2439 = vmul.f32 %v2432, %v2412
    %v2440 = vmul.f32 %v2436, %v2414
    %v2441 = vmul.f32 %v2432, %v2418
    %v2442 = vmul.f32 %v2436, %v2420
    %v2443 = vmul.f32 %v2432, %v2424
    %v2444 = vmul.f32 %v2436, %v2426
    %v2445 = vadd.f32 %v2319, %v2439
    %v2446 = vadd.f32 %v2320, %v2440
    %v2447 = vadd.f32 %v2321, %v2441
    %v2448 = vadd.f32 %v2322, %v2442
    %v2449 = vadd.f32 %v2323, %v2443
    %v2450 = vadd.f32 %v2324, %v2444
    %s2451 = scalar_lea.vmem %s1, 4
    %v2452 = vld [vmem:[%s2451] ss:$8 sm:$0x3]
    %v2454 = vlaneseq
    %v2455 = vshrl.u32 %v2454, 7
    %v2456 = vsub.s32 0, %v2455
    %v2457 = vrot.slane %v2452, %v2456
    %v2458 = vlaneseq
    %v2459 = vshrl.u32 %v2458, 7
    %v2460 = vsub.s32 1, %v2459
    %v2461 = vrot.slane %v2452, %v2460
    %v2464 = vadd.f32 %v2445, %v2457
    %v2465 = vadd.f32 %v2446, %v2461
    %v2466 = vadd.f32 %v2447, %v2457
    %v2467 = vadd.f32 %v2448, %v2461
    %v2468 = vadd.f32 %v2449, %v2457
    %v2469 = vadd.f32 %v2450, %v2461
    %s2470 = scalar_lea.vmem %s1, 5
    %v2471 = vld [vmem:[%s2470] ss:$8 sm:$0x3]
    %v2472 = vadd.s32 %v47, 4294967292
    %v2473 = vadd.s32 %v48, 4294967292
    %v2474 = vadd.s32 %v1818, 4294967292
    %vm2475 = vcmp.eq.s32.totalorder %v1837, %v2472
    %vm2476 = vcmp.eq.s32.totalorder %v1837, %v2473
    %vm2477 = vcmp.eq.s32.totalorder %v1837, %v2474
    %v2478 = vsel %vm2475, 1.0, 0.0
    %v2479 = vsel %vm2476, 1.0, 0.0
    %v2480 = vsel %vm2477, 1.0, 0.0
    %v2482 = vsel %vm2190, %v2478, 0
    %v2485 = vsel %vm2190, %v2479, 0
    %v2488 = vsel %vm2190, %v2480, 0
    %2490 = vmatprep.subr.mxu0 0.0
    %2491 = vmatpush1.msra.mxu0 0.0
    %2492 = vmatprep.subr.mxu0 0.0
    %2493 = vmatpush1.msra.mxu0 0.0
    %2494 = vmatprep.subr.mxu0 0.0
    %2495 = vmatpush1.msra.mxu0 0.0
    %2496 = vmatprep.subr.mxu0 0.0
    %2497 = vmatpush1.msra.mxu0 0.0
    %2498 = vmatprep.subr.mxu0 0.0
    %2499 = vmatpush1.msra.mxu0 0.0
    %2500 = vmatprep.subr.mxu0 0.0
    %2501 = vmatpush1.msra.mxu0 0.0
    %2502 = vmatprep.subr.mxu0 0.0
    %2503 = vmatpush1.msra.mxu0 0.0
    %2504 = vmatprep.subr.mxu0 0.0
    %2505 = vmatpush1.msra.mxu0 0.0
    %2506 = vmatprep.subr.mxu0 0.0
    %2507 = vmatpush1.msra.mxu0 0.0
    %2508 = vmatprep.subr.mxu0 0.0
    %2509 = vmatpush1.msra.mxu0 0.0
    %2510 = vmatprep.subr.mxu0 0.0
    %2511 = vmatpush1.msra.mxu0 0.0
    %2512 = vmatprep.subr.mxu0 0.0
    %2513 = vmatpush1.msra.mxu0 0.0
    %2514 = vmatprep.subr.mxu0 0.0
    %2515 = vmatpush1.msra.mxu0 0.0
    %2516 = vmatprep.subr.mxu0 %v2469
    %2517 = vmatpush1.msra.mxu0 %v2468
    %2518 = vmatprep.subr.mxu0 %v2467
    %2519 = vmatpush1.msra.mxu0 %v2466
    %2520 = vmatprep.subr.mxu0 %v2465
    %2521 = vmatpush1.msra.mxu0 %v2464
    %2522 = vmatprep.subr.mxu0 0.0
    %2523 = vmatpush2.msra.mxu0 0.0
    %2524 = vmatprep.subr.mxu0 0.0
    %2525 = vmatpush2.msra.mxu0 0.0
    %2526 = vmatprep.subr.mxu0 0.0
    %2527 = vmatpush2.msra.mxu0 0.0
    %2528 = vmatprep.subr.mxu0 0.0
    %2529 = vmatpush2.msra.mxu0 0.0
    %2530 = vmatprep.subr.mxu0 0.0
    %2531 = vmatpush2.msra.mxu0 0.0
    %2532 = vmatprep.subr.mxu0 0.0
    %2533 = vmatpush2.msra.mxu0 0.0
    %2534 = vmatprep.subr.mxu0 0.0
    %2535 = vmatpush2.msra.mxu0 0.0
    %2536 = vmatprep.subr.mxu0 0.0
    %2537 = vmatpush2.msra.mxu0 0.0
    %2538 = vmatprep.subr.mxu0 0.0
    %2539 = vmatpush2.msra.mxu0 0.0
    %2540 = vmatprep.subr.mxu0 0.0
    %2541 = vmatpush2.msra.mxu0 0.0
    %2542 = vmatprep.subr.mxu0 0.0
    %2543 = vmatpush2.msra.mxu0 0.0
    %2544 = vmatprep.subr.mxu0 0.0
    %2545 = vmatpush2.msra.mxu0 0.0
    %2546 = vmatprep.subr.mxu0 0.0
    %2547 = vmatpush2.msra.mxu0 0.0
    %2548 = vmatprep.subr.mxu0 0.0
    %2549 = vmatpush2.msra.mxu0 0.0
    %2550 = vmatprep.subr.mxu0 0.0
    %2551 = vmatpush2.msra.mxu0 0.0
    %2552 = vmatprep.subr.mxu0 0.0
    %2553 = vmatpush2.msra.mxu0 0.0
    %2554 = vmatprep.mubr.f32.mxu0 0.0
    %2555 = vmatmul.mubr.f32.gmra.mxu0 %v2482
    %v2556 = vpop.f32.mrf.mxu0
    %v2557 = vadd.f32 0.0, %v2556
    %v2558 = vpop.f32.mrf.mxu0
    %v2559 = vadd.f32 0.0, %v2558
    %2560 = vmatprep.mubr.f32.mxu0 0.0
    %2561 = vmatmul.mubr.f32.gmra.mxu0 %v2485
    %v2562 = vpop.f32.mrf.mxu0
    %v2563 = vadd.f32 0.0, %v2562
    %v2564 = vpop.f32.mrf.mxu0
    %v2565 = vadd.f32 0.0, %v2564
    %2566 = vmatprep.mubr.f32.mxu0 0.0
    %2567 = vmatmul.mubr.f32.gmra.mxu0 %v2488
    %v2568 = vpop.f32.mrf.mxu0
    %v2569 = vadd.f32 0.0, %v2568
    %v2570 = vpop.f32.mrf.mxu0
    %v2571 = vadd.f32 0.0, %v2570
    %2572 = vdwg.mxu0
    %v2574 = vlaneseq
    %v2575 = vshrl.u32 %v2574, 7
    %v2576 = vsub.s32 0, %v2575
    %v2577 = vrot.slane %v2471, %v2576
    %v2578 = vlaneseq
    %v2579 = vshrl.u32 %v2578, 7
    %v2580 = vsub.s32 1, %v2579
    %v2581 = vrot.slane %v2471, %v2580
    %v2584 = vmul.f32 %v2577, %v2557
    %v2585 = vmul.f32 %v2581, %v2559
    %v2586 = vmul.f32 %v2577, %v2563
    %v2587 = vmul.f32 %v2581, %v2565
    %v2588 = vmul.f32 %v2577, %v2569
    %v2589 = vmul.f32 %v2581, %v2571
    %s2590 = scalar_lea.vmem %s1, 6
    %v2591 = vld [vmem:[%s2590] ss:$8 sm:$0x3]
    %v2593 = vlaneseq
    %v2594 = vshrl.u32 %v2593, 7
    %v2595 = vsub.s32 0, %v2594
    %v2596 = vrot.slane %v2591, %v2595
    %v2597 = vlaneseq
    %v2598 = vshrl.u32 %v2597, 7
    %v2599 = vsub.s32 1, %v2598
    %v2600 = vrot.slane %v2591, %v2599
    %v2603 = vmul.f32 %v2596, %v2464
    %v2604 = vmul.f32 %v2600, %v2465
    %v2605 = vmul.f32 %v2596, %v2466
    %v2606 = vmul.f32 %v2600, %v2467
    %v2607 = vmul.f32 %v2596, %v2468
    %v2608 = vmul.f32 %v2600, %v2469
    %v2609 = vadd.f32 %v2584, %v2603
    %v2610 = vadd.f32 %v2585, %v2604
    %v2611 = vadd.f32 %v2586, %v2605
    %v2612 = vadd.f32 %v2587, %v2606
    %v2613 = vadd.f32 %v2588, %v2607
    %v2614 = vadd.f32 %v2589, %v2608
    %s2615 = scalar_lea.vmem %s1, 7
    %v2616 = vld [vmem:[%s2615] ss:$8 sm:$0x3]
    %v2617 = vadd.s32 %v47, 4
    %v2618 = vadd.s32 %v48, 4
    %v2619 = vadd.s32 %v1818, 4
    %vm2620 = vcmp.eq.s32.totalorder %v1837, %v2617
    %vm2621 = vcmp.eq.s32.totalorder %v1837, %v2618
    %vm2622 = vcmp.eq.s32.totalorder %v1837, %v2619
    %v2623 = vsel %vm2620, 1.0, 0.0
    %v2624 = vsel %vm2621, 1.0, 0.0
    %v2625 = vsel %vm2622, 1.0, 0.0
    %v2627 = vsel %vm2190, %v2623, 0
    %v2630 = vsel %vm2190, %v2624, 0
    %v2633 = vsel %vm2190, %v2625, 0
    %2635 = vmatprep.subr.mxu0 0.0
    %2636 = vmatpush1.msra.mxu0 0.0
    %2637 = vmatprep.subr.mxu0 0.0
    %2638 = vmatpush1.msra.mxu0 0.0
    %2639 = vmatprep.subr.mxu0 0.0
    %2640 = vmatpush1.msra.mxu0 0.0
    %2641 = vmatprep.subr.mxu0 0.0
    %2642 = vmatpush1.msra.mxu0 0.0
    %2643 = vmatprep.subr.mxu0 0.0
    %2644 = vmatpush1.msra.mxu0 0.0
    %2645 = vmatprep.subr.mxu0 0.0
    %2646 = vmatpush1.msra.mxu0 0.0
    %2647 = vmatprep.subr.mxu0 0.0
    %2648 = vmatpush1.msra.mxu0 0.0
    %2649 = vmatprep.subr.mxu0 0.0
    %2650 = vmatpush1.msra.mxu0 0.0
    %2651 = vmatprep.subr.mxu0 0.0
    %2652 = vmatpush1.msra.mxu0 0.0
    %2653 = vmatprep.subr.mxu0 0.0
    %2654 = vmatpush1.msra.mxu0 0.0
    %2655 = vmatprep.subr.mxu0 0.0
    %2656 = vmatpush1.msra.mxu0 0.0
    %2657 = vmatprep.subr.mxu0 0.0
    %2658 = vmatpush1.msra.mxu0 0.0
    %2659 = vmatprep.subr.mxu0 0.0
    %2660 = vmatpush1.msra.mxu0 0.0
    %2661 = vmatprep.subr.mxu0 %v2469
    %2662 = vmatpush1.msra.mxu0 %v2468
    %2663 = vmatprep.subr.mxu0 %v2467
    %2664 = vmatpush1.msra.mxu0 %v2466
    %2665 = vmatprep.subr.mxu0 %v2465
    %2666 = vmatpush1.msra.mxu0 %v2464
    %2667 = vmatprep.subr.mxu0 0.0
    %2668 = vmatpush2.msra.mxu0 0.0
    %2669 = vmatprep.subr.mxu0 0.0
    %2670 = vmatpush2.msra.mxu0 0.0
    %2671 = vmatprep.subr.mxu0 0.0
    %2672 = vmatpush2.msra.mxu0 0.0
    %2673 = vmatprep.subr.mxu0 0.0
    %2674 = vmatpush2.msra.mxu0 0.0
    %2675 = vmatprep.subr.mxu0 0.0
    %2676 = vmatpush2.msra.mxu0 0.0
    %2677 = vmatprep.subr.mxu0 0.0
    %2678 = vmatpush2.msra.mxu0 0.0
    %2679 = vmatprep.subr.mxu0 0.0
    %2680 = vmatpush2.msra.mxu0 0.0
    %2681 = vmatprep.subr.mxu0 0.0
    %2682 = vmatpush2.msra.mxu0 0.0
    %2683 = vmatprep.subr.mxu0 0.0
    %2684 = vmatpush2.msra.mxu0 0.0
    %2685 = vmatprep.subr.mxu0 0.0
    %2686 = vmatpush2.msra.mxu0 0.0
    %2687 = vmatprep.subr.mxu0 0.0
    %2688 = vmatpush2.msra.mxu0 0.0
    %2689 = vmatprep.subr.mxu0 0.0
    %2690 = vmatpush2.msra.mxu0 0.0
    %2691 = vmatprep.subr.mxu0 0.0
    %2692 = vmatpush2.msra.mxu0 0.0
    %2693 = vmatprep.subr.mxu0 0.0
    %2694 = vmatpush2.msra.mxu0 0.0
    %2695 = vmatprep.subr.mxu0 0.0
    %2696 = vmatpush2.msra.mxu0 0.0
    %2697 = vmatprep.subr.mxu0 0.0
    %2698 = vmatpush2.msra.mxu0 0.0
    %2699 = vmatprep.mubr.f32.mxu0 0.0
    %2700 = vmatmul.mubr.f32.gmra.mxu0 %v2627
    %v2701 = vpop.f32.mrf.mxu0
    %v2702 = vadd.f32 0.0, %v2701
    %v2703 = vpop.f32.mrf.mxu0
    %v2704 = vadd.f32 0.0, %v2703
    %2705 = vmatprep.mubr.f32.mxu0 0.0
    %2706 = vmatmul.mubr.f32.gmra.mxu0 %v2630
    %v2707 = vpop.f32.mrf.mxu0
    %v2708 = vadd.f32 0.0, %v2707
    %v2709 = vpop.f32.mrf.mxu0
    %v2710 = vadd.f32 0.0, %v2709
    %2711 = vmatprep.mubr.f32.mxu0 0.0
    %2712 = vmatmul.mubr.f32.gmra.mxu0 %v2633
    %v2713 = vpop.f32.mrf.mxu0
    %v2714 = vadd.f32 0.0, %v2713
    %v2715 = vpop.f32.mrf.mxu0
    %v2716 = vadd.f32 0.0, %v2715
    %2717 = vdwg.mxu0
    %v2719 = vlaneseq
    %v2720 = vshrl.u32 %v2719, 7
    %v2721 = vsub.s32 0, %v2720
    %v2722 = vrot.slane %v2616, %v2721
    %v2723 = vlaneseq
    %v2724 = vshrl.u32 %v2723, 7
    %v2725 = vsub.s32 1, %v2724
    %v2726 = vrot.slane %v2616, %v2725
    %v2729 = vmul.f32 %v2722, %v2702
    %v2730 = vmul.f32 %v2726, %v2704
    %v2731 = vmul.f32 %v2722, %v2708
    %v2732 = vmul.f32 %v2726, %v2710
    %v2733 = vmul.f32 %v2722, %v2714
    %v2734 = vmul.f32 %v2726, %v2716
    %v2735 = vadd.f32 %v2609, %v2729
    %v2736 = vadd.f32 %v2610, %v2730
    %v2737 = vadd.f32 %v2611, %v2731
    %v2738 = vadd.f32 %v2612, %v2732
    %v2739 = vadd.f32 %v2613, %v2733
    %v2740 = vadd.f32 %v2614, %v2734
    %s2741 = scalar_lea.vmem %s1, 16
    %v2742 = vld [vmem:[%s2741] ss:$8 sm:$0x3]
    %v2744 = vlaneseq
    %v2745 = vshrl.u32 %v2744, 7
    %v2746 = vsub.s32 0, %v2745
    %v2747 = vrot.slane %v2742, %v2746
    %v2748 = vlaneseq
    %v2749 = vshrl.u32 %v2748, 7
    %v2750 = vsub.s32 1, %v2749
    %v2751 = vrot.slane %v2742, %v2750
    %v2754 = vadd.f32 %v2735, %v2747
    %v2755 = vadd.f32 %v2736, %v2751
    %v2756 = vadd.f32 %v2737, %v2747
    %v2757 = vadd.f32 %v2738, %v2751
    %v2758 = vadd.f32 %v2739, %v2747
    %v2759 = vadd.f32 %v2740, %v2751
    %v2760 = vld [vmem:[%s2 + $0x40] sm:$0xff]
    %v2761 = vld [vmem:[%s2 + $0x48] sm:$0xff]
    %v2762 = vld [vmem:[%s2 + $0x50] sm:$0xff]
    %2764 = vset.pattern.permute.xlu0 0
    %2765 = vperm.xlu0 %2764, %v2760
    %v2766 = vpop.permute.xlu0 %2765
    %2769 = vset.pattern.permute.xlu0 0
    %2770 = vperm.xlu0 %2769, %v2761
    %v2771 = vpop.permute.xlu0 %2770
    %2774 = vset.pattern.permute.xlu0 0
    %2775 = vperm.xlu0 %2774, %v2762
    %v2776 = vpop.permute.xlu0 %2775
    %v2778 = vmul.f32 %v1800, %v2766
    %v2779 = vmul.f32 %v1803, %v2766
    %v2780 = vmul.f32 %v1812, %v2771
    %v2781 = vmul.f32 %v1815, %v2771
    %v2782 = vmul.f32 %v1326, %v2776
    %v2783 = vmul.f32 %v1327, %v2776
    %v2784 = vadd.f32 %v2778, %v2780
    %v2785 = vadd.f32 %v2784, %v2782
    %v2786 = vrot.slane %v2785, 4
    %v2787 = vadd.f32 %v2785, %v2786
    %v2788 = vrot.slane %v2787, 2
    %v2789 = vadd.f32 %v2787, %v2788
    %v2790 = vrot.slane %v2789, 1
    %v2791 = vadd.f32 %v2789, %v2790
    %v2792 = vsel %vm794, %v2779, 0.0
    %v2793 = vsel %vm794, %v2781, 0.0
    %v2794 = vadd.f32 %v2792, %v2793
    %v2795 = vsel %vm794, %v2783, 0.0
    %v2796 = vadd.f32 %v2794, %v2795
    %v2797 = vrot.slane %v2796, 4
    %v2798 = vadd.f32 %v2796, %v2797
    %v2799 = vrot.slane %v2798, 2
    %v2800 = vadd.f32 %v2798, %v2799
    %v2801 = vrot.slane %v2800, 1
    %v2802 = vadd.f32 %v2800, %v2801
    %s2803 = sld [smem:[#allocation5 + $0x1]]
    %v2804 = vstv %s2803
    %v2805 = vadd.f32 %v2791, %v2804
    %v2806 = vadd.f32 %v2802, %v2804
    %v2807 = vld [vmem:[%s2 + $0x58] sm:$0xff]
    %v2808 = vld [vmem:[%s2 + $0x60] sm:$0xff]
    %v2809 = vld [vmem:[%s2 + $0x68] sm:$0xff]
    %2811 = vset.pattern.permute.xlu0 0
    %2812 = vperm.xlu0 %2811, %v2807
    %v2813 = vpop.permute.xlu0 %2812
    %2816 = vset.pattern.permute.xlu0 0
    %2817 = vperm.xlu0 %2816, %v2808
    %v2818 = vpop.permute.xlu0 %2817
    %2821 = vset.pattern.permute.xlu0 0
    %2822 = vperm.xlu0 %2821, %v2809
    %v2823 = vpop.permute.xlu0 %2822
    %v2825 = vmul.f32 %v2464, %v2813
    %v2826 = vmul.f32 %v2465, %v2813
    %v2827 = vmul.f32 %v2466, %v2818
    %v2828 = vmul.f32 %v2467, %v2818
    %v2829 = vmul.f32 %v2468, %v2823
    %v2830 = vmul.f32 %v2469, %v2823
    %v2831 = vadd.f32 %v2825, %v2827
    %v2832 = vadd.f32 %v2831, %v2829
    %v2833 = vrot.slane %v2832, 4
    %v2834 = vadd.f32 %v2832, %v2833
    %v2835 = vrot.slane %v2834, 2
    %v2836 = vadd.f32 %v2834, %v2835
    %v2837 = vrot.slane %v2836, 1
    %v2838 = vadd.f32 %v2836, %v2837
    %v2839 = vsel %vm794, %v2826, 0.0
    %v2840 = vsel %vm794, %v2828, 0.0
    %v2841 = vadd.f32 %v2839, %v2840
    %v2842 = vsel %vm794, %v2830, 0.0
    %v2843 = vadd.f32 %v2841, %v2842
    %v2844 = vrot.slane %v2843, 4
    %v2845 = vadd.f32 %v2843, %v2844
    %v2846 = vrot.slane %v2845, 2
    %v2847 = vadd.f32 %v2845, %v2846
    %v2848 = vrot.slane %v2847, 1
    %v2849 = vadd.f32 %v2847, %v2848
    %v2850 = vld [vmem:[%s2 + $0x70] sm:$0xff]
    %v2851 = vld [vmem:[%s2 + $0x78] sm:$0xff]
    %v2852 = vld [vmem:[%s2 + $0x80] sm:$0xff]
    %2854 = vset.pattern.permute.xlu0 0
    %2855 = vperm.xlu0 %2854, %v2850
    %v2856 = vpop.permute.xlu0 %2855
    %2859 = vset.pattern.permute.xlu0 0
    %2860 = vperm.xlu0 %2859, %v2851
    %v2861 = vpop.permute.xlu0 %2860
    %2864 = vset.pattern.permute.xlu0 0
    %2865 = vperm.xlu0 %2864, %v2852
    %v2866 = vpop.permute.xlu0 %2865
    %v2868 = vmul.f32 %v2754, %v2856
    %v2869 = vmul.f32 %v2755, %v2856
    %v2870 = vmul.f32 %v2756, %v2861
    %v2871 = vmul.f32 %v2757, %v2861
    %v2872 = vmul.f32 %v2758, %v2866
    %v2873 = vmul.f32 %v2759, %v2866
    %v2874 = vadd.f32 %v2868, %v2870
    %v2875 = vadd.f32 %v2874, %v2872
    %v2876 = vrot.slane %v2875, 4
    %v2877 = vadd.f32 %v2875, %v2876
    %v2878 = vrot.slane %v2877, 2
    %v2879 = vadd.f32 %v2877, %v2878
    %v2880 = vrot.slane %v2879, 1
    %v2881 = vadd.f32 %v2879, %v2880
    %v2882 = vsel %vm794, %v2869, 0.0
    %v2883 = vsel %vm794, %v2871, 0.0
    %v2884 = vadd.f32 %v2882, %v2883
    %v2885 = vsel %vm794, %v2873, 0.0
    %v2886 = vadd.f32 %v2884, %v2885
    %v2887 = vrot.slane %v2886, 4
    %v2888 = vadd.f32 %v2886, %v2887
    %v2889 = vrot.slane %v2888, 2
    %v2890 = vadd.f32 %v2888, %v2889
    %v2891 = vrot.slane %v2890, 1
    %v2892 = vadd.f32 %v2890, %v2891
    %v2893 = vadd.f32 %v2838, %v2881
    %v2894 = vadd.f32 %v2849, %v2892
    %s2895 = sld [smem:[#allocation5 + $0x2]]
    %v2896 = vstv %s2895
    %v2897 = vadd.f32 %v2893, %v2896
    %v2898 = vadd.f32 %v2894, %v2896
    %v2899 = vadd.f32 %v2897, %v2805
    %v2900 = vadd.f32 %v2898, %v2806
    %s2901 = sld [smem:[#allocation5 + $0x3]]
    %v2902 = vstv %s2901
    %v2903 = vmul.f32 %v2899, %v2902
    %v2904 = vmul.f32 %v2900, %v2902
    %s2905 = sld [smem:[#allocation5 + $0x4]]
    %v2906 = vstv %s2905
    %v2907 = vadd.f32 %v2903, %v2906
    %v2908 = vadd.f32 %v2904, %v2906
    %v2911 = vcombine.low %v2907, %v2908
    %v2913 = vunpack.c.l.s4 1966171168
    %v2914 = vunpack.c.0.s8 %v2913
    %v2915 = vlaneseq
    %v2916 = vshrl.u32 %v2915, 7
    %v2917 = vsub.s32 %v2914, %v2916
    %v2918 = vrot.slane %v2911, %v2917
    %v2920 = vunpack.c.l.s4 1966171168
    %v2921 = vunpack.c.0.s8 %v2920
    %v2922 = vlaneseq
    %v2923 = vshrl.u32 %v2922, 7
    %v2924 = vsub.s32 %v2921, %v2923
    %v2925 = vrot.slane %v2918, %v2924
    %v2927 = vlaneseq
    %vm2928 = vcmp.ge.s32.totalorder %v2927, 0
    %vm2929 = vcmp.lt.s32.totalorder %v2927, 158
    %vm2930 = vmand %vm2928, %vm2929
    %2931 = vst.msk [vmem:[#allocation7] sm:$0x3] %vm2930, %v2925
    // Predicated region
    $region30: #{stock_conv_mixer_forward.1} parent=1 // pred_check
      _
    $region31: #{stock_conv_mixer_forward.1} parent=1 // pred_check_branch
      %2933 = sbr.rel (0) target = $region33
    $region32: #{stock_conv_mixer_forward.1} parent=1 // pred_region
      %s2935 = ssub.s32 32, 32
      %2936 = vsyncadd [#allocation3], %s2935
      %s2938 = sshll.u32 [#allocation7], 4
      %s2939 = int_to_ptr.vmem [resolvable:$true] %s2938
      %2941 = dma.vmem_to_hbm [thread:$0]  %s2939, 32, %s5, [#allocation3]
    $region33: #{stock_conv_mixer_forward.1} parent=1 // pred_fallthru
      _
    // Predicated region
    $region34: #{stock_conv_mixer_forward.1} parent=1 // pred_check
      _
    $region35: #{stock_conv_mixer_forward.1} parent=1 // pred_check_branch
      %2943 = sbr.rel (0) target = $region37
    $region36: #{stock_conv_mixer_forward.1} parent=1 // pred_region
      %2944 = dma.done [#allocation3], 32
    $region37: #{stock_conv_mixer_forward.1} parent=1 // pred_fallthru
      _
    %2945 = vsyncpa [#allocation3], 1
    %2946 = vsyncpa [#allocation4], 1
    %2947 = vsyncpa [#allocation6], 1

</llo_original>
